<compile_context>
chip_gen: v5e
topology: v5e:2x2
jax: 0.10.0
libtpu: 0.0.40
codegen_flags: <defaults>
</compile_context>

<pallas_src>
import functools
import math

import jax
import jax.numpy as jnp
from jax.experimental import pallas as pl
from jax.experimental.pallas import tpu as pltpu

EPS = 1e-5  # nn.LayerNorm default eps


def _layernorm(x, gamma, beta):
    mu = jnp.mean(x, axis=-1, keepdims=True)
    var = jnp.mean((x - mu) ** 2, axis=-1, keepdims=True)
    return (x - mu) * jax.lax.rsqrt(var + EPS) * gamma + beta


def _gelu(x):
    # TODO(synk): PyTorch nn.GELU default is the exact erf GELU; tanh approx here.
    return jax.nn.gelu(x, approximate=True)


def _const_spec(shape):
    """BlockSpec for a grid-invariant (weight) operand: single-buffered."""
    idx = lambda *_: (0,) * len(shape)
    buffered = getattr(pl, "Buffered", None)
    if buffered is not None:
        try:
            return pl.BlockSpec(shape, idx, pipeline_mode=buffered(1))
        except TypeError:
            pass
    return pl.BlockSpec(shape, idx)


# ----------------------------------------------------------------------------
# Kernel A: per (batch, seq-tile):  x = x + Attn(LN1(x));  x = x + DilConv(LN2(x))
# ----------------------------------------------------------------------------
def attn_conv_kernel(x_ref, xl_ref, xr_ref, g1_ref, b1_ref, wqkv_ref, bqkv_ref,
                     wo_ref, bo_ref, g2_ref, b2_ref, wc_ref, bc_ref, o_ref, *,
                     num_heads, window_size, bidirectional, dilation, seq_len,
                     seq_tile):
    i = pl.program_id(1)
    W = window_size
    d = dilation
    TS = seq_tile
    D = x_ref.shape[-1]
    H = num_heads
    Dh = D // H
    Sx = TS + 2 * W                      # tile + one halo window on each side
    A = Sx // W
    bf16 = jnp.bfloat16
    f32 = jnp.float32

    # halo windows are recomputed so the dilated conv sees exact +-d neighbours
    x_ext = jnp.concatenate([xl_ref[0], x_ref[0], xr_ref[0]], axis=0)   # (Sx, D)

    # ---------------- LN1 + windowed multi-head attention ----------------
    xn = _layernorm(x_ext, g1_ref[...], b1_ref[...])
    qkv = (jnp.dot(xn.astype(bf16), wqkv_ref[...], preferred_element_type=f32)
           + bqkv_ref[...])                                             # (Sx, 3D)

    def heads(col):
        t = qkv[:, col * D:(col + 1) * D].reshape(A, W, H, Dh)
        return t.transpose(0, 2, 1, 3).reshape(A * H, W, Dh).astype(bf16)

    # single batched einsum over windows*heads (no per-head loop / lane concat)
    q, k, v = heads(0), heads(1), heads(2)
    s = jnp.einsum('gwd,gkd->gwk', q, k,
                   preferred_element_type=f32) * (1.0 / math.sqrt(Dh))  # (A*H,W,W)
    if not bidirectional:
        qi = jax.lax.broadcasted_iota(jnp.int32, (W, W), 0)
        kj = jax.lax.broadcasted_iota(jnp.int32, (W, W), 1)
        s = jnp.where((kj <= qi)[None, :, :], s, -1e30)
    s = s - jnp.max(s, axis=-1, keepdims=True)
    p = jnp.exp(s)
    p = p * pl.reciprocal(jnp.sum(p, axis=-1, keepdims=True), approx=True)
    ao = jnp.einsum('gwk,gkd->gwd', p.astype(bf16), v,
                    preferred_element_type=f32)                         # (A*H,W,Dh)
    attn = ao.reshape(A, H, W, Dh).transpose(0, 2, 1, 3).reshape(Sx, D)

    x1 = x_ext + (jnp.dot(attn.astype(bf16), wo_ref[...],
                          preferred_element_type=f32) + bo_ref[...])    # dropout1=id

    # ---------------- LN2 + dilated conv (k=3, dilation d, 'same') ----------------
    # TODO(synk): for tiny W/Dh the per-window matmuls underfill the MXU; pack
    # more windows per matmul / pad Dh for production shapes.
    x1c = x1[W - d:W + TS + d, :]                                       # (TS+2d, D)
    xn2 = _layernorm(x1c, g2_ref[...], b2_ref[...])
    z = jnp.dot(xn2.astype(bf16), wc_ref[...], preferred_element_type=f32)  # (TS+2d,3D)

    z_prev = z[0:TS, 0:D]                   # tap applied to x1[t - d]
    z_mid = z[d:TS + d, D:2 * D]            # tap applied to x1[t]
    z_next = z[2 * d:TS + 2 * d, 2 * D:]    # tap applied to x1[t + d]

    row = jax.lax.broadcasted_iota(jnp.int32, (TS, 1), 0) + i * TS      # global index
    z_prev = jnp.where(row >= d, z_prev, 0.0)
    z_next = jnp.where(row <= seq_len - 1 - d, z_next, 0.0)

    o_ref[0] = x1[W:W + TS, :] + z_mid + z_prev + z_next + bc_ref[...]  # dropout2=id


# ----------------------------------------------------------------------------
# Kernel B: per (token-tile, expert):  moe_out, ent = MoE(LN3(x)); x += moe_out;
#                                      x = x + FF(x)
# ----------------------------------------------------------------------------
def moe_ff_kernel(x_ref, g3_ref, b3_ref, wg_ref, bg_ref,
                  w1_ref, b1_ref, w2_ref, b2_ref,
                  wf1_ref, bf1_ref, wf2_ref, bf2_ref,
                  o_ref, ent_ref, xn_s, w_s, acc_s, *, num_experts, top_k):
    e_idx = pl.program_id(1)
    bf16 = jnp.bfloat16
    f32 = jnp.float32

    @pl.when(e_idx == 0)
    def _():
        x = x_ref[...]
        xn = _layernorm(x, g3_ref[...], b3_ref[...])
        xn_s[...] = xn.astype(bf16)

        # gate softmax (f32 for entropy fidelity; tiny matmul)
        logits = jnp.dot(xn, wg_ref[...], preferred_element_type=f32) + bg_ref[...]
        logits = logits - jnp.max(logits, axis=-1, keepdims=True)
        ex = jnp.exp(logits)
        probs = ex * pl.reciprocal(jnp.sum(ex, axis=-1, keepdims=True), approx=True)

        # per-token gate entropy, written lane-dense as a (1, 1, TN) row
        ent = -jnp.sum(probs * jnp.log(probs + 1e-9), axis=-1, keepdims=True)  # (TN,1)
        ent_ref[0] = jnp.transpose(ent)                                        # (1,TN)

        # static top-k with lowest-index tie break, renormalized
        # TODO(synk): dynamic_k (data-dependent k) routing is not implemented.
        lane = jax.lax.broadcasted_iota(jnp.int32, probs.shape, 1)
        remaining = probs
        keep = jnp.zeros(probs.shape, dtype=jnp.bool_)
        for _ in range(top_k):
            m = jnp.max(remaining, axis=-1, keepdims=True)
            sel = jnp.min(jnp.where(remaining == m, lane, num_experts),
                          axis=-1, keepdims=True)
            hit = lane == sel
            keep = jnp.logical_or(keep, hit)
            remaining = jnp.where(hit, -1.0, remaining)
        w = jnp.where(keep, probs, 0.0)
        w = w * pl.reciprocal(jnp.sum(w, axis=-1, keepdims=True), approx=True)
        w_s[...] = w
        acc_s[...] = jnp.zeros_like(acc_s)

    # ---- one expert per grid step ('arbitrary' axis); its weights are the only
    #      expert weights resident (double-buffered / prefetched by the pipeline).
    # TODO(synk): for large num_experts, route sorted tokens per expert with
    #             PrefetchScalarGridSpec instead of dense compute for every expert.
    h = _gelu(jnp.dot(xn_s[...], w1_ref[0], preferred_element_type=f32) + b1_ref[0])
    oe = jnp.dot(h.astype(bf16), w2_ref[0], preferred_element_type=f32) + b2_ref[0]
    lane = jax.lax.broadcasted_iota(jnp.int32, w_s.shape, 1)
    we = jnp.sum(jnp.where(lane == e_idx, w_s[...], 0.0), axis=-1, keepdims=True)
    acc_s[...] = acc_s[...] + we * oe

    @pl.when(e_idx == num_experts - 1)
    def _():
        x_new = x_ref[...] + acc_s[...]                                  # dropout3=id
        hf = _gelu(jnp.dot(x_new.astype(bf16), wf1_ref[...],
                           preferred_element_type=f32) + bf1_ref[...])
        o_ref[...] = x_new + jnp.dot(hf.astype(bf16), wf2_ref[...],
                                     preferred_element_type=f32) + bf2_ref[...]


# ----------------------------------------------------------------------------
# Tile / VMEM-budget helpers
# ----------------------------------------------------------------------------
def _vmem_cap_bytes():
    try:
        return int(pltpu.get_tpu_info().vmem_capacity_bytes)
    except Exception:
        return 64 * 1024 * 1024        # conservative (v7x-sized) fallback


def _est_attn_conv_vmem(ts, w, d_model):
    sx = ts + 2 * w
    blocks = 2 * 4 * (2 * ts * d_model + 2 * w * d_model)
    weights = (2 * d_model * 3 * d_model + d_model * d_model) * 2 + 10 * d_model * 4
    interm = 18 * sx * d_model * 4
    return blocks + weights + interm


def _est_moe_ff_vmem(tn, d_model, hh, f, e):
    blocks = 2 * 4 * (2 * tn * d_model)
    weights = ((2 * 2 * (d_model * hh + hh * d_model)
                + d_model * f + f * d_model) * 2
               + d_model * e * 4 + 8 * max(d_model, f) * 4)
    scratch = tn * d_model * 2 + tn * d_model * 4 + tn * e * 4
    interm = 10 * tn * max(d_model, f, hh) * 4
    return blocks + weights + scratch + interm


def _pick_seq_tile(s, w, d_model, budget):
    best = w
    for t in range(w, s + 1, w):
        if s % t == 0 and _est_attn_conv_vmem(t, w, d_model) <= budget:
            best = t
    return best


def _pick_token_tile(n, d_model, hh, f, e, budget):
    for c in (1024, 512, 256, 128, 64, 32, 16, 8):
        if n % c == 0 and _est_moe_ff_vmem(c, d_model, hh, f, e) <= budget:
            return c
    return 8 if n % 8 == 0 else n


# ----------------------------------------------------------------------------
# Wrapper
# ----------------------------------------------------------------------------
def improved_transformer_block(x, p, *, num_heads, window_size, bidirectional,
                               num_experts, top_k, entropy_weight, dilation=2,
                               seq_tile=None, token_tile=None):
    B, S, D = x.shape
    W = window_size
    E = num_experts
    Hh = p["moe_w1"].shape[2]
    ED = p["moe_w2"].shape[2]
    F = p["ff_w1"].shape[1]

    assert D % num_heads == 0
    # TODO(synk): sequences with S % window_size != 0 (padded/masked last window)
    # are not supported.
    assert S % W == 0 and W % 8 == 0
    assert 0 < dilation <= W
    assert ED == D, "residual add requires expert_dim == embed_dim"

    bf16 = jnp.bfloat16
    # bf16 weight copies feed the MXU; biases / LN params stay f32.
    wqkv = p["wqkv"].astype(bf16)
    wo = p["wo"].astype(bf16)
    wc = jnp.concatenate([p["conv_w"][0], p["conv_w"][1], p["conv_w"][2]],
                         axis=1).astype(bf16)            # fused 3-tap conv weight
    moe_w1 = p["moe_w1"].astype(bf16)
    moe_w2 = p["moe_w2"].astype(bf16)
    ff_w1 = p["ff_w1"].astype(bf16)
    ff_w2 = p["ff_w2"].astype(bf16)

    # per-generation VMEM budget (v5e/v6e ~96 MiB, v7x ~48 MiB)
    budget = (_vmem_cap_bytes() * 3) // 4

    # ---------------- kernel A: attention + dilated conv ----------------
    TS = seq_tile if seq_tile is not None else _pick_seq_tile(S, W, D, budget // 2)
    assert S % TS == 0 and TS % W == 0
    wpt = TS // W                         # windows per sequence tile
    n_win = S // W

    x_spec = pl.BlockSpec((1, TS, D), lambda b, i: (b, i, 0))
    left_spec = pl.BlockSpec(
        (1, W, D), lambda b, i: (b, jnp.maximum(i * wpt - 1, 0), 0))
    right_spec = pl.BlockSpec(
        (1, W, D), lambda b, i: (b, jnp.minimum((i + 1) * wpt, n_win - 1), 0))

    attn_conv_fn = pl.pallas_call(
        functools.partial(attn_conv_kernel, num_heads=num_heads, window_size=W,
                          bidirectional=bidirectional, dilation=dilation,
                          seq_len=S, seq_tile=TS),
        out_shape=jax.ShapeDtypeStruct((B, S, D), jnp.float32),
        grid=(B, S // TS),
        in_specs=[
            x_spec, left_spec, right_spec,
            _const_spec((1, D)), _const_spec((1, D)),            # ln1
            _const_spec((D, 3 * D)), _const_spec((1, 3 * D)),    # qkv proj
            _const_spec((D, D)), _const_spec((1, D)),            # out proj
            _const_spec((1, D)), _const_spec((1, D)),            # ln2
            _const_spec((D, 3 * D)), _const_spec((1, D)),        # fused conv w + b
        ],
        out_specs=pl.BlockSpec((1, TS, D), lambda b, i: (b, i, 0)),
        compiler_params=pltpu.CompilerParams(
            dimension_semantics=("parallel", "parallel"),
            vmem_limit_bytes=budget),
    )
    x1 = attn_conv_fn(x, x, x, p["ln1_g"], p["ln1_b"], wqkv, p["bqkv"],
                      wo, p["bo"], p["ln2_g"], p["ln2_b"], wc, p["conv_b"])

    # ---------------- kernel B: MoE + FF over token tiles ----------------
    N = B * S
    TN = (token_tile if token_tile is not None
          else _pick_token_tile(N, D, Hh, F, E, budget))
    assert N % TN == 0 and TN % 8 == 0
    xf = x1.reshape(N, D)

    moe_ff_fn = pl.pallas_call(
        functools.partial(moe_ff_kernel, num_experts=E, top_k=top_k),
        out_shape=(jax.ShapeDtypeStruct((N, D), jnp.float32),
                   jax.ShapeDtypeStruct((N // TN, 1, TN), jnp.float32)),
        grid=(N // TN, E),
        in_specs=[
            pl.BlockSpec((TN, D), lambda i, e: (i, 0)),
            _const_spec((1, D)), _const_spec((1, D)),            # ln3
            _const_spec((D, E)), _const_spec((1, E)),            # gate
            pl.BlockSpec((1, D, Hh), lambda i, e: (e, 0, 0)),    # expert W1 (streamed)
            pl.BlockSpec((1, 1, Hh), lambda i, e: (e, 0, 0)),
            pl.BlockSpec((1, Hh, ED), lambda i, e: (e, 0, 0)),   # expert W2 (streamed)
            pl.BlockSpec((1, 1, ED), lambda i, e: (e, 0, 0)),
            _const_spec((D, F)), _const_spec((1, F)),            # ff layer 1
            _const_spec((F, D)), _const_spec((1, D)),            # ff layer 2
        ],
        out_specs=(pl.BlockSpec((TN, D), lambda i, e: (i, 0)),
                   pl.BlockSpec((1, 1, TN), lambda i, e: (i, 0, 0))),
        scratch_shapes=[pltpu.VMEM((TN, D), jnp.bfloat16),       # LN3(x) for experts
                        pltpu.VMEM((TN, E), jnp.float32),        # top-k combine weights
                        pltpu.VMEM((TN, D), jnp.float32)],       # MoE accumulator
        compiler_params=pltpu.CompilerParams(
            dimension_semantics=("parallel", "arbitrary"),
            vmem_limit_bytes=budget),
    )
    yf, ent = moe_ff_fn(xf, p["ln3_g"], p["ln3_b"], p["gate_w"], p["gate_b"],
                        moe_w1, p["moe_b1"], moe_w2, p["moe_b2"],
                        ff_w1, p["ff_b1"], ff_w2, p["ff_b2"])

    entropy_loss = entropy_weight * jnp.mean(ent)
    return yf.reshape(B, S, D), entropy_loss


# ----------------------------------------------------------------------------
# Params / pure-JAX reference (f32) for the self-check
# ----------------------------------------------------------------------------
def init_params(key, D, ff_hidden, num_experts, expert_dim):
    ks = jax.random.split(key, 24)
    nrm = lambda k, shape, s=0.05: (s * jax.random.normal(k, shape)).astype(jnp.float32)
    return dict(
        ln1_g=1.0 + nrm(ks[0], (1, D)), ln1_b=nrm(ks[1], (1, D)),
        ln2_g=1.0 + nrm(ks[2], (1, D)), ln2_b=nrm(ks[3], (1, D)),
        ln3_g=1.0 + nrm(ks[4], (1, D)), ln3_b=nrm(ks[5], (1, D)),
        wqkv=nrm(ks[6], (D, 3 * D)), bqkv=nrm(ks[7], (1, 3 * D)),
        wo=nrm(ks[8], (D, D)), bo=nrm(ks[9], (1, D)),
        conv_w=nrm(ks[10], (3, D, D)), conv_b=nrm(ks[11], (1, D)),   # (tap, in, out)
        gate_w=nrm(ks[12], (D, num_experts)),
        # A spread of gate biases keeps the top-k routing decision stable so the
        # bf16 Pallas kernel and the f32 reference pick identical experts.
        gate_b=(2.0 * jnp.arange(num_experts, dtype=jnp.float32))[None, :],
        moe_w1=nrm(ks[13], (num_experts, D, D)),
        moe_b1=nrm(ks[14], (num_experts, 1, D)),
        moe_w2=nrm(ks[15], (num_experts, D, expert_dim)),
        moe_b2=nrm(ks[16], (num_experts, 1, expert_dim)),
        ff_w1=nrm(ks[17], (D, ff_hidden)), ff_b1=nrm(ks[18], (1, ff_hidden)),
        ff_w2=nrm(ks[19], (ff_hidden, D)), ff_b2=nrm(ks[20], (1, D)),
    )


def reference_block(x, p, *, num_heads, window_size, bidirectional, num_experts,
                    top_k, entropy_weight, dilation=2):
    B, S, D = x.shape
    H, W = num_heads, window_size
    Dh = D // H
    A = S // W
    d = dilation

    def ln(t, g, b):
        mu = jnp.mean(t, -1, keepdims=True)
        var = jnp.mean((t - mu) ** 2, -1, keepdims=True)
        return (t - mu) / jnp.sqrt(var + EPS) * g + b

    # local attention
    xn = ln(x, p["ln1_g"], p["ln1_b"])
    qkv = xn @ p["wqkv"] + p["bqkv"]
    q, k, v = qkv[..., :D], qkv[..., D:2 * D], qkv[..., 2 * D:]
    win = lambda t: t.reshape(B, A, W, H, Dh)
    s = jnp.einsum("nawhd,nakhd->nahwk", win(q), win(k)) / math.sqrt(Dh)
    if not bidirectional:
        qi = jnp.arange(W)[:, None]
        kj = jnp.arange(W)[None, :]
        s = jnp.where(kj <= qi, s, -1e30)
    pa = jax.nn.softmax(s, axis=-1)
    attn = jnp.einsum("nahwk,nakhd->nawhd", pa, win(v)).reshape(B, S, D)
    x = x + attn @ p["wo"] + p["bo"]

    # dilated conv
    xn2 = ln(x, p["ln2_g"], p["ln2_b"])
    pad = jnp.pad(xn2, ((0, 0), (d, d), (0, 0)))
    y = (pad[:, 0:S] @ p["conv_w"][0] + pad[:, d:S + d] @ p["conv_w"][1]
         + pad[:, 2 * d:S + 2 * d] @ p["conv_w"][2]) + p["conv_b"]
    x = x + y

    # MoE
    xn3 = ln(x, p["ln3_g"], p["ln3_b"])
    logits = xn3 @ p["gate_w"] + p["gate_b"]
    probs = jax.nn.softmax(logits, axis=-1)
    ent = -jnp.sum(probs * jnp.log(probs + 1e-9), axis=-1)
    topv, topi = jax.lax.top_k(probs, top_k)
    w = jnp.sum(jax.nn.one_hot(topi, num_experts) * topv[..., None], axis=-2)
    w = w / jnp.sum(w, axis=-1, keepdims=True)
    moe_out = jnp.zeros_like(x)
    for e in range(num_experts):
        h = jax.nn.gelu(xn3 @ p["moe_w1"][e] + p["moe_b1"][e], approximate=True)
        moe_out = moe_out + w[..., e:e + 1] * (h @ p["moe_w2"][e] + p["moe_b2"][e])
    x = x + moe_out

    # feed-forward
    hf = jax.nn.gelu(x @ p["ff_w1"] + p["ff_b1"], approximate=True)
    x = x + hf @ p["ff_w2"] + p["ff_b2"]
    return x, entropy_weight * jnp.mean(ent)


if __name__ == "__main__":
    B, S = 2, 16
    embed_dim, num_heads = 32, 4
    ff_hidden_dim = 64
    num_experts, expert_dim = 4, 32          # expert_dim == embed_dim (residual add)
    window_size = 8                          # two local windows per sequence tile pair
    top_k, entropy_weight = 2, 0.1

    key = jax.random.PRNGKey(0)
    kx, kp = jax.random.split(key)
    x = jax.random.normal(kx, (B, S, embed_dim), dtype=jnp.float32)
    params = init_params(kp, embed_dim, ff_hidden_dim, num_experts, expert_dim)

    kwargs = dict(num_heads=num_heads, window_size=window_size, bidirectional=True,
                  num_experts=num_experts, top_k=top_k,
                  entropy_weight=entropy_weight)

    # seq_tile=8  -> 2 sequence tiles per batch (exercises the conv-halo path);
    # token_tile=16 -> 2 token tiles (exercises the expert-streaming grid axis).
    out, entropy_loss = improved_transformer_block(
        x, params, seq_tile=8, token_tile=16, **kwargs)
    out = jax.block_until_ready(out)
    entropy_loss = jax.block_until_ready(entropy_loss)

    assert out.shape == (B, S, embed_dim)
    assert bool(jnp.all(jnp.isfinite(out))) and bool(jnp.isfinite(entropy_loss))

    # pure-JAX f32 reference (kernel uses bf16 matmuls / approx recip -> loose tol)
    ref_out, ref_ent = reference_block(x, params, **kwargs)
    max_diff = float(jnp.max(jnp.abs(out - ref_out)))
    ent_diff = abs(float(entropy_loss) - float(ref_ent))
    assert max_diff < 5e-2, f"output mismatch: max |diff| = {max_diff}"
    assert ent_diff < 5e-3, f"entropy mismatch: |diff| = {ent_diff}"
    print("KERNEL_OK")
</pallas_src>

<mosaic_0001>
module attributes {stable_mosaic.version = 11 : i64} {
  func.func @attn_conv_kernel(%arg0: i32, %arg1: i32, %arg2: memref<1x8x32xf32, #tpu.memory_space<vmem>>, %arg3: memref<1x8x32xf32, #tpu.memory_space<vmem>>, %arg4: memref<1x8x32xf32, #tpu.memory_space<vmem>>, %arg5: memref<1x32xf32, #tpu.memory_space<vmem>>, %arg6: memref<1x32xf32, #tpu.memory_space<vmem>>, %arg7: memref<32x96xbf16, #tpu.memory_space<vmem>>, %arg8: memref<1x96xf32, #tpu.memory_space<vmem>>, %arg9: memref<32x32xbf16, #tpu.memory_space<vmem>>, %arg10: memref<1x32xf32, #tpu.memory_space<vmem>>, %arg11: memref<1x32xf32, #tpu.memory_space<vmem>>, %arg12: memref<1x32xf32, #tpu.memory_space<vmem>>, %arg13: memref<32x96xbf16, #tpu.memory_space<vmem>>, %arg14: memref<1x32xf32, #tpu.memory_space<vmem>>, %arg15: memref<1x8x32xf32, #tpu.memory_space<vmem>>) attributes {dimension_semantics = [#tpu.dimension_semantics<parallel>, #tpu.dimension_semantics<parallel>], iteration_bounds = array<i64: 2, 2>, scalar_prefetch = 0 : i64, scratch_operands = 0 : i64, tpu.core_type = #tpu.core_type<tc>, window_params = [{transform_indices = @transform_0, window_bounds = array<i64: 1, 8, 32>}, {transform_indices = @transform_1, window_bounds = array<i64: 1, 8, 32>}, {transform_indices = @transform_2, window_bounds = array<i64: 1, 8, 32>}, {pipeline_mode = #tpu.pipeline_mode<synchronous>, transform_indices = @transform_3, window_bounds = array<i64: 1, 32>}, {pipeline_mode = #tpu.pipeline_mode<synchronous>, transform_indices = @transform_4, window_bounds = array<i64: 1, 32>}, {pipeline_mode = #tpu.pipeline_mode<synchronous>, transform_indices = @transform_5, window_bounds = array<i64: 32, 96>}, {pipeline_mode = #tpu.pipeline_mode<synchronous>, transform_indices = @transform_6, window_bounds = array<i64: 1, 96>}, {pipeline_mode = #tpu.pipeline_mode<synchronous>, transform_indices = @transform_7, window_bounds = array<i64: 32, 32>}, {pipeline_mode = #tpu.pipeline_mode<synchronous>, transform_indices = @transform_8, window_bounds = array<i64: 1, 32>}, {pipeline_mode = #tpu.pipeline_mode<synchronous>, transform_indices = @transform_9, window_bounds = array<i64: 1, 32>}, {pipeline_mode = #tpu.pipeline_mode<synchronous>, transform_indices = @transform_10, window_bounds = array<i64: 1, 32>}, {pipeline_mode = #tpu.pipeline_mode<synchronous>, transform_indices = @transform_11, window_bounds = array<i64: 32, 96>}, {pipeline_mode = #tpu.pipeline_mode<synchronous>, transform_indices = @transform_12, window_bounds = array<i64: 1, 32>}, {transform_indices = @transform_13, window_bounds = array<i64: 1, 8, 32>}]} {
    %c0 = arith.constant 0 : index
    %c0_0 = arith.constant 0 : index
    %c0_1 = arith.constant 0 : index
    %0 = vector.load %arg3[%c0, %c0_0, %c0_1] : memref<1x8x32xf32, #tpu.memory_space<vmem>>, vector<1x8x32xf32>
    %1 = vector.shape_cast %0 : vector<1x8x32xf32> to vector<8x32xf32>
    %c0_2 = arith.constant 0 : index
    %c0_3 = arith.constant 0 : index
    %c0_4 = arith.constant 0 : index
    %2 = vector.load %arg2[%c0_2, %c0_3, %c0_4] : memref<1x8x32xf32, #tpu.memory_space<vmem>>, vector<1x8x32xf32>
    %3 = vector.shape_cast %2 : vector<1x8x32xf32> to vector<8x32xf32>
    %c0_5 = arith.constant 0 : index
    %c0_6 = arith.constant 0 : index
    %c0_7 = arith.constant 0 : index
    %4 = vector.load %arg4[%c0_5, %c0_6, %c0_7] : memref<1x8x32xf32, #tpu.memory_space<vmem>>, vector<1x8x32xf32>
    %5 = vector.shape_cast %4 : vector<1x8x32xf32> to vector<8x32xf32>
    %6 = tpu.concatenate %1, %3, %5 in 0 : vector<8x32xf32>, vector<8x32xf32>, vector<8x32xf32> -> vector<24x32xf32>
    %c0_8 = arith.constant 0 : index
    %c0_9 = arith.constant 0 : index
    %7 = vector.load %arg5[%c0_8, %c0_9] : memref<1x32xf32, #tpu.memory_space<vmem>>, vector<1x32xf32>
    %c0_10 = arith.constant 0 : index
    %c0_11 = arith.constant 0 : index
    %8 = vector.load %arg6[%c0_10, %c0_11] : memref<1x32xf32, #tpu.memory_space<vmem>>, vector<1x32xf32>
    %cst = arith.constant dense<0.000000e+00> : vector<24xf32>
    %9 = vector.multi_reduction <add>, %6, %cst [1] : vector<24x32xf32> to vector<24xf32>
    %10 = vector.shape_cast %9 : vector<24xf32> to vector<24x1xf32>
    %cst_12 = arith.constant 3.200000e+01 : f32
    %11 = vector.broadcast %cst_12 : f32 to vector<24x1xf32>
    %12 = arith.divf %10, %11 : vector<24x1xf32>
    %13 = vector.broadcast %12 : vector<24x1xf32> to vector<24x32xf32>
    %14 = arith.subf %6, %13 : vector<24x32xf32>
    %15 = arith.mulf %14, %14 : vector<24x32xf32>
    %cst_13 = arith.constant dense<0.000000e+00> : vector<24xf32>
    %16 = vector.multi_reduction <add>, %15, %cst_13 [1] : vector<24x32xf32> to vector<24xf32>
    %17 = vector.shape_cast %16 : vector<24xf32> to vector<24x1xf32>
    %cst_14 = arith.constant 3.200000e+01 : f32
    %18 = vector.broadcast %cst_14 : f32 to vector<24x1xf32>
    %19 = arith.divf %17, %18 : vector<24x1xf32>
    %20 = vector.broadcast %12 : vector<24x1xf32> to vector<24x32xf32>
    %21 = arith.subf %6, %20 : vector<24x32xf32>
    %cst_15 = arith.constant 9.99999974E-6 : f32
    %22 = vector.broadcast %cst_15 : f32 to vector<24x1xf32>
    %23 = arith.addf %19, %22 : vector<24x1xf32>
    %24 = math.rsqrt %23 : vector<24x1xf32>
    %25 = vector.broadcast %24 : vector<24x1xf32> to vector<24x32xf32>
    %26 = arith.mulf %21, %25 : vector<24x32xf32>
    %27 = vector.broadcast %7 : vector<1x32xf32> to vector<24x32xf32>
    %28 = arith.mulf %26, %27 : vector<24x32xf32>
    %29 = vector.broadcast %8 : vector<1x32xf32> to vector<24x32xf32>
    %30 = arith.addf %28, %29 : vector<24x32xf32>
    %31 = arith.truncf %30 : vector<24x32xf32> to vector<24x32xbf16>
    %c0_16 = arith.constant 0 : index
    %c0_17 = arith.constant 0 : index
    %32 = vector.load %arg7[%c0_16, %c0_17] : memref<32x96xbf16, #tpu.memory_space<vmem>>, vector<32x96xbf16>
    %cst_18 = arith.constant dense<0.000000e+00> : vector<24x96xf32>
    %33 = tpu.matmul %31, %32, %cst_18 {dimension_numbers = #tpu.dot_dimension_numbers<[1], [0], [0], [1], [0, 0, 1, 1], [], []>} : vector<24x32xbf16>, vector<32x96xbf16>, vector<24x96xf32> -> vector<24x96xf32>
    %c0_19 = arith.constant 0 : index
    %c0_20 = arith.constant 0 : index
    %34 = vector.load %arg8[%c0_19, %c0_20] : memref<1x96xf32, #tpu.memory_space<vmem>>, vector<1x96xf32>
    %35 = vector.broadcast %34 : vector<1x96xf32> to vector<24x96xf32>
    %36 = arith.addf %33, %35 : vector<24x96xf32>
    %37 = vector.extract_strided_slice %36 {offsets = [0, 0], sizes = [24, 32], strides = [1, 1]} : vector<24x96xf32> to vector<24x32xf32>
    %38 = vector.shape_cast %37 : vector<24x32xf32> to vector<3x8x4x8xf32>
    %39 = tpu.transpose %38, [0, 2, 1, 3] : vector<3x8x4x8xf32> -> vector<3x4x8x8xf32>
    %40 = vector.shape_cast %39 : vector<3x4x8x8xf32> to vector<12x8x8xf32>
    %41 = arith.truncf %40 : vector<12x8x8xf32> to vector<12x8x8xbf16>
    %42 = vector.extract_strided_slice %36 {offsets = [0, 32], sizes = [24, 32], strides = [1, 1]} : vector<24x96xf32> to vector<24x32xf32>
    %43 = vector.shape_cast %42 : vector<24x32xf32> to vector<3x8x4x8xf32>
    %44 = tpu.transpose %43, [0, 2, 1, 3] : vector<3x8x4x8xf32> -> vector<3x4x8x8xf32>
    %45 = vector.shape_cast %44 : vector<3x4x8x8xf32> to vector<12x8x8xf32>
    %46 = arith.truncf %45 : vector<12x8x8xf32> to vector<12x8x8xbf16>
    %47 = vector.extract_strided_slice %36 {offsets = [0, 64], sizes = [24, 32], strides = [1, 1]} : vector<24x96xf32> to vector<24x32xf32>
    %48 = vector.shape_cast %47 : vector<24x32xf32> to vector<3x8x4x8xf32>
    %49 = tpu.transpose %48, [0, 2, 1, 3] : vector<3x8x4x8xf32> -> vector<3x4x8x8xf32>
    %50 = vector.shape_cast %49 : vector<3x4x8x8xf32> to vector<12x8x8xf32>
    %51 = arith.truncf %50 : vector<12x8x8xf32> to vector<12x8x8xbf16>
    "tpu.trace_start"() <{level = 10 : i32, message = "gwd,gkd->gwk"}> : () -> ()
    %cst_21 = arith.constant dense<0.000000e+00> : vector<12x8x8xf32>
    %52 = tpu.matmul %41, %46, %cst_21 {dimension_numbers = #tpu.dot_dimension_numbers<[2], [2], [1], [1], [0, 0, 0, 1, 1, 1], [0], [0]>} : vector<12x8x8xbf16>, vector<12x8x8xbf16>, vector<12x8x8xf32> -> vector<12x8x8xf32>
    "tpu.trace_stop"() : () -> ()
    %cst_22 = arith.constant 0.353553385 : f32
    %53 = vector.broadcast %cst_22 : f32 to vector<12x8x8xf32>
    %54 = arith.mulf %52, %53 : vector<12x8x8xf32>
    %cst_23 = arith.constant dense<0xFF800000> : vector<12x8xf32>
    %55 = vector.multi_reduction <maximumf>, %54, %cst_23 [2] : vector<12x8x8xf32> to vector<12x8xf32>
    %56 = vector.shape_cast %55 : vector<12x8xf32> to vector<12x8x1xf32>
    %57 = vector.broadcast %56 : vector<12x8x1xf32> to vector<12x8x8xf32>
    %58 = arith.subf %54, %57 : vector<12x8x8xf32>
    %59 = math.exp %58 : vector<12x8x8xf32>
    %cst_24 = arith.constant dense<0.000000e+00> : vector<12x8xf32>
    %60 = vector.multi_reduction <add>, %59, %cst_24 [2] : vector<12x8x8xf32> to vector<12x8xf32>
    %61 = vector.shape_cast %60 : vector<12x8xf32> to vector<12x8x1xf32>
    %62 = tpu.reciprocal %61 {approx = true} : vector<12x8x1xf32> -> vector<12x8x1xf32>
    %63 = vector.broadcast %62 : vector<12x8x1xf32> to vector<12x8x8xf32>
    %64 = arith.mulf %59, %63 : vector<12x8x8xf32>
    %65 = arith.truncf %64 : vector<12x8x8xf32> to vector<12x8x8xbf16>
    "tpu.trace_start"() <{level = 10 : i32, message = "gwk,gkd->gwd"}> : () -> ()
    %cst_25 = arith.constant dense<0.000000e+00> : vector<12x8x8xf32>
    %66 = tpu.matmul %65, %51, %cst_25 {dimension_numbers = #tpu.dot_dimension_numbers<[2], [1], [1], [2], [0, 0, 0, 1, 1, 2], [0], [0]>} : vector<12x8x8xbf16>, vector<12x8x8xbf16>, vector<12x8x8xf32> -> vector<12x8x8xf32>
    "tpu.trace_stop"() : () -> ()
    %67 = vector.shape_cast %66 : vector<12x8x8xf32> to vector<3x4x8x8xf32>
    %68 = tpu.transpose %67, [0, 2, 1, 3] : vector<3x4x8x8xf32> -> vector<3x8x4x8xf32>
    %69 = vector.shape_cast %68 : vector<3x8x4x8xf32> to vector<24x32xf32>
    %70 = arith.truncf %69 : vector<24x32xf32> to vector<24x32xbf16>
    %c0_26 = arith.constant 0 : index
    %c0_27 = arith.constant 0 : index
    %71 = vector.load %arg9[%c0_26, %c0_27] : memref<32x32xbf16, #tpu.memory_space<vmem>>, vector<32x32xbf16>
    %cst_28 = arith.constant dense<0.000000e+00> : vector<24x32xf32>
    %72 = tpu.matmul %70, %71, %cst_28 {dimension_numbers = #tpu.dot_dimension_numbers<[1], [0], [0], [1], [0, 0, 1, 1], [], []>} : vector<24x32xbf16>, vector<32x32xbf16>, vector<24x32xf32> -> vector<24x32xf32>
    %c0_29 = arith.constant 0 : index
    %c0_30 = arith.constant 0 : index
    %73 = vector.load %arg10[%c0_29, %c0_30] : memref<1x32xf32, #tpu.memory_space<vmem>>, vector<1x32xf32>
    %74 = vector.broadcast %73 : vector<1x32xf32> to vector<24x32xf32>
    %75 = arith.addf %72, %74 : vector<24x32xf32>
    %76 = arith.addf %6, %75 : vector<24x32xf32>
    %77 = vector.extract_strided_slice %76 {offsets = [6, 0], sizes = [12, 32], strides = [1, 1]} : vector<24x32xf32> to vector<12x32xf32>
    %c0_31 = arith.constant 0 : index
    %c0_32 = arith.constant 0 : index
    %78 = vector.load %arg11[%c0_31, %c0_32] : memref<1x32xf32, #tpu.memory_space<vmem>>, vector<1x32xf32>
    %c0_33 = arith.constant 0 : index
    %c0_34 = arith.constant 0 : index
    %79 = vector.load %arg12[%c0_33, %c0_34] : memref<1x32xf32, #tpu.memory_space<vmem>>, vector<1x32xf32>
    %cst_35 = arith.constant dense<0.000000e+00> : vector<12xf32>
    %80 = vector.multi_reduction <add>, %77, %cst_35 [1] : vector<12x32xf32> to vector<12xf32>
    %81 = vector.shape_cast %80 : vector<12xf32> to vector<12x1xf32>
    %cst_36 = arith.constant 3.200000e+01 : f32
    %82 = vector.broadcast %cst_36 : f32 to vector<12x1xf32>
    %83 = arith.divf %81, %82 : vector<12x1xf32>
    %84 = vector.broadcast %83 : vector<12x1xf32> to vector<12x32xf32>
    %85 = arith.subf %77, %84 : vector<12x32xf32>
    %86 = arith.mulf %85, %85 : vector<12x32xf32>
    %cst_37 = arith.constant dense<0.000000e+00> : vector<12xf32>
    %87 = vector.multi_reduction <add>, %86, %cst_37 [1] : vector<12x32xf32> to vector<12xf32>
    %88 = vector.shape_cast %87 : vector<12xf32> to vector<12x1xf32>
    %cst_38 = arith.constant 3.200000e+01 : f32
    %89 = vector.broadcast %cst_38 : f32 to vector<12x1xf32>
    %90 = arith.divf %88, %89 : vector<12x1xf32>
    %91 = vector.broadcast %83 : vector<12x1xf32> to vector<12x32xf32>
    %92 = arith.subf %77, %91 : vector<12x32xf32>
    %cst_39 = arith.constant 9.99999974E-6 : f32
    %93 = vector.broadcast %cst_39 : f32 to vector<12x1xf32>
    %94 = arith.addf %90, %93 : vector<12x1xf32>
    %95 = math.rsqrt %94 : vector<12x1xf32>
    %96 = vector.broadcast %95 : vector<12x1xf32> to vector<12x32xf32>
    %97 = arith.mulf %92, %96 : vector<12x32xf32>
    %98 = vector.broadcast %78 : vector<1x32xf32> to vector<12x32xf32>
    %99 = arith.mulf %97, %98 : vector<12x32xf32>
    %100 = vector.broadcast %79 : vector<1x32xf32> to vector<12x32xf32>
    %101 = arith.addf %99, %100 : vector<12x32xf32>
    %102 = arith.truncf %101 : vector<12x32xf32> to vector<12x32xbf16>
    %c0_40 = arith.constant 0 : index
    %c0_41 = arith.constant 0 : index
    %103 = vector.load %arg13[%c0_40, %c0_41] : memref<32x96xbf16, #tpu.memory_space<vmem>>, vector<32x96xbf16>
    %cst_42 = arith.constant dense<0.000000e+00> : vector<12x96xf32>
    %104 = tpu.matmul %102, %103, %cst_42 {dimension_numbers = #tpu.dot_dimension_numbers<[1], [0], [0], [1], [0, 0, 1, 1], [], []>} : vector<12x32xbf16>, vector<32x96xbf16>, vector<12x96xf32> -> vector<12x96xf32>
    %105 = vector.extract_strided_slice %104 {offsets = [0, 0], sizes = [8, 32], strides = [1, 1]} : vector<12x96xf32> to vector<8x32xf32>
    %106 = vector.extract_strided_slice %104 {offsets = [2, 32], sizes = [8, 32], strides = [1, 1]} : vector<12x96xf32> to vector<8x32xf32>
    %107 = vector.extract_strided_slice %104 {offsets = [4, 64], sizes = [8, 32], strides = [1, 1]} : vector<12x96xf32> to vector<8x32xf32>
    %108 = tpu.iota {dimensions = array<i32: 0>} : vector<8x1xi32>
    %c8_i32 = arith.constant 8 : i32
    %109 = arith.muli %arg1, %c8_i32 : i32
    %110 = vector.broadcast %109 : i32 to vector<8x1xi32>
    %111 = arith.addi %108, %110 : vector<8x1xi32>
    %c2_i32 = arith.constant 2 : i32
    %112 = vector.broadcast %c2_i32 : i32 to vector<8x1xi32>
    %113 = arith.cmpi sge, %111, %112 : vector<8x1xi32>
    %cst_43 = arith.constant 0.000000e+00 : f32
    %114 = vector.shape_cast %113 : vector<8x1xi1> to vector<8x1xi1>
    %115 = vector.broadcast %114 : vector<8x1xi1> to vector<8x32xi1>
    %116 = vector.broadcast %cst_43 : f32 to vector<8x32xf32>
    %117 = arith.select %115, %105, %116 : vector<8x32xi1>, vector<8x32xf32>
    %c13_i32 = arith.constant 13 : i32
    %118 = vector.broadcast %c13_i32 : i32 to vector<8x1xi32>
    %119 = arith.cmpi sle, %111, %118 : vector<8x1xi32>
    %cst_44 = arith.constant 0.000000e+00 : f32
    %120 = vector.shape_cast %119 : vector<8x1xi1> to vector<8x1xi1>
    %121 = vector.broadcast %120 : vector<8x1xi1> to vector<8x32xi1>
    %122 = vector.broadcast %cst_44 : f32 to vector<8x32xf32>
    %123 = arith.select %121, %107, %122 : vector<8x32xi1>, vector<8x32xf32>
    %124 = vector.extract_strided_slice %76 {offsets = [8, 0], sizes = [8, 32], strides = [1, 1]} : vector<24x32xf32> to vector<8x32xf32>
    %125 = arith.addf %124, %106 : vector<8x32xf32>
    %126 = arith.addf %125, %117 : vector<8x32xf32>
    %127 = arith.addf %126, %123 : vector<8x32xf32>
    %c0_45 = arith.constant 0 : index
    %c0_46 = arith.constant 0 : index
    %128 = vector.load %arg14[%c0_45, %c0_46] : memref<1x32xf32, #tpu.memory_space<vmem>>, vector<1x32xf32>
    %129 = vector.broadcast %128 : vector<1x32xf32> to vector<8x32xf32>
    %130 = arith.addf %127, %129 : vector<8x32xf32>
    %c0_47 = arith.constant 0 : index
    %c0_48 = arith.constant 0 : index
    %c0_49 = arith.constant 0 : index
    %131 = vector.load %arg15[%c0_47, %c0_48, %c0_49] : memref<1x8x32xf32, #tpu.memory_space<vmem>>, vector<1x8x32xf32>
    %132 = vector.shape_cast %131 : vector<1x8x32xf32> to vector<8x32xf32>
    %133 = vector.shape_cast %130 : vector<8x32xf32> to vector<1x8x32xf32>
    tpu.vector_store %arg15[%c0_47, %c0_48, %c0_49], %133 {strides = array<i32>} : memref<1x8x32xf32, #tpu.memory_space<vmem>>, vector<1x8x32xf32>,
    return
  }
  func.func @transform_0(%arg0: i32, %arg1: i32) -> (i32, i32, i32) {
    %c0_i32 = arith.constant 0 : i32
    %c0_i32_0 = arith.constant 0 : i32
    return %arg0, %arg1, %c0_i32 : i32, i32, i32
  }
  func.func @transform_1(%arg0: i32, %arg1: i32) -> (i32, i32, i32) {
    %c1_i32 = arith.constant 1 : i32
    %0 = arith.muli %arg1, %c1_i32 : i32
    %c1_i32_0 = arith.constant 1 : i32
    %1 = arith.subi %0, %c1_i32_0 : i32
    %c0_i32 = arith.constant 0 : i32
    %2 = arith.maxsi %1, %c0_i32 : i32
    %c0_i32_1 = arith.constant 0 : i32
    %c0_i32_2 = arith.constant 0 : i32
    return %arg0, %2, %c0_i32_1 : i32, i32, i32
  }
  func.func @transform_2(%arg0: i32, %arg1: i32) -> (i32, i32, i32) {
    %c1_i32 = arith.constant 1 : i32
    %0 = arith.addi %arg1, %c1_i32 : i32
    %c1_i32_0 = arith.constant 1 : i32
    %1 = arith.muli %0, %c1_i32_0 : i32
    %c1_i32_1 = arith.constant 1 : i32
    %2 = arith.minsi %1, %c1_i32_1 : i32
    %c0_i32 = arith.constant 0 : i32
    %c0_i32_2 = arith.constant 0 : i32
    return %arg0, %2, %c0_i32 : i32, i32, i32
  }
  func.func @transform_3(%arg0: i32, %arg1: i32) -> (i32, i32) {
    %c0_i32 = arith.constant 0 : i32
    %c0_i32_0 = arith.constant 0 : i32
    %c0_i32_1 = arith.constant 0 : i32
    return %c0_i32, %c0_i32_0 : i32, i32
  }
  func.func @transform_4(%arg0: i32, %arg1: i32) -> (i32, i32) {
    %c0_i32 = arith.constant 0 : i32
    %c0_i32_0 = arith.constant 0 : i32
    %c0_i32_1 = arith.constant 0 : i32
    return %c0_i32, %c0_i32_0 : i32, i32
  }
  func.func @transform_5(%arg0: i32, %arg1: i32) -> (i32, i32) {
    %c0_i32 = arith.constant 0 : i32
    %c0_i32_0 = arith.constant 0 : i32
    %c0_i32_1 = arith.constant 0 : i32
    return %c0_i32, %c0_i32_0 : i32, i32
  }
  func.func @transform_6(%arg0: i32, %arg1: i32) -> (i32, i32) {
    %c0_i32 = arith.constant 0 : i32
    %c0_i32_0 = arith.constant 0 : i32
    %c0_i32_1 = arith.constant 0 : i32
    return %c0_i32, %c0_i32_0 : i32, i32
  }
  func.func @transform_7(%arg0: i32, %arg1: i32) -> (i32, i32) {
    %c0_i32 = arith.constant 0 : i32
    %c0_i32_0 = arith.constant 0 : i32
    %c0_i32_1 = arith.constant 0 : i32
    return %c0_i32, %c0_i32_0 : i32, i32
  }
  func.func @transform_8(%arg0: i32, %arg1: i32) -> (i32, i32) {
    %c0_i32 = arith.constant 0 : i32
    %c0_i32_0 = arith.constant 0 : i32
    %c0_i32_1 = arith.constant 0 : i32
    return %c0_i32, %c0_i32_0 : i32, i32
  }
  func.func @transform_9(%arg0: i32, %arg1: i32) -> (i32, i32) {
    %c0_i32 = arith.constant 0 : i32
    %c0_i32_0 = arith.constant 0 : i32
    %c0_i32_1 = arith.constant 0 : i32
    return %c0_i32, %c0_i32_0 : i32, i32
  }
  func.func @transform_10(%arg0: i32, %arg1: i32) -> (i32, i32) {
    %c0_i32 = arith.constant 0 : i32
    %c0_i32_0 = arith.constant 0 : i32
    %c0_i32_1 = arith.constant 0 : i32
    return %c0_i32, %c0_i32_0 : i32, i32
  }
  func.func @transform_11(%arg0: i32, %arg1: i32) -> (i32, i32) {
    %c0_i32 = arith.constant 0 : i32
    %c0_i32_0 = arith.constant 0 : i32
    %c0_i32_1 = arith.constant 0 : i32
    return %c0_i32, %c0_i32_0 : i32, i32
  }
  func.func @transform_12(%arg0: i32, %arg1: i32) -> (i32, i32) {
    %c0_i32 = arith.constant 0 : i32
    %c0_i32_0 = arith.constant 0 : i32
    %c0_i32_1 = arith.constant 0 : i32
    return %c0_i32, %c0_i32_0 : i32, i32
  }
  func.func @transform_13(%arg0: i32, %arg1: i32) -> (i32, i32, i32) {
    %c0_i32 = arith.constant 0 : i32
    %c0_i32_0 = arith.constant 0 : i32
    return %arg0, %arg1, %c0_i32 : i32, i32, i32
  }
}

</mosaic_0001>

<llo_original>
// kernel: tpu_custom_call.1
$region0: #{tpu_custom_call.1}
  #allocation0 [shape = 'u32[]', space=smem, size = 0x4, offset = 0x4, fixed_abs, tag = 'smem constant byte address 0x4 - core index']
  #allocation1 [shape = 'u32[72,128]{1,0:T(1,128)}', space=vmem, size = 0x9000, scoped, tag = 'internal scratch']
  %s0 = inlined_call_operand.hbm [shape: f32[2,16,32], index: 0, kind: input, shape index: {}]
  %s1 = inlined_call_operand.hbm [shape: f32[2,16,32], index: 1, kind: input, shape index: {}]
  %s2 = inlined_call_operand.hbm [shape: f32[2,16,32], index: 2, kind: input, shape index: {}]
  %s3 = inlined_call_operand.vmem [shape: f32[1,32], index: 3, kind: input, shape index: {}]
  %s4 = inlined_call_operand.vmem [shape: f32[1,32], index: 4, kind: input, shape index: {}]
  %s5 = inlined_call_operand.hbm [shape: bf16[32,96], index: 5, kind: input, shape index: {}]
  %s6 = inlined_call_operand.vmem [shape: f32[1,96], index: 6, kind: input, shape index: {}]
  %s7 = inlined_call_operand.hbm [shape: bf16[32,32], index: 7, kind: input, shape index: {}]
  %s8 = inlined_call_operand.vmem [shape: f32[1,32], index: 8, kind: input, shape index: {}]
  %s9 = inlined_call_operand.vmem [shape: f32[1,32], index: 9, kind: input, shape index: {}]
  %s10 = inlined_call_operand.vmem [shape: f32[1,32], index: 10, kind: input, shape index: {}]
  %s11 = inlined_call_operand.hbm [shape: bf16[32,96], index: 11, kind: input, shape index: {}]
  %s12 = inlined_call_operand.vmem [shape: f32[1,32], index: 12, kind: input, shape index: {}]
  %s13 = inlined_call_operand.hbm [shape: f32[2,16,32], index: 13, kind: output, shape index: {}]
  %s14 = sld [smem:[#allocation0]]
  $region109: #{tpu_custom_call.1} parent=0
    _
  %s16 = ssub.s32 1, %s14
  %s17 = scalar_select 0, %s16, %s14
  $region1: #{tpu_custom_call.1} parent=0
    #allocation2 [shape = 'u8[8192]{0}', space=vmem, size = 0x2000, scoped, tag = 'input window, operand 0']
    #allocation3 [shape = 's32[2]{0}', space=sflag, size = 0x8, scoped, tag = 'scoped memory for tpu_custom_call.1']
    #allocation4 [shape = 's32[2]{0}', space=sflag, size = 0x8, scoped, tag = 'scoped memory for tpu_custom_call.1']
    #allocation5 [shape = 'u8[8192]{0}', space=vmem, size = 0x2000, scoped, tag = 'input window, operand 1']
    #allocation6 [shape = 's32[2]{0}', space=sflag, size = 0x8, scoped, tag = 'scoped memory for tpu_custom_call.1']
    #allocation7 [shape = 'u8[8192]{0}', space=vmem, size = 0x2000, scoped, tag = 'input window, operand 2']
    #allocation8 [shape = 'u8[8192]{0}', space=vmem, size = 0x2000, scoped, tag = 'input window, operand 5, single buffered']
    #allocation9 [shape = 's32[1]{0}', space=sflag, size = 0x4, scoped, tag = 'scoped memory for tpu_custom_call.1']
    #allocation10 [shape = 'u8[8192]{0}', space=vmem, size = 0x2000, scoped, tag = 'input window, operand 7, single buffered']
    #allocation11 [shape = 'u8[8192]{0}', space=vmem, size = 0x2000, scoped, tag = 'input window, operand 11, single buffered']
    #allocation12 [shape = 's32[1]{0}', space=sflag, size = 0x4, scoped, tag = 'scoped memory for tpu_custom_call.1']
    #allocation13 [shape = 'u8[8192]{0}', space=vmem, size = 0x2000, scoped, tag = 'output window, operand 0']
    %18 = vsyncpa [#allocation3], 0
    %s19 = scalar_lea.sflag [#allocation3], 1
    %20 = vsyncpa %s19, 0
    %21 = vsyncpa [#allocation6], 0
    %s22 = scalar_lea.sflag [#allocation6], 1
    %23 = vsyncpa %s22, 0
    %24 = vsyncpa [#allocation9], 0
    %25 = vsyncpa [#allocation12], 0
    %26 = vsyncpa [#allocation4], 0
    %s27 = scalar_lea.sflag [#allocation4], 1
    %28 = vsyncpa %s27, 0
    loop: start=0, step=1, limit=6
    $region2: #{tpu_custom_call.1} parent=1 // loop_pre_header
      _
    $region3: #{tpu_custom_call.1} parent=1 // loop_header
      %s30 = sphi 0, %s34
      %p31 = scmp.ge.s32.totalorder %s30, 6
      %s37 = sphi 0, %s49
      %s38 = sphi 0, %s45
      %s39 = sphi 0, %s37
      %s40 = sphi 0, %s38
      %s41 = sphi 0, %s39
      %s42 = sphi 0, %s40
      %s54 = sphi 0, %s56
      %s57 = sphi 0, %s54
      %s58 = sphi 0, %s57
      %s74 = sphi 0, %s58
      %s88 = sphi 0, %s90
      %s91 = sphi 0, %s88
      %s92 = sphi 0, %s91
      %s108 = sphi 0, %s92
      %s122 = sphi 0, %s124
      %s125 = sphi 0, %s122
      %s126 = sphi 0, %s125
      %s142 = sphi 0, %s126
      %s146 = sphi 0, %s146
      %s148 = sphi 0, %s146
      %s149 = sphi 0, %s148
      %s163 = sphi 0, %s149
      %s167 = sphi 0, %s167
      %s169 = sphi 0, %s167
      %s170 = sphi 0, %s169
      %s184 = sphi 0, %s170
      %s188 = sphi 0, %s188
      %s190 = sphi 0, %s188
      %s191 = sphi 0, %s190
      %s205 = sphi 0, %s191
      %s209 = sphi 0, %s209
      %s211 = sphi 0, %s209
      %s212 = sphi 0, %s211
      %s226 = sphi 0, %s212
      %s230 = sphi 0, %s230
      %s232 = sphi 0, %s230
      %s233 = sphi 0, %s232
      %s247 = sphi 0, %s233
      %s251 = sphi 0, %s251
      %s253 = sphi 0, %s251
      %s254 = sphi 0, %s253
      %s268 = sphi 0, %s254
      %s272 = sphi 0, %s272
      %s274 = sphi 0, %s272
      %s275 = sphi 0, %s274
      %s289 = sphi 0, %s275
      %s293 = sphi 0, %s293
      %s295 = sphi 0, %s293
      %s296 = sphi 0, %s295
      %s310 = sphi 0, %s296
      %s314 = sphi 0, %s314
      %s316 = sphi 0, %s314
      %s317 = sphi 0, %s316
      %s331 = sphi 0, %s317
      %s335 = sphi 0, %s335
      %s337 = sphi 0, %s335
      %s338 = sphi 0, %s337
      %s352 = sphi 0, %s338
      %s360 = sphi 0, %s362
      %s363 = sphi 0, %s360
      %s364 = sphi 0, %s363
      %s380 = sphi 0, %s364
    $region4: #{tpu_custom_call.1} parent=1 // loop_header_branch
      %33 = sbr.rel (%p31) target = $region8
    $region5: #{tpu_custom_call.1} parent=1 // loop_body
      %s35 = ssub.s32 %s30, 1
      %s36 = ssub.s32 %s30, 2
      %s43 = sadd.s32 1, %s38
      %p44 = scmp.ge.s32.totalorder %s43, 2
      %s45 = scalar_select %p44, 0, %s43
      %s46 = sadd.s32 1, %s37
      %s47 = scalar_select %p44, %s46, %s37
      %p48 = scmp.ge.s32.totalorder %s47, 2
      %s49 = scalar_select %p48, 0, %s47
      %s50 = ssub.s32 %s37, %s49
      %s51 = ssub.s32 %s38, %s45
      %s52 = sor.u32 %s50, %s51
      %p53 = scmp.eq.s32.totalorder %s52, 0
      %s55 = sadd.s32 %s54, 1
      %s56 = scalar_select %p53, %s54, %s55
      %p59 = pneg %p53
      %p60 = scmp.eq.s32.totalorder %s30, 3
      %p61 = por %p59, %p60
      %p62 = scmp.ne.s32.totalorder %s54, %s57
      %p63 = scmp.eq.s32.totalorder %s30, 0
      %p64 = por %p62, %p63
      %p65 = scmp.ne.s32.totalorder %s54, %s57
      %p66 = scmp.eq.s32.totalorder %s35, 3
      %p67 = por %p65, %p66
      %p68 = scmp.ne.s32.totalorder %s57, %s58
      %p69 = scmp.eq.s32.totalorder %s35, 0
      %p70 = por %p68, %p69
      %p71 = scmp.ne.s32.totalorder %s57, %s58
      %p72 = scmp.eq.s32.totalorder %s36, 3
      %p73 = por %p71, %p72
      %p75 = scmp.ne.s32.totalorder %s58, %s74
      %p76 = scmp.eq.s32.totalorder %s36, 0
      %p77 = por %p75, %p76
      %s78 = ssub.s32 %s38, 1
      %p79 = scmp.gt.s32.totalorder %s78, 0
      %s80 = scalar_select %p79, %s78, 0
      %s81 = ssub.s32 %s45, 1
      %p82 = scmp.gt.s32.totalorder %s81, 0
      %s83 = scalar_select %p82, %s81, 0
      %s84 = ssub.s32 %s37, %s49
      %s85 = ssub.s32 %s80, %s83
      %s86 = sor.u32 %s84, %s85
      %p87 = scmp.eq.s32.totalorder %s86, 0
      %s89 = sadd.s32 %s88, 1
      %s90 = scalar_select %p87, %s88, %s89
      %p93 = pneg %p87
      %p94 = scmp.eq.s32.totalorder %s30, 3
      %p95 = por %p93, %p94
      %p96 = scmp.ne.s32.totalorder %s88, %s91
      %p97 = scmp.eq.s32.totalorder %s30, 0
      %p98 = por %p96, %p97
      %p99 = scmp.ne.s32.totalorder %s88, %s91
      %p100 = scmp.eq.s32.totalorder %s35, 3
      %p101 = por %p99, %p100
      %p102 = scmp.ne.s32.totalorder %s91, %s92
      %p103 = scmp.eq.s32.totalorder %s35, 0
      %p104 = por %p102, %p103
      %p105 = scmp.ne.s32.totalorder %s91, %s92
      %p106 = scmp.eq.s32.totalorder %s36, 3
      %p107 = por %p105, %p106
      %p109 = scmp.ne.s32.totalorder %s92, %s108
      %p110 = scmp.eq.s32.totalorder %s36, 0
      %p111 = por %p109, %p110
      %s112 = sadd.s32 %s38, 1
      %p113 = scmp.lt.s32.totalorder %s112, 1
      %s114 = scalar_select %p113, %s112, 1
      %s115 = sadd.s32 %s45, 1
      %p116 = scmp.lt.s32.totalorder %s115, 1
      %s117 = scalar_select %p116, %s115, 1
      %s118 = ssub.s32 %s37, %s49
      %s119 = ssub.s32 %s114, %s117
      %s120 = sor.u32 %s118, %s119
      %p121 = scmp.eq.s32.totalorder %s120, 0
      %s123 = sadd.s32 %s122, 1
      %s124 = scalar_select %p121, %s122, %s123
      %p127 = pneg %p121
      %p128 = scmp.eq.s32.totalorder %s30, 3
      %p129 = por %p127, %p128
      %p130 = scmp.ne.s32.totalorder %s122, %s125
      %p131 = scmp.eq.s32.totalorder %s30, 0
      %p132 = por %p130, %p131
      %p133 = scmp.ne.s32.totalorder %s122, %s125
      %p134 = scmp.eq.s32.totalorder %s35, 3
      %p135 = por %p133, %p134
      %p136 = scmp.ne.s32.totalorder %s125, %s126
      %p137 = scmp.eq.s32.totalorder %s35, 0
      %p138 = por %p136, %p137
      %p139 = scmp.ne.s32.totalorder %s125, %s126
      %p140 = scmp.eq.s32.totalorder %s36, 3
      %p141 = por %p139, %p140
      %p143 = scmp.ne.s32.totalorder %s126, %s142
      %p144 = scmp.eq.s32.totalorder %s36, 0
      %p145 = por %p143, %p144
      %s147 = sadd.s32 %s146, 1
      %p150 = scmp.eq.s32.totalorder %s30, 3
      %p151 = scmp.ne.s32.totalorder %s146, %s148
      %p152 = scmp.eq.s32.totalorder %s30, 0
      %p153 = por %p151, %p152
      %p154 = scmp.ne.s32.totalorder %s146, %s148
      %p155 = scmp.eq.s32.totalorder %s35, 3
      %p156 = por %p154, %p155
      %p157 = scmp.ne.s32.totalorder %s148, %s149
      %p158 = scmp.eq.s32.totalorder %s35, 0
      %p159 = por %p157, %p158
      %p160 = scmp.ne.s32.totalorder %s148, %s149
      %p161 = scmp.eq.s32.totalorder %s36, 3
      %p162 = por %p160, %p161
      %p164 = scmp.ne.s32.totalorder %s149, %s163
      %p165 = scmp.eq.s32.totalorder %s36, 0
      %p166 = por %p164, %p165
      %s168 = sadd.s32 %s167, 1
      %p171 = scmp.eq.s32.totalorder %s30, 3
      %p172 = scmp.ne.s32.totalorder %s167, %s169
      %p173 = scmp.eq.s32.totalorder %s30, 0
      %p174 = por %p172, %p173
      %p175 = scmp.ne.s32.totalorder %s167, %s169
      %p176 = scmp.eq.s32.totalorder %s35, 3
      %p177 = por %p175, %p176
      %p178 = scmp.ne.s32.totalorder %s169, %s170
      %p179 = scmp.eq.s32.totalorder %s35, 0
      %p180 = por %p178, %p179
      %p181 = scmp.ne.s32.totalorder %s169, %s170
      %p182 = scmp.eq.s32.totalorder %s36, 3
      %p183 = por %p181, %p182
      %p185 = scmp.ne.s32.totalorder %s170, %s184
      %p186 = scmp.eq.s32.totalorder %s36, 0
      %p187 = por %p185, %p186
      %s189 = sadd.s32 %s188, 1
      %p192 = scmp.eq.s32.totalorder %s30, 3
      %p193 = scmp.ne.s32.totalorder %s188, %s190
      %p194 = scmp.eq.s32.totalorder %s30, 0
      %p195 = por %p193, %p194
      %p196 = scmp.ne.s32.totalorder %s188, %s190
      %p197 = scmp.eq.s32.totalorder %s35, 3
      %p198 = por %p196, %p197
      %p199 = scmp.ne.s32.totalorder %s190, %s191
      %p200 = scmp.eq.s32.totalorder %s35, 0
      %p201 = por %p199, %p200
      %p202 = scmp.ne.s32.totalorder %s190, %s191
      %p203 = scmp.eq.s32.totalorder %s36, 3
      %p204 = por %p202, %p203
      %p206 = scmp.ne.s32.totalorder %s191, %s205
      %p207 = scmp.eq.s32.totalorder %s36, 0
      %p208 = por %p206, %p207
      %s210 = sadd.s32 %s209, 1
      %p213 = scmp.eq.s32.totalorder %s30, 3
      %p214 = scmp.ne.s32.totalorder %s209, %s211
      %p215 = scmp.eq.s32.totalorder %s30, 0
      %p216 = por %p214, %p215
      %p217 = scmp.ne.s32.totalorder %s209, %s211
      %p218 = scmp.eq.s32.totalorder %s35, 3
      %p219 = por %p217, %p218
      %p220 = scmp.ne.s32.totalorder %s211, %s212
      %p221 = scmp.eq.s32.totalorder %s35, 0
      %p222 = por %p220, %p221
      %p223 = scmp.ne.s32.totalorder %s211, %s212
      %p224 = scmp.eq.s32.totalorder %s36, 3
      %p225 = por %p223, %p224
      %p227 = scmp.ne.s32.totalorder %s212, %s226
      %p228 = scmp.eq.s32.totalorder %s36, 0
      %p229 = por %p227, %p228
      %s231 = sadd.s32 %s230, 1
      %p234 = scmp.eq.s32.totalorder %s30, 3
      %p235 = scmp.ne.s32.totalorder %s230, %s232
      %p236 = scmp.eq.s32.totalorder %s30, 0
      %p237 = por %p235, %p236
      %p238 = scmp.ne.s32.totalorder %s230, %s232
      %p239 = scmp.eq.s32.totalorder %s35, 3
      %p240 = por %p238, %p239
      %p241 = scmp.ne.s32.totalorder %s232, %s233
      %p242 = scmp.eq.s32.totalorder %s35, 0
      %p243 = por %p241, %p242
      %p244 = scmp.ne.s32.totalorder %s232, %s233
      %p245 = scmp.eq.s32.totalorder %s36, 3
      %p246 = por %p244, %p245
      %p248 = scmp.ne.s32.totalorder %s233, %s247
      %p249 = scmp.eq.s32.totalorder %s36, 0
      %p250 = por %p248, %p249
      %s252 = sadd.s32 %s251, 1
      %p255 = scmp.eq.s32.totalorder %s30, 3
      %p256 = scmp.ne.s32.totalorder %s251, %s253
      %p257 = scmp.eq.s32.totalorder %s30, 0
      %p258 = por %p256, %p257
      %p259 = scmp.ne.s32.totalorder %s251, %s253
      %p260 = scmp.eq.s32.totalorder %s35, 3
      %p261 = por %p259, %p260
      %p262 = scmp.ne.s32.totalorder %s253, %s254
      %p263 = scmp.eq.s32.totalorder %s35, 0
      %p264 = por %p262, %p263
      %p265 = scmp.ne.s32.totalorder %s253, %s254
      %p266 = scmp.eq.s32.totalorder %s36, 3
      %p267 = por %p265, %p266
      %p269 = scmp.ne.s32.totalorder %s254, %s268
      %p270 = scmp.eq.s32.totalorder %s36, 0
      %p271 = por %p269, %p270
      %s273 = sadd.s32 %s272, 1
      %p276 = scmp.eq.s32.totalorder %s30, 3
      %p277 = scmp.ne.s32.totalorder %s272, %s274
      %p278 = scmp.eq.s32.totalorder %s30, 0
      %p279 = por %p277, %p278
      %p280 = scmp.ne.s32.totalorder %s272, %s274
      %p281 = scmp.eq.s32.totalorder %s35, 3
      %p282 = por %p280, %p281
      %p283 = scmp.ne.s32.totalorder %s274, %s275
      %p284 = scmp.eq.s32.totalorder %s35, 0
      %p285 = por %p283, %p284
      %p286 = scmp.ne.s32.totalorder %s274, %s275
      %p287 = scmp.eq.s32.totalorder %s36, 3
      %p288 = por %p286, %p287
      %p290 = scmp.ne.s32.totalorder %s275, %s289
      %p291 = scmp.eq.s32.totalorder %s36, 0
      %p292 = por %p290, %p291
      %s294 = sadd.s32 %s293, 1
      %p297 = scmp.eq.s32.totalorder %s30, 3
      %p298 = scmp.ne.s32.totalorder %s293, %s295
      %p299 = scmp.eq.s32.totalorder %s30, 0
      %p300 = por %p298, %p299
      %p301 = scmp.ne.s32.totalorder %s293, %s295
      %p302 = scmp.eq.s32.totalorder %s35, 3
      %p303 = por %p301, %p302
      %p304 = scmp.ne.s32.totalorder %s295, %s296
      %p305 = scmp.eq.s32.totalorder %s35, 0
      %p306 = por %p304, %p305
      %p307 = scmp.ne.s32.totalorder %s295, %s296
      %p308 = scmp.eq.s32.totalorder %s36, 3
      %p309 = por %p307, %p308
      %p311 = scmp.ne.s32.totalorder %s296, %s310
      %p312 = scmp.eq.s32.totalorder %s36, 0
      %p313 = por %p311, %p312
      %s315 = sadd.s32 %s314, 1
      %p318 = scmp.eq.s32.totalorder %s30, 3
      %p319 = scmp.ne.s32.totalorder %s314, %s316
      %p320 = scmp.eq.s32.totalorder %s30, 0
      %p321 = por %p319, %p320
      %p322 = scmp.ne.s32.totalorder %s314, %s316
      %p323 = scmp.eq.s32.totalorder %s35, 3
      %p324 = por %p322, %p323
      %p325 = scmp.ne.s32.totalorder %s316, %s317
      %p326 = scmp.eq.s32.totalorder %s35, 0
      %p327 = por %p325, %p326
      %p328 = scmp.ne.s32.totalorder %s316, %s317
      %p329 = scmp.eq.s32.totalorder %s36, 3
      %p330 = por %p328, %p329
      %p332 = scmp.ne.s32.totalorder %s317, %s331
      %p333 = scmp.eq.s32.totalorder %s36, 0
      %p334 = por %p332, %p333
      %s336 = sadd.s32 %s335, 1
      %p339 = scmp.eq.s32.totalorder %s30, 3
      %p340 = scmp.ne.s32.totalorder %s335, %s337
      %p341 = scmp.eq.s32.totalorder %s30, 0
      %p342 = por %p340, %p341
      %p343 = scmp.ne.s32.totalorder %s335, %s337
      %p344 = scmp.eq.s32.totalorder %s35, 3
      %p345 = por %p343, %p344
      %p346 = scmp.ne.s32.totalorder %s337, %s338
      %p347 = scmp.eq.s32.totalorder %s35, 0
      %p348 = por %p346, %p347
      %p349 = scmp.ne.s32.totalorder %s337, %s338
      %p350 = scmp.eq.s32.totalorder %s36, 3
      %p351 = por %p349, %p350
      %p353 = scmp.ne.s32.totalorder %s338, %s352
      %p354 = scmp.eq.s32.totalorder %s36, 0
      %p355 = por %p353, %p354
      %s356 = ssub.s32 %s37, %s49
      %s357 = ssub.s32 %s38, %s45
      %s358 = sor.u32 %s356, %s357
      %p359 = scmp.eq.s32.totalorder %s358, 0
      %s361 = sadd.s32 %s360, 1
      %s362 = scalar_select %p359, %s360, %s361
      %p365 = pneg %p359
      %p366 = scmp.eq.s32.totalorder %s30, 3
      %p367 = por %p365, %p366
      %p368 = scmp.ne.s32.totalorder %s360, %s363
      %p369 = scmp.eq.s32.totalorder %s30, 0
      %p370 = por %p368, %p369
      %p371 = scmp.ne.s32.totalorder %s360, %s363
      %p372 = scmp.eq.s32.totalorder %s35, 3
      %p373 = por %p371, %p372
      %p374 = scmp.ne.s32.totalorder %s363, %s364
      %p375 = scmp.eq.s32.totalorder %s35, 0
      %p376 = por %p374, %p375
      %p377 = scmp.ne.s32.totalorder %s363, %s364
      %p378 = scmp.eq.s32.totalorder %s36, 3
      %p379 = por %p377, %p378
      %p381 = scmp.ne.s32.totalorder %s364, %s380
      %p382 = scmp.eq.s32.totalorder %s36, 0
      %p383 = por %p381, %p382
      %p384 = scmp.le.s32.totalorder 1, %s30
      %p385 = scmp.lt.s32.totalorder %s30, 5
      %p386 = pnand %p384, %p385
      %p387 = pneg %p386
      // Predicated region
      $region9: #{tpu_custom_call.1} parent=5 // pred_check
        _
      $region10: #{tpu_custom_call.1} parent=5 // pred_check_branch
        %389 = sbr.rel (%p386) target = $region12
      $region11: #{tpu_custom_call.1} parent=5 // pred_region
        %s390 = ssub.s32 %s30, 1
        // Predicated region
        $region13: #{tpu_custom_call.1} parent=11 // pred_check
          %p391 = pneg %p159
        $region14: #{tpu_custom_call.1} parent=11 // pred_check_branch
          %393 = sbr.rel (%p391) target = $region16
        $region15: #{tpu_custom_call.1} parent=11 // pred_region
          _
        $region16: #{tpu_custom_call.1} parent=11 // pred_fallthru
          _
        // Predicated region
        $region17: #{tpu_custom_call.1} parent=11 // pred_check
          %p394 = pneg %p180
        $region18: #{tpu_custom_call.1} parent=11 // pred_check_branch
          %396 = sbr.rel (%p394) target = $region20
        $region19: #{tpu_custom_call.1} parent=11 // pred_region
          _
        $region20: #{tpu_custom_call.1} parent=11 // pred_fallthru
          _
        // Predicated region
        $region21: #{tpu_custom_call.1} parent=11 // pred_check
          %p397 = pneg %p201
        $region22: #{tpu_custom_call.1} parent=11 // pred_check_branch
          %399 = sbr.rel (%p397) target = $region24
        $region23: #{tpu_custom_call.1} parent=11 // pred_region
          %401 = vsyncadd [#allocation9], 0
          %s402 = sshll.u32 %s5, 4
          %s403 = int_to_ptr.hbm [resolvable:$true] %s402
          %s404 = sshll.u32 [#allocation8], 4
          %s405 = int_to_ptr.vmem [resolvable:$true] %s404
          %410 = dma.hbm_to_vmem [thread:$0]  %s403, 256, %s405, [#allocation9], 64, 64, 4
        $region24: #{tpu_custom_call.1} parent=11 // pred_fallthru
          _
        // Predicated region
        $region25: #{tpu_custom_call.1} parent=11 // pred_check
          %p411 = pneg %p222
        $region26: #{tpu_custom_call.1} parent=11 // pred_check_branch
          %413 = sbr.rel (%p411) target = $region28
        $region27: #{tpu_custom_call.1} parent=11 // pred_region
          _
        $region28: #{tpu_custom_call.1} parent=11 // pred_fallthru
          _
        // Predicated region
        $region29: #{tpu_custom_call.1} parent=11 // pred_check
          %p414 = pneg %p243
        $region30: #{tpu_custom_call.1} parent=11 // pred_check_branch
          %416 = sbr.rel (%p414) target = $region32
        $region31: #{tpu_custom_call.1} parent=11 // pred_region
          %418 = vsyncadd [#allocation9], 0
          %s419 = sshll.u32 %s7, 4
          %s420 = int_to_ptr.hbm [resolvable:$true] %s419
          %s421 = sshll.u32 [#allocation10], 4
          %s422 = int_to_ptr.vmem [resolvable:$true] %s421
          %427 = dma.hbm_to_vmem [thread:$0]  %s420, 256, %s422, [#allocation9], 64, 64, 4
        $region32: #{tpu_custom_call.1} parent=11 // pred_fallthru
          _
        // Predicated region
        $region33: #{tpu_custom_call.1} parent=11 // pred_check
          %p428 = pneg %p264
        $region34: #{tpu_custom_call.1} parent=11 // pred_check_branch
          %430 = sbr.rel (%p428) target = $region36
        $region35: #{tpu_custom_call.1} parent=11 // pred_region
          _
        $region36: #{tpu_custom_call.1} parent=11 // pred_fallthru
          _
        // Predicated region
        $region37: #{tpu_custom_call.1} parent=11 // pred_check
          %p431 = pneg %p285
        $region38: #{tpu_custom_call.1} parent=11 // pred_check_branch
          %433 = sbr.rel (%p431) target = $region40
        $region39: #{tpu_custom_call.1} parent=11 // pred_region
          _
        $region40: #{tpu_custom_call.1} parent=11 // pred_fallthru
          _
        // Predicated region
        $region41: #{tpu_custom_call.1} parent=11 // pred_check
          %p434 = pneg %p306
        $region42: #{tpu_custom_call.1} parent=11 // pred_check_branch
          %436 = sbr.rel (%p434) target = $region44
        $region43: #{tpu_custom_call.1} parent=11 // pred_region
          _
        $region44: #{tpu_custom_call.1} parent=11 // pred_fallthru
          _
        // Predicated region
        $region45: #{tpu_custom_call.1} parent=11 // pred_check
          %p437 = pneg %p327
        $region46: #{tpu_custom_call.1} parent=11 // pred_check_branch
          %439 = sbr.rel (%p437) target = $region48
        $region47: #{tpu_custom_call.1} parent=11 // pred_region
          %441 = vsyncadd [#allocation12], 0
          %s442 = sshll.u32 %s11, 4
          %s443 = int_to_ptr.hbm [resolvable:$true] %s442
          %s444 = sshll.u32 [#allocation11], 4
          %s445 = int_to_ptr.vmem [resolvable:$true] %s444
          %450 = dma.hbm_to_vmem [thread:$0]  %s443, 256, %s445, [#allocation12], 64, 64, 4
        $region48: #{tpu_custom_call.1} parent=11 // pred_fallthru
          _
        // Predicated region
        $region49: #{tpu_custom_call.1} parent=11 // pred_check
          %p451 = pneg %p348
        $region50: #{tpu_custom_call.1} parent=11 // pred_check_branch
          %453 = sbr.rel (%p451) target = $region52
        $region51: #{tpu_custom_call.1} parent=11 // pred_region
          _
        $region52: #{tpu_custom_call.1} parent=11 // pred_fallthru
          _
      $region12: #{tpu_custom_call.1} parent=5 // pred_fallthru
        _
      %p454 = scmp.lt.s32.totalorder %s30, 4
      // Predicated region
      $region53: #{tpu_custom_call.1} parent=5 // pred_check
        %p455 = pneg %p454
      $region54: #{tpu_custom_call.1} parent=5 // pred_check_branch
        %457 = sbr.rel (%p455) target = $region56
      $region55: #{tpu_custom_call.1} parent=5 // pred_region
        // Predicated region
        $region57: #{tpu_custom_call.1} parent=55 // pred_check
          %p458 = pneg %p64
        $region58: #{tpu_custom_call.1} parent=55 // pred_check_branch
          %460 = sbr.rel (%p458) target = $region60
        $region59: #{tpu_custom_call.1} parent=55 // pred_region
          %s461 = sand.u32 %s54, 1
          %s462 = scalar_lea.sflag [#allocation3], %s461
          %s463 = sand.u32 %s54, 1
          %s464 = smul.addr %s463, 8
          %s465 = scalar_lea.vmem [#allocation2], %s464
          %467 = vsyncadd %s462, 0
          %s468 = smul.addr %s37, 2
          %s469 = sadd.s32 %s38, %s468
          %s470 = smul.addr %s469, 8
          %s471 = scalar_lea.hbm %s0, %s470
          %s473 = sshll.u32 %s471, 4
          %s474 = int_to_ptr.hbm [resolvable:$true] %s473
          %s475 = sshll.u32 %s465, 4
          %s476 = int_to_ptr.vmem [resolvable:$true] %s475
          %478 = dma.hbm_to_vmem [thread:$0]  %s474, 128, %s476, %s462
        $region60: #{tpu_custom_call.1} parent=55 // pred_fallthru
          _
        // Predicated region
        $region61: #{tpu_custom_call.1} parent=55 // pred_check
          %p479 = pneg %p98
        $region62: #{tpu_custom_call.1} parent=55 // pred_check_branch
          %481 = sbr.rel (%p479) target = $region64
        $region63: #{tpu_custom_call.1} parent=55 // pred_region
          %s482 = sand.u32 %s30, 1
          %s483 = scalar_lea.sflag [#allocation6], %s482
          %s484 = sand.u32 %s88, 1
          %s485 = smul.addr %s484, 8
          %s486 = scalar_lea.vmem [#allocation5], %s485
          %s487 = ssub.s32 %s38, 1
          %p488 = scmp.gt.s32.totalorder %s487, 0
          %s489 = scalar_select %p488, %s487, 0
          %491 = vsyncadd %s483, 0
          %s492 = smul.addr %s37, 2
          %s493 = sadd.s32 %s489, %s492
          %s494 = smul.addr %s493, 8
          %s495 = scalar_lea.hbm %s1, %s494
          %s497 = sshll.u32 %s495, 4
          %s498 = int_to_ptr.hbm [resolvable:$true] %s497
          %s499 = sshll.u32 %s486, 4
          %s500 = int_to_ptr.vmem [resolvable:$true] %s499
          %502 = dma.hbm_to_vmem [thread:$0]  %s498, 128, %s500, %s483
        $region64: #{tpu_custom_call.1} parent=55 // pred_fallthru
          _
        // Predicated region
        $region65: #{tpu_custom_call.1} parent=55 // pred_check
          %p503 = pneg %p132
        $region66: #{tpu_custom_call.1} parent=55 // pred_check_branch
          %505 = sbr.rel (%p503) target = $region68
        $region67: #{tpu_custom_call.1} parent=55 // pred_region
          %s506 = sand.u32 %s30, 1
          %s507 = scalar_lea.sflag [#allocation6], %s506
          %s508 = sand.u32 %s122, 1
          %s509 = smul.addr %s508, 8
          %s510 = scalar_lea.vmem [#allocation7], %s509
          %s511 = sadd.s32 %s38, 1
          %p512 = scmp.lt.s32.totalorder %s511, 1
          %s513 = scalar_select %p512, %s511, 1
          %515 = vsyncadd %s507, 0
          %s516 = smul.addr %s37, 2
          %s517 = sadd.s32 %s513, %s516
          %s518 = smul.addr %s517, 8
          %s519 = scalar_lea.hbm %s2, %s518
          %s521 = sshll.u32 %s519, 4
          %s522 = int_to_ptr.hbm [resolvable:$true] %s521
          %s523 = sshll.u32 %s510, 4
          %s524 = int_to_ptr.vmem [resolvable:$true] %s523
          %526 = dma.hbm_to_vmem [thread:$0]  %s522, 128, %s524, %s507
        $region68: #{tpu_custom_call.1} parent=55 // pred_fallthru
          _
      $region56: #{tpu_custom_call.1} parent=5 // pred_fallthru
        _
      %p527 = scmp.le.s32.totalorder 1, %s30
      %p528 = scmp.lt.s32.totalorder %s30, 5
      %p529 = pnand %p527, %p528
      %p530 = pneg %p529
      // Predicated region
      $region69: #{tpu_custom_call.1} parent=5 // pred_check
        _
      $region70: #{tpu_custom_call.1} parent=5 // pred_check_branch
        %532 = sbr.rel (%p529) target = $region72
      $region71: #{tpu_custom_call.1} parent=5 // pred_region
        %s533 = ssub.s32 %s30, 1
        %s534 = sand.u32 %s57, 1
        %s535 = scalar_lea.sflag [#allocation3], %s534
        %s536 = sand.u32 %s57, 1
        %s537 = smul.addr %s536, 8
        %s538 = scalar_lea.vmem [#allocation2], %s537
        // Predicated region
        $region73: #{tpu_custom_call.1} parent=71 // pred_check
          %p539 = pneg %p70
        $region74: #{tpu_custom_call.1} parent=71 // pred_check_branch
          %541 = sbr.rel (%p539) target = $region76
        $region75: #{tpu_custom_call.1} parent=71 // pred_region
          %543 = dma.done %s535, 128
        $region76: #{tpu_custom_call.1} parent=71 // pred_fallthru
          _
        %s544 = sand.u32 %s35, 1
        %s545 = scalar_lea.sflag [#allocation6], %s544
        %s546 = sand.u32 %s91, 1
        %s547 = smul.addr %s546, 8
        %s548 = scalar_lea.vmem [#allocation5], %s547
        // Predicated region
        $region77: #{tpu_custom_call.1} parent=71 // pred_check
          %p549 = pneg %p104
        $region78: #{tpu_custom_call.1} parent=71 // pred_check_branch
          %551 = sbr.rel (%p549) target = $region80
        $region79: #{tpu_custom_call.1} parent=71 // pred_region
          %553 = dma.done %s545, 128
        $region80: #{tpu_custom_call.1} parent=71 // pred_fallthru
          _
        %s554 = sand.u32 %s35, 1
        %s555 = scalar_lea.sflag [#allocation6], %s554
        %s556 = sand.u32 %s125, 1
        %s557 = smul.addr %s556, 8
        %s558 = scalar_lea.vmem [#allocation7], %s557
        // Predicated region
        $region81: #{tpu_custom_call.1} parent=71 // pred_check
          %p559 = pneg %p138
        $region82: #{tpu_custom_call.1} parent=71 // pred_check_branch
          %561 = sbr.rel (%p559) target = $region84
        $region83: #{tpu_custom_call.1} parent=71 // pred_region
          %563 = dma.done %s555, 128
        $region84: #{tpu_custom_call.1} parent=71 // pred_fallthru
          _
        // Predicated region
        $region85: #{tpu_custom_call.1} parent=71 // pred_check
          %p564 = pneg %p201
        $region86: #{tpu_custom_call.1} parent=71 // pred_check_branch
          %566 = sbr.rel (%p564) target = $region88
        $region87: #{tpu_custom_call.1} parent=71 // pred_region
          %568 = dma.done [#allocation9], 256
        $region88: #{tpu_custom_call.1} parent=71 // pred_fallthru
          _
        // Predicated region
        $region89: #{tpu_custom_call.1} parent=71 // pred_check
          %p569 = pneg %p243
        $region90: #{tpu_custom_call.1} parent=71 // pred_check_branch
          %571 = sbr.rel (%p569) target = $region92
        $region91: #{tpu_custom_call.1} parent=71 // pred_region
          %573 = dma.done [#allocation9], 256
        $region92: #{tpu_custom_call.1} parent=71 // pred_fallthru
          _
        // Predicated region
        $region93: #{tpu_custom_call.1} parent=71 // pred_check
          %p574 = pneg %p327
        $region94: #{tpu_custom_call.1} parent=71 // pred_check_branch
          %576 = sbr.rel (%p574) target = $region96
        $region95: #{tpu_custom_call.1} parent=71 // pred_region
          %578 = dma.done [#allocation12], 256
        $region96: #{tpu_custom_call.1} parent=71 // pred_fallthru
          _
        %s579 = sand.u32 %s57, 1
        %s580 = scalar_lea.sflag [#allocation3], %s579
        %s581 = sand.u32 %s57, 1
        %s582 = smul.addr %s581, 8
        %s583 = scalar_lea.vmem [#allocation2], %s582
        %p584 = pneg %p70
        %p585 = pneg %p67
        %s586 = sand.u32 %s35, 1
        %s587 = scalar_lea.sflag [#allocation6], %s586
        %s588 = sand.u32 %s91, 1
        %s589 = smul.addr %s588, 8
        %s590 = scalar_lea.vmem [#allocation5], %s589
        %p591 = pneg %p104
        %p592 = pneg %p101
        %s593 = sand.u32 %s35, 1
        %s594 = scalar_lea.sflag [#allocation6], %s593
        %s595 = sand.u32 %s125, 1
        %s596 = smul.addr %s595, 8
        %s597 = scalar_lea.vmem [#allocation7], %s596
        %p598 = pneg %p138
        %p599 = pneg %p135
        %p600 = pneg %p159
        %p601 = pneg %p156
        %p602 = pneg %p180
        %p603 = pneg %p177
        %p604 = pneg %p201
        %p605 = pneg %p198
        %p606 = pneg %p222
        %p607 = pneg %p219
        %p608 = pneg %p243
        %p609 = pneg %p240
        %p610 = pneg %p264
        %p611 = pneg %p261
        %p612 = pneg %p285
        %p613 = pneg %p282
        %p614 = pneg %p306
        %p615 = pneg %p303
        %p616 = pneg %p327
        %p617 = pneg %p324
        %p618 = pneg %p348
        %p619 = pneg %p345
        %p620 = pneg %p376
        %p621 = pneg %p373
        %s622 = sand.u32 %s363, 1
        %s623 = scalar_lea.sflag [#allocation4], %s622
        %s624 = sand.u32 %s363, 1
        %s625 = smul.addr %s624, 8
        %s626 = scalar_lea.vmem [#allocation13], %s625
        %s627 = ssub.s32 %s40, 1
        %p628 = scmp.gt.s32.totalorder %s627, 0
        %s629 = scalar_select %p628, %s627, 0
        %s630 = sadd.s32 %s40, 1
        %p631 = scmp.lt.s32.totalorder %s630, 1
        %s632 = scalar_select %p631, %s630, 1
        %v634 = vld [vmem:[%s548] sm:$0xff]
        %v635 = vld [vmem:[%s538] sm:$0xff]
        %v636 = vld [vmem:[%s558] sm:$0xff]
        %v637 = vld [vmem:[%s3] sm:$0x1]
        %v638 = vld [vmem:[%s4] sm:$0x1]
        %vm639 = vcmask 261120
        %v640 = vsel %vm639, %v634, 0.0
        %641 = vadd.xlane.f32.xlu0 %v640
        %v642 = vpop.xlane.xlu0 %641
        %v643 = vsel %vm639, %v635, 0.0
        %644 = vadd.xlane.f32.xlu0 %v643
        %v645 = vpop.xlane.xlu0 %644
        %v646 = vsel %vm639, %v636, 0.0
        %647 = vadd.xlane.f32.xlu0 %v646
        %v648 = vpop.xlane.xlu0 %647
        %v649 = vrcp.pop 32.0
        %v650 = vmul.f32 32.0, %v649
        %v651 = vsub.f32 1.0, %v650
        %v652 = vmul.f32 %v649, %v651
        %v653 = vadd.f32 %v649, %v652
        %vm654 = vweird.f32 %v649
        %v655 = vsel %vm654, %v649, %v653
        %v656 = vmul.f32 %v642, %v655
        %v657 = vmul.f32 %v645, %v655
        %v658 = vmul.f32 %v648, %v655
        %v659 = vsub.f32 %v634, %v656
        %v660 = vsub.f32 %v635, %v657
        %v661 = vsub.f32 %v636, %v658
        %v662 = vmul.f32 %v659, %v659
        %v663 = vmul.f32 %v660, %v660
        %v664 = vmul.f32 %v661, %v661
        %v665 = vsel %vm639, %v662, 0.0
        %666 = vadd.xlane.f32.xlu0 %v665
        %v667 = vpop.xlane.xlu0 %666
        %v668 = vsel %vm639, %v663, 0.0
        %669 = vadd.xlane.f32.xlu0 %v668
        %v670 = vpop.xlane.xlu0 %669
        %v671 = vsel %vm639, %v664, 0.0
        %672 = vadd.xlane.f32.xlu0 %v671
        %v673 = vpop.xlane.xlu0 %672
        %v674 = vmul.f32 %v667, %v655
        %v675 = vmul.f32 %v670, %v655
        %v676 = vmul.f32 %v673, %v655
        %v677 = vadd.f32 %v674, 1e-05
        %v678 = vadd.f32 %v675, 1e-05
        %v679 = vadd.f32 %v676, 1e-05
        %v680 = vrsqrt.pop %v677
        %v681 = vmul.f32 %v680, %v677
        %v682 = vmul.f32 %v681, %v680
        %v683 = vmul.f32 0.5, %v682
        %v684 = vsub.f32 1.5, %v683
        %v685 = vmul.f32 %v680, %v684
        %vm686 = vweird.f32 %v677
        %vm687 = vweird.f32 %v680
        %vm688 = vmor %vm686, %vm687
        %v689 = vsel %vm688, %v680, %v685
        %v690 = vrsqrt.pop %v678
        %v691 = vmul.f32 %v690, %v678
        %v692 = vmul.f32 %v691, %v690
        %v693 = vmul.f32 0.5, %v692
        %v694 = vsub.f32 1.5, %v693
        %v695 = vmul.f32 %v690, %v694
        %vm696 = vweird.f32 %v678
        %vm697 = vweird.f32 %v690
        %vm698 = vmor %vm696, %vm697
        %v699 = vsel %vm698, %v690, %v695
        %v700 = vrsqrt.pop %v679
        %v701 = vmul.f32 %v700, %v679
        %v702 = vmul.f32 %v701, %v700
        %v703 = vmul.f32 0.5, %v702
        %v704 = vsub.f32 1.5, %v703
        %v705 = vmul.f32 %v700, %v704
        %vm706 = vweird.f32 %v679
        %vm707 = vweird.f32 %v700
        %vm708 = vmor %vm706, %vm707
        %v709 = vsel %vm708, %v700, %v705
        %v710 = vmul.f32 %v659, %v689
        %v711 = vmul.f32 %v660, %v699
        %v712 = vmul.f32 %v661, %v709
        %v714 = vperm.slane %v637, 0
        %v716 = vmul.f32 %v710, %v714
        %v717 = vmul.f32 %v711, %v714
        %v718 = vmul.f32 %v712, %v714
        %v720 = vperm.slane %v638, 0
        %v722 = vadd.f32 %v716, %v720
        %v723 = vadd.f32 %v717, %v720
        %v724 = vadd.f32 %v718, %v720
        %v725 = vpack.c.bf16 %v723, %v722
        %v726 = vpack.c.bf16 %v724, %v724
        %v727 = vld [vmem:[#allocation8] sm:$0xf]
        %v728 = vld [vmem:[#allocation8 + $0x4] sm:$0xf]
        %v729 = vld [vmem:[#allocation8 + $0x8] sm:$0xf]
        %v730 = vld [vmem:[#allocation8 + $0xc] sm:$0xf]
        %v731 = vld [vmem:[%s6] sm:$0x1]
        %v733 = vperm.slane %v731, 0
        %v739 = vunpack.c.l.b16 %v727
        %v740 = vunpack.c.l.b16 %v728
        %v741 = vunpack.c.l.b16 %v729
        %v742 = vunpack.c.l.b16 %v730
        %v743 = vpack.c.b16 %v740, %v739
        %v744 = vpack.c.b16 %v742, %v741
        %v748 = vsel %vm639, %v725, 0
        %v751 = vsel %vm639, %v726, 0
        %753 = vmatpush.bf16.msra.mxu0 0
        %754 = vmatpush.bf16.msra.mxu0 0
        %755 = vmatpush.bf16.msra.mxu0 0
        %756 = vmatpush.bf16.msra.mxu0 0
        %757 = vmatpush.bf16.msra.mxu0 0
        %758 = vmatpush.bf16.msra.mxu0 0
        %759 = vmatpush.bf16.msra.mxu0 %v744
        %760 = vmatpush.bf16.msra.mxu0 %v743
        %761 = vmatmul.bf16.gmra.mxu0 %v748
        %v762 = vpop.f32.mrf.mxu0
        %v763 = vadd.f32 %v733, %v762
        %v764 = vpop.f32.mrf.mxu0
        %v765 = vadd.f32 %v733, %v764
        %766 = vmatmul.bf16.gmra.mxu0 %v751
        %v767 = vpop.f32.mrf.mxu0
        %v768 = vadd.f32 %v733, %v767
        %v769 = vpop.f32.mrf.mxu0
        %770 = vdwg.mxu0
        %774 = vrot.lane.b32.xlu0 %v763, 120
        %v775 = vpop.permute.xlu0 %774
        %776 = vrot.lane.b32.xlu0 %v765, 120
        %v777 = vpop.permute.xlu0 %776
        %778 = vrot.lane.b32.xlu0 %v768, 120
        %v779 = vpop.permute.xlu0 %778
        %783 = vrot.lane.b32.xlu0 %v763, 112
        %v784 = vpop.permute.xlu0 %783
        %785 = vrot.lane.b32.xlu0 %v765, 112
        %v786 = vpop.permute.xlu0 %785
        %787 = vrot.lane.b32.xlu0 %v768, 112
        %v788 = vpop.permute.xlu0 %787
        %792 = vrot.lane.b32.xlu0 %v763, 104
        %v793 = vpop.permute.xlu0 %792
        %794 = vrot.lane.b32.xlu0 %v765, 104
        %v795 = vpop.permute.xlu0 %794
        %796 = vrot.lane.b32.xlu0 %v768, 104
        %v797 = vpop.permute.xlu0 %796
        %v801 = vrot.slane %v784, 4
        %vm802 = vcmask 1047556
        %v803 = vsel %vm802, %v801, %v763
        %v804 = vrot.slane %v763, 4
        %v805 = vsel %vm802, %v784, %v804
        %v807 = vunpack.c.l.s4 1983009808
        %v808 = vunpack.c.0.s8 %v807
        %v809 = vperm.slane %v803, %v808
        %v811 = vunpack.c.l.s4 1983009808
        %v812 = vunpack.c.0.s8 %v811
        %v813 = vperm.slane %v805, %v812
        %v814 = vrot.slane %v793, 4
        %v815 = vsel %vm802, %v814, %v775
        %v816 = vrot.slane %v775, 4
        %v817 = vsel %vm802, %v793, %v816
        %v819 = vunpack.c.l.s4 1983009808
        %v820 = vunpack.c.0.s8 %v819
        %v821 = vperm.slane %v815, %v820
        %v823 = vunpack.c.l.s4 1983009808
        %v824 = vunpack.c.0.s8 %v823
        %v825 = vperm.slane %v817, %v824
        %v826 = vrot.slane %v821, 4
        %v827 = vsel %vm802, %v826, %v809
        %v828 = vrot.slane %v809, 4
        %v829 = vsel %vm802, %v821, %v828
        %v831 = vunpack.c.l.s4 1934713408
        %v832 = vunpack.c.0.s8 %v831
        %v833 = vperm.slane %v827, %v832
        %v835 = vunpack.c.l.s4 1934713408
        %v836 = vunpack.c.0.s8 %v835
        %v837 = vperm.slane %v829, %v836
        %v838 = vrot.slane %v825, 4
        %v839 = vsel %vm802, %v838, %v813
        %v840 = vrot.slane %v813, 4
        %v841 = vsel %vm802, %v825, %v840
        %v843 = vunpack.c.l.s4 1934713408
        %v844 = vunpack.c.0.s8 %v843
        %v845 = vperm.slane %v839, %v844
        %v847 = vunpack.c.l.s4 1934713408
        %v848 = vunpack.c.0.s8 %v847
        %v849 = vperm.slane %v841, %v848
        %v850 = vrot.slane %v833, 4
        %v851 = vsel %vm802, 0.0, %v850
        %v852 = vrot.slane %v837, 4
        %v853 = vsel %vm802, 0.0, %v852
        %v854 = vrot.slane %v845, 4
        %v855 = vsel %vm802, 0.0, %v854
        %v856 = vrot.slane %v849, 4
        %v857 = vsel %vm802, 0.0, %v856
        %v858 = vrot.slane %v786, 4
        %v859 = vsel %vm802, %v858, %v765
        %v860 = vrot.slane %v765, 4
        %v861 = vsel %vm802, %v786, %v860
        %v863 = vunpack.c.l.s4 1983009808
        %v864 = vunpack.c.0.s8 %v863
        %v865 = vperm.slane %v859, %v864
        %v867 = vunpack.c.l.s4 1983009808
        %v868 = vunpack.c.0.s8 %v867
        %v869 = vperm.slane %v861, %v868
        %v870 = vrot.slane %v795, 4
        %v871 = vsel %vm802, %v870, %v777
        %v872 = vrot.slane %v777, 4
        %v873 = vsel %vm802, %v795, %v872
        %v875 = vunpack.c.l.s4 1983009808
        %v876 = vunpack.c.0.s8 %v875
        %v877 = vperm.slane %v871, %v876
        %v879 = vunpack.c.l.s4 1983009808
        %v880 = vunpack.c.0.s8 %v879
        %v881 = vperm.slane %v873, %v880
        %v882 = vrot.slane %v877, 4
        %v883 = vsel %vm802, %v882, %v865
        %v884 = vrot.slane %v865, 4
        %v885 = vsel %vm802, %v877, %v884
        %v887 = vunpack.c.l.s4 1934713408
        %v888 = vunpack.c.0.s8 %v887
        %v889 = vperm.slane %v883, %v888
        %v891 = vunpack.c.l.s4 1934713408
        %v892 = vunpack.c.0.s8 %v891
        %v893 = vperm.slane %v885, %v892
        %v894 = vrot.slane %v881, 4
        %v895 = vsel %vm802, %v894, %v869
        %v896 = vrot.slane %v869, 4
        %v897 = vsel %vm802, %v881, %v896
        %v899 = vunpack.c.l.s4 1934713408
        %v900 = vunpack.c.0.s8 %v899
        %v901 = vperm.slane %v895, %v900
        %v903 = vunpack.c.l.s4 1934713408
        %v904 = vunpack.c.0.s8 %v903
        %v905 = vperm.slane %v897, %v904
        %v906 = vrot.slane %v889, 4
        %v907 = vsel %vm802, 0.0, %v906
        %v908 = vrot.slane %v893, 4
        %v909 = vsel %vm802, 0.0, %v908
        %v910 = vrot.slane %v901, 4
        %v911 = vsel %vm802, 0.0, %v910
        %v912 = vrot.slane %v905, 4
        %v913 = vsel %vm802, 0.0, %v912
        %v914 = vrot.slane %v788, 4
        %v915 = vsel %vm802, %v914, %v768
        %v916 = vrot.slane %v768, 4
        %v917 = vsel %vm802, %v788, %v916
        %v919 = vunpack.c.l.s4 1983009808
        %v920 = vunpack.c.0.s8 %v919
        %v921 = vperm.slane %v915, %v920
        %v923 = vunpack.c.l.s4 1983009808
        %v924 = vunpack.c.0.s8 %v923
        %v925 = vperm.slane %v917, %v924
        %v926 = vrot.slane %v797, 4
        %v927 = vsel %vm802, %v926, %v779
        %v928 = vrot.slane %v779, 4
        %v929 = vsel %vm802, %v797, %v928
        %v931 = vunpack.c.l.s4 1983009808
        %v932 = vunpack.c.0.s8 %v931
        %v933 = vperm.slane %v927, %v932
        %v935 = vunpack.c.l.s4 1983009808
        %v936 = vunpack.c.0.s8 %v935
        %v937 = vperm.slane %v929, %v936
        %v938 = vrot.slane %v933, 4
        %v939 = vsel %vm802, %v938, %v921
        %v940 = vrot.slane %v921, 4
        %v941 = vsel %vm802, %v933, %v940
        %v943 = vunpack.c.l.s4 1934713408
        %v944 = vunpack.c.0.s8 %v943
        %v945 = vperm.slane %v939, %v944
        %v947 = vunpack.c.l.s4 1934713408
        %v948 = vunpack.c.0.s8 %v947
        %v949 = vperm.slane %v941, %v948
        %v950 = vrot.slane %v937, 4
        %v951 = vsel %vm802, %v950, %v925
        %v952 = vrot.slane %v925, 4
        %v953 = vsel %vm802, %v937, %v952
        %v955 = vunpack.c.l.s4 1934713408
        %v956 = vunpack.c.0.s8 %v955
        %v957 = vperm.slane %v951, %v956
        %v959 = vunpack.c.l.s4 1934713408
        %v960 = vunpack.c.0.s8 %v959
        %v961 = vperm.slane %v953, %v960
        %v962 = vrot.slane %v945, 4
        %v963 = vsel %vm802, 0.0, %v962
        %v964 = vrot.slane %v949, 4
        %v965 = vsel %vm802, 0.0, %v964
        %v966 = vrot.slane %v957, 4
        %v967 = vsel %vm802, 0.0, %v966
        %v968 = vrot.slane %v961, 4
        %v969 = vsel %vm802, 0.0, %v968
        %v970 = vsel %vm802, %v852, %v833
        %v972 = vunpack.c.l.s4 1983009808
        %v973 = vunpack.c.0.s8 %v972
        %v974 = vperm.slane %v970, %v973
        %v975 = vrot.slane %v853, 4
        %v976 = vsel %vm802, %v975, %v851
        %v978 = vunpack.c.l.s4 1983009808
        %v979 = vunpack.c.0.s8 %v978
        %v980 = vperm.slane %v976, %v979
        %v981 = vsel %vm802, %v856, %v845
        %v983 = vunpack.c.l.s4 1983009808
        %v984 = vunpack.c.0.s8 %v983
        %v985 = vperm.slane %v981, %v984
        %v986 = vrot.slane %v857, 4
        %v987 = vsel %vm802, %v986, %v855
        %v989 = vunpack.c.l.s4 1983009808
        %v990 = vunpack.c.0.s8 %v989
        %v991 = vperm.slane %v987, %v990
        %v992 = vrot.slane %v980, 4
        %v993 = vsel %vm802, %v992, %v974
        %v994 = vrot.slane %v974, 4
        %v995 = vsel %vm802, %v980, %v994
        %v997 = vunpack.c.l.s4 1934713408
        %v998 = vunpack.c.0.s8 %v997
        %v999 = vperm.slane %v993, %v998
        %v1001 = vunpack.c.l.s4 1934713408
        %v1002 = vunpack.c.0.s8 %v1001
        %v1003 = vperm.slane %v995, %v1002
        %v1004 = vrot.slane %v991, 4
        %v1005 = vsel %vm802, %v1004, %v985
        %v1006 = vrot.slane %v985, 4
        %v1007 = vsel %vm802, %v991, %v1006
        %v1009 = vunpack.c.l.s4 1934713408
        %v1010 = vunpack.c.0.s8 %v1009
        %v1011 = vperm.slane %v1005, %v1010
        %v1013 = vunpack.c.l.s4 1934713408
        %v1014 = vunpack.c.0.s8 %v1013
        %v1015 = vperm.slane %v1007, %v1014
        %v1016 = vrot.slane %v1011, 4
        %v1017 = vsel %vm802, %v1016, %v999
        %v1018 = vrot.slane %v999, 4
        %v1019 = vsel %vm802, %v1011, %v1018
        %v1020 = vrot.slane %v1015, 4
        %v1021 = vsel %vm802, %v1020, %v1003
        %v1022 = vrot.slane %v1003, 4
        %v1023 = vsel %vm802, %v1015, %v1022
        %v1024 = vsel %vm802, %v908, %v889
        %v1026 = vunpack.c.l.s4 1983009808
        %v1027 = vunpack.c.0.s8 %v1026
        %v1028 = vperm.slane %v1024, %v1027
        %v1029 = vrot.slane %v909, 4
        %v1030 = vsel %vm802, %v1029, %v907
        %v1032 = vunpack.c.l.s4 1983009808
        %v1033 = vunpack.c.0.s8 %v1032
        %v1034 = vperm.slane %v1030, %v1033
        %v1035 = vsel %vm802, %v912, %v901
        %v1037 = vunpack.c.l.s4 1983009808
        %v1038 = vunpack.c.0.s8 %v1037
        %v1039 = vperm.slane %v1035, %v1038
        %v1040 = vrot.slane %v913, 4
        %v1041 = vsel %vm802, %v1040, %v911
        %v1043 = vunpack.c.l.s4 1983009808
        %v1044 = vunpack.c.0.s8 %v1043
        %v1045 = vperm.slane %v1041, %v1044
        %v1046 = vrot.slane %v1034, 4
        %v1047 = vsel %vm802, %v1046, %v1028
        %v1048 = vrot.slane %v1028, 4
        %v1049 = vsel %vm802, %v1034, %v1048
        %v1051 = vunpack.c.l.s4 1934713408
        %v1052 = vunpack.c.0.s8 %v1051
        %v1053 = vperm.slane %v1047, %v1052
        %v1055 = vunpack.c.l.s4 1934713408
        %v1056 = vunpack.c.0.s8 %v1055
        %v1057 = vperm.slane %v1049, %v1056
        %v1058 = vrot.slane %v1045, 4
        %v1059 = vsel %vm802, %v1058, %v1039
        %v1060 = vrot.slane %v1039, 4
        %v1061 = vsel %vm802, %v1045, %v1060
        %v1063 = vunpack.c.l.s4 1934713408
        %v1064 = vunpack.c.0.s8 %v1063
        %v1065 = vperm.slane %v1059, %v1064
        %v1067 = vunpack.c.l.s4 1934713408
        %v1068 = vunpack.c.0.s8 %v1067
        %v1069 = vperm.slane %v1061, %v1068
        %v1070 = vrot.slane %v1065, 4
        %v1071 = vsel %vm802, %v1070, %v1053
        %v1072 = vrot.slane %v1053, 4
        %v1073 = vsel %vm802, %v1065, %v1072
        %v1074 = vrot.slane %v1069, 4
        %v1075 = vsel %vm802, %v1074, %v1057
        %v1076 = vrot.slane %v1057, 4
        %v1077 = vsel %vm802, %v1069, %v1076
        %v1078 = vsel %vm802, %v964, %v945
        %v1080 = vunpack.c.l.s4 1983009808
        %v1081 = vunpack.c.0.s8 %v1080
        %v1082 = vperm.slane %v1078, %v1081
        %v1083 = vrot.slane %v965, 4
        %v1084 = vsel %vm802, %v1083, %v963
        %v1086 = vunpack.c.l.s4 1983009808
        %v1087 = vunpack.c.0.s8 %v1086
        %v1088 = vperm.slane %v1084, %v1087
        %v1089 = vsel %vm802, %v968, %v957
        %v1091 = vunpack.c.l.s4 1983009808
        %v1092 = vunpack.c.0.s8 %v1091
        %v1093 = vperm.slane %v1089, %v1092
        %v1094 = vrot.slane %v969, 4
        %v1095 = vsel %vm802, %v1094, %v967
        %v1097 = vunpack.c.l.s4 1983009808
        %v1098 = vunpack.c.0.s8 %v1097
        %v1099 = vperm.slane %v1095, %v1098
        %v1100 = vrot.slane %v1088, 4
        %v1101 = vsel %vm802, %v1100, %v1082
        %v1102 = vrot.slane %v1082, 4
        %v1103 = vsel %vm802, %v1088, %v1102
        %v1105 = vunpack.c.l.s4 1934713408
        %v1106 = vunpack.c.0.s8 %v1105
        %v1107 = vperm.slane %v1101, %v1106
        %v1109 = vunpack.c.l.s4 1934713408
        %v1110 = vunpack.c.0.s8 %v1109
        %v1111 = vperm.slane %v1103, %v1110
        %v1112 = vrot.slane %v1099, 4
        %v1113 = vsel %vm802, %v1112, %v1093
        %v1114 = vrot.slane %v1093, 4
        %v1115 = vsel %vm802, %v1099, %v1114
        %v1117 = vunpack.c.l.s4 1934713408
        %v1118 = vunpack.c.0.s8 %v1117
        %v1119 = vperm.slane %v1113, %v1118
        %v1121 = vunpack.c.l.s4 1934713408
        %v1122 = vunpack.c.0.s8 %v1121
        %v1123 = vperm.slane %v1115, %v1122
        %v1124 = vrot.slane %v1119, 4
        %v1125 = vsel %vm802, %v1124, %v1107
        %v1126 = vrot.slane %v1107, 4
        %v1127 = vsel %vm802, %v1119, %v1126
        %v1128 = vrot.slane %v1123, 4
        %v1129 = vsel %vm802, %v1128, %v1111
        %v1130 = vrot.slane %v1111, 4
        %v1131 = vsel %vm802, %v1123, %v1130
        %v1132 = vpack.c.bf16 %v1017, %v1017
        %v1133 = vpack.c.bf16 %v1019, %v1019
        %v1134 = vpack.c.bf16 %v1021, %v1021
        %v1135 = vpack.c.bf16 %v1023, %v1023
        %v1136 = vpack.c.bf16 %v1071, %v1071
        %v1137 = vpack.c.bf16 %v1073, %v1073
        %v1138 = vpack.c.bf16 %v1075, %v1075
        %v1139 = vpack.c.bf16 %v1077, %v1077
        %v1140 = vpack.c.bf16 %v1125, %v1125
        %v1141 = vpack.c.bf16 %v1127, %v1127
        %v1142 = vpack.c.bf16 %v1129, %v1129
        %v1143 = vpack.c.bf16 %v1131, %v1131
        %1144 = vrot.lane.b32.xlu0 %v763, 96
        %v1145 = vpop.permute.xlu0 %1144
        %1146 = vrot.lane.b32.xlu0 %v765, 96
        %v1147 = vpop.permute.xlu0 %1146
        %1148 = vrot.lane.b32.xlu0 %v768, 96
        %v1149 = vpop.permute.xlu0 %1148
        %1150 = vrot.lane.b32.xlu0 %v775, 96
        %v1151 = vpop.permute.xlu0 %1150
        %1152 = vrot.lane.b32.xlu0 %v777, 96
        %v1153 = vpop.permute.xlu0 %1152
        %1154 = vrot.lane.b32.xlu0 %v779, 96
        %v1155 = vpop.permute.xlu0 %1154
        %1156 = vrot.lane.b32.xlu0 %v784, 96
        %v1157 = vpop.permute.xlu0 %1156
        %1158 = vrot.lane.b32.xlu0 %v786, 96
        %v1159 = vpop.permute.xlu0 %1158
        %1160 = vrot.lane.b32.xlu0 %v788, 96
        %v1161 = vpop.permute.xlu0 %1160
        %1162 = vrot.lane.b32.xlu0 %v793, 96
        %v1163 = vpop.permute.xlu0 %1162
        %1164 = vrot.lane.b32.xlu0 %v795, 96
        %v1165 = vpop.permute.xlu0 %1164
        %1166 = vrot.lane.b32.xlu0 %v797, 96
        %v1167 = vpop.permute.xlu0 %1166
        %v1180 = vrot.slane %v1157, 4
        %v1181 = vsel %vm802, %v1180, %v1145
        %v1182 = vrot.slane %v1145, 4
        %v1183 = vsel %vm802, %v1157, %v1182
        %v1185 = vunpack.c.l.s4 1983009808
        %v1186 = vunpack.c.0.s8 %v1185
        %v1187 = vperm.slane %v1181, %v1186
        %v1189 = vunpack.c.l.s4 1983009808
        %v1190 = vunpack.c.0.s8 %v1189
        %v1191 = vperm.slane %v1183, %v1190
        %v1192 = vrot.slane %v1163, 4
        %v1193 = vsel %vm802, %v1192, %v1151
        %v1194 = vrot.slane %v1151, 4
        %v1195 = vsel %vm802, %v1163, %v1194
        %v1197 = vunpack.c.l.s4 1983009808
        %v1198 = vunpack.c.0.s8 %v1197
        %v1199 = vperm.slane %v1193, %v1198
        %v1201 = vunpack.c.l.s4 1983009808
        %v1202 = vunpack.c.0.s8 %v1201
        %v1203 = vperm.slane %v1195, %v1202
        %v1204 = vrot.slane %v1199, 4
        %v1205 = vsel %vm802, %v1204, %v1187
        %v1206 = vrot.slane %v1187, 4
        %v1207 = vsel %vm802, %v1199, %v1206
        %v1209 = vunpack.c.l.s4 1934713408
        %v1210 = vunpack.c.0.s8 %v1209
        %v1211 = vperm.slane %v1205, %v1210
        %v1213 = vunpack.c.l.s4 1934713408
        %v1214 = vunpack.c.0.s8 %v1213
        %v1215 = vperm.slane %v1207, %v1214
        %v1216 = vrot.slane %v1203, 4
        %v1217 = vsel %vm802, %v1216, %v1191
        %v1218 = vrot.slane %v1191, 4
        %v1219 = vsel %vm802, %v1203, %v1218
        %v1221 = vunpack.c.l.s4 1934713408
        %v1222 = vunpack.c.0.s8 %v1221
        %v1223 = vperm.slane %v1217, %v1222
        %v1225 = vunpack.c.l.s4 1934713408
        %v1226 = vunpack.c.0.s8 %v1225
        %v1227 = vperm.slane %v1219, %v1226
        %v1228 = vrot.slane %v1211, 4
        %v1229 = vsel %vm802, 0.0, %v1228
        %v1230 = vrot.slane %v1215, 4
        %v1231 = vsel %vm802, 0.0, %v1230
        %v1232 = vrot.slane %v1223, 4
        %v1233 = vsel %vm802, 0.0, %v1232
        %v1234 = vrot.slane %v1227, 4
        %v1235 = vsel %vm802, 0.0, %v1234
        %v1236 = vrot.slane %v1159, 4
        %v1237 = vsel %vm802, %v1236, %v1147
        %v1238 = vrot.slane %v1147, 4
        %v1239 = vsel %vm802, %v1159, %v1238
        %v1241 = vunpack.c.l.s4 1983009808
        %v1242 = vunpack.c.0.s8 %v1241
        %v1243 = vperm.slane %v1237, %v1242
        %v1245 = vunpack.c.l.s4 1983009808
        %v1246 = vunpack.c.0.s8 %v1245
        %v1247 = vperm.slane %v1239, %v1246
        %v1248 = vrot.slane %v1165, 4
        %v1249 = vsel %vm802, %v1248, %v1153
        %v1250 = vrot.slane %v1153, 4
        %v1251 = vsel %vm802, %v1165, %v1250
        %v1253 = vunpack.c.l.s4 1983009808
        %v1254 = vunpack.c.0.s8 %v1253
        %v1255 = vperm.slane %v1249, %v1254
        %v1257 = vunpack.c.l.s4 1983009808
        %v1258 = vunpack.c.0.s8 %v1257
        %v1259 = vperm.slane %v1251, %v1258
        %v1260 = vrot.slane %v1255, 4
        %v1261 = vsel %vm802, %v1260, %v1243
        %v1262 = vrot.slane %v1243, 4
        %v1263 = vsel %vm802, %v1255, %v1262
        %v1265 = vunpack.c.l.s4 1934713408
        %v1266 = vunpack.c.0.s8 %v1265
        %v1267 = vperm.slane %v1261, %v1266
        %v1269 = vunpack.c.l.s4 1934713408
        %v1270 = vunpack.c.0.s8 %v1269
        %v1271 = vperm.slane %v1263, %v1270
        %v1272 = vrot.slane %v1259, 4
        %v1273 = vsel %vm802, %v1272, %v1247
        %v1274 = vrot.slane %v1247, 4
        %v1275 = vsel %vm802, %v1259, %v1274
        %v1277 = vunpack.c.l.s4 1934713408
        %v1278 = vunpack.c.0.s8 %v1277
        %v1279 = vperm.slane %v1273, %v1278
        %v1281 = vunpack.c.l.s4 1934713408
        %v1282 = vunpack.c.0.s8 %v1281
        %v1283 = vperm.slane %v1275, %v1282
        %v1284 = vrot.slane %v1267, 4
        %v1285 = vsel %vm802, 0.0, %v1284
        %v1286 = vrot.slane %v1271, 4
        %v1287 = vsel %vm802, 0.0, %v1286
        %v1288 = vrot.slane %v1279, 4
        %v1289 = vsel %vm802, 0.0, %v1288
        %v1290 = vrot.slane %v1283, 4
        %v1291 = vsel %vm802, 0.0, %v1290
        %v1292 = vrot.slane %v1161, 4
        %v1293 = vsel %vm802, %v1292, %v1149
        %v1294 = vrot.slane %v1149, 4
        %v1295 = vsel %vm802, %v1161, %v1294
        %v1297 = vunpack.c.l.s4 1983009808
        %v1298 = vunpack.c.0.s8 %v1297
        %v1299 = vperm.slane %v1293, %v1298
        %v1301 = vunpack.c.l.s4 1983009808
        %v1302 = vunpack.c.0.s8 %v1301
        %v1303 = vperm.slane %v1295, %v1302
        %v1304 = vrot.slane %v1167, 4
        %v1305 = vsel %vm802, %v1304, %v1155
        %v1306 = vrot.slane %v1155, 4
        %v1307 = vsel %vm802, %v1167, %v1306
        %v1309 = vunpack.c.l.s4 1983009808
        %v1310 = vunpack.c.0.s8 %v1309
        %v1311 = vperm.slane %v1305, %v1310
        %v1313 = vunpack.c.l.s4 1983009808
        %v1314 = vunpack.c.0.s8 %v1313
        %v1315 = vperm.slane %v1307, %v1314
        %v1316 = vrot.slane %v1311, 4
        %v1317 = vsel %vm802, %v1316, %v1299
        %v1318 = vrot.slane %v1299, 4
        %v1319 = vsel %vm802, %v1311, %v1318
        %v1321 = vunpack.c.l.s4 1934713408
        %v1322 = vunpack.c.0.s8 %v1321
        %v1323 = vperm.slane %v1317, %v1322
        %v1325 = vunpack.c.l.s4 1934713408
        %v1326 = vunpack.c.0.s8 %v1325
        %v1327 = vperm.slane %v1319, %v1326
        %v1328 = vrot.slane %v1315, 4
        %v1329 = vsel %vm802, %v1328, %v1303
        %v1330 = vrot.slane %v1303, 4
        %v1331 = vsel %vm802, %v1315, %v1330
        %v1333 = vunpack.c.l.s4 1934713408
        %v1334 = vunpack.c.0.s8 %v1333
        %v1335 = vperm.slane %v1329, %v1334
        %v1337 = vunpack.c.l.s4 1934713408
        %v1338 = vunpack.c.0.s8 %v1337
        %v1339 = vperm.slane %v1331, %v1338
        %v1340 = vrot.slane %v1323, 4
        %v1341 = vsel %vm802, 0.0, %v1340
        %v1342 = vrot.slane %v1327, 4
        %v1343 = vsel %vm802, 0.0, %v1342
        %v1344 = vrot.slane %v1335, 4
        %v1345 = vsel %vm802, 0.0, %v1344
        %v1346 = vrot.slane %v1339, 4
        %v1347 = vsel %vm802, 0.0, %v1346
        %v1348 = vsel %vm802, %v1230, %v1211
        %v1350 = vunpack.c.l.s4 1983009808
        %v1351 = vunpack.c.0.s8 %v1350
        %v1352 = vperm.slane %v1348, %v1351
        %v1353 = vrot.slane %v1231, 4
        %v1354 = vsel %vm802, %v1353, %v1229
        %v1356 = vunpack.c.l.s4 1983009808
        %v1357 = vunpack.c.0.s8 %v1356
        %v1358 = vperm.slane %v1354, %v1357
        %v1359 = vsel %vm802, %v1234, %v1223
        %v1361 = vunpack.c.l.s4 1983009808
        %v1362 = vunpack.c.0.s8 %v1361
        %v1363 = vperm.slane %v1359, %v1362
        %v1364 = vrot.slane %v1235, 4
        %v1365 = vsel %vm802, %v1364, %v1233
        %v1367 = vunpack.c.l.s4 1983009808
        %v1368 = vunpack.c.0.s8 %v1367
        %v1369 = vperm.slane %v1365, %v1368
        %v1370 = vrot.slane %v1358, 4
        %v1371 = vsel %vm802, %v1370, %v1352
        %v1372 = vrot.slane %v1352, 4
        %v1373 = vsel %vm802, %v1358, %v1372
        %v1375 = vunpack.c.l.s4 1934713408
        %v1376 = vunpack.c.0.s8 %v1375
        %v1377 = vperm.slane %v1371, %v1376
        %v1379 = vunpack.c.l.s4 1934713408
        %v1380 = vunpack.c.0.s8 %v1379
        %v1381 = vperm.slane %v1373, %v1380
        %v1382 = vrot.slane %v1369, 4
        %v1383 = vsel %vm802, %v1382, %v1363
        %v1384 = vrot.slane %v1363, 4
        %v1385 = vsel %vm802, %v1369, %v1384
        %v1387 = vunpack.c.l.s4 1934713408
        %v1388 = vunpack.c.0.s8 %v1387
        %v1389 = vperm.slane %v1383, %v1388
        %v1391 = vunpack.c.l.s4 1934713408
        %v1392 = vunpack.c.0.s8 %v1391
        %v1393 = vperm.slane %v1385, %v1392
        %v1394 = vrot.slane %v1389, 4
        %v1395 = vsel %vm802, %v1394, %v1377
        %v1396 = vrot.slane %v1377, 4
        %v1397 = vsel %vm802, %v1389, %v1396
        %v1398 = vrot.slane %v1393, 4
        %v1399 = vsel %vm802, %v1398, %v1381
        %v1400 = vrot.slane %v1381, 4
        %v1401 = vsel %vm802, %v1393, %v1400
        %v1402 = vsel %vm802, %v1286, %v1267
        %v1404 = vunpack.c.l.s4 1983009808
        %v1405 = vunpack.c.0.s8 %v1404
        %v1406 = vperm.slane %v1402, %v1405
        %v1407 = vrot.slane %v1287, 4
        %v1408 = vsel %vm802, %v1407, %v1285
        %v1410 = vunpack.c.l.s4 1983009808
        %v1411 = vunpack.c.0.s8 %v1410
        %v1412 = vperm.slane %v1408, %v1411
        %v1413 = vsel %vm802, %v1290, %v1279
        %v1415 = vunpack.c.l.s4 1983009808
        %v1416 = vunpack.c.0.s8 %v1415
        %v1417 = vperm.slane %v1413, %v1416
        %v1418 = vrot.slane %v1291, 4
        %v1419 = vsel %vm802, %v1418, %v1289
        %v1421 = vunpack.c.l.s4 1983009808
        %v1422 = vunpack.c.0.s8 %v1421
        %v1423 = vperm.slane %v1419, %v1422
        %v1424 = vrot.slane %v1412, 4
        %v1425 = vsel %vm802, %v1424, %v1406
        %v1426 = vrot.slane %v1406, 4
        %v1427 = vsel %vm802, %v1412, %v1426
        %v1429 = vunpack.c.l.s4 1934713408
        %v1430 = vunpack.c.0.s8 %v1429
        %v1431 = vperm.slane %v1425, %v1430
        %v1433 = vunpack.c.l.s4 1934713408
        %v1434 = vunpack.c.0.s8 %v1433
        %v1435 = vperm.slane %v1427, %v1434
        %v1436 = vrot.slane %v1423, 4
        %v1437 = vsel %vm802, %v1436, %v1417
        %v1438 = vrot.slane %v1417, 4
        %v1439 = vsel %vm802, %v1423, %v1438
        %v1441 = vunpack.c.l.s4 1934713408
        %v1442 = vunpack.c.0.s8 %v1441
        %v1443 = vperm.slane %v1437, %v1442
        %v1445 = vunpack.c.l.s4 1934713408
        %v1446 = vunpack.c.0.s8 %v1445
        %v1447 = vperm.slane %v1439, %v1446
        %v1448 = vrot.slane %v1443, 4
        %v1449 = vsel %vm802, %v1448, %v1431
        %v1450 = vrot.slane %v1431, 4
        %v1451 = vsel %vm802, %v1443, %v1450
        %v1452 = vrot.slane %v1447, 4
        %v1453 = vsel %vm802, %v1452, %v1435
        %v1454 = vrot.slane %v1435, 4
        %v1455 = vsel %vm802, %v1447, %v1454
        %v1456 = vsel %vm802, %v1342, %v1323
        %v1458 = vunpack.c.l.s4 1983009808
        %v1459 = vunpack.c.0.s8 %v1458
        %v1460 = vperm.slane %v1456, %v1459
        %v1461 = vrot.slane %v1343, 4
        %v1462 = vsel %vm802, %v1461, %v1341
        %v1464 = vunpack.c.l.s4 1983009808
        %v1465 = vunpack.c.0.s8 %v1464
        %v1466 = vperm.slane %v1462, %v1465
        %v1467 = vsel %vm802, %v1346, %v1335
        %v1469 = vunpack.c.l.s4 1983009808
        %v1470 = vunpack.c.0.s8 %v1469
        %v1471 = vperm.slane %v1467, %v1470
        %v1472 = vrot.slane %v1347, 4
        %v1473 = vsel %vm802, %v1472, %v1345
        %v1475 = vunpack.c.l.s4 1983009808
        %v1476 = vunpack.c.0.s8 %v1475
        %v1477 = vperm.slane %v1473, %v1476
        %v1478 = vrot.slane %v1466, 4
        %v1479 = vsel %vm802, %v1478, %v1460
        %v1480 = vrot.slane %v1460, 4
        %v1481 = vsel %vm802, %v1466, %v1480
        %v1483 = vunpack.c.l.s4 1934713408
        %v1484 = vunpack.c.0.s8 %v1483
        %v1485 = vperm.slane %v1479, %v1484
        %v1487 = vunpack.c.l.s4 1934713408
        %v1488 = vunpack.c.0.s8 %v1487
        %v1489 = vperm.slane %v1481, %v1488
        %v1490 = vrot.slane %v1477, 4
        %v1491 = vsel %vm802, %v1490, %v1471
        %v1492 = vrot.slane %v1471, 4
        %v1493 = vsel %vm802, %v1477, %v1492
        %v1495 = vunpack.c.l.s4 1934713408
        %v1496 = vunpack.c.0.s8 %v1495
        %v1497 = vperm.slane %v1491, %v1496
        %v1499 = vunpack.c.l.s4 1934713408
        %v1500 = vunpack.c.0.s8 %v1499
        %v1501 = vperm.slane %v1493, %v1500
        %v1502 = vrot.slane %v1497, 4
        %v1503 = vsel %vm802, %v1502, %v1485
        %v1504 = vrot.slane %v1485, 4
        %v1505 = vsel %vm802, %v1497, %v1504
        %v1506 = vrot.slane %v1501, 4
        %v1507 = vsel %vm802, %v1506, %v1489
        %v1508 = vrot.slane %v1489, 4
        %v1509 = vsel %vm802, %v1501, %v1508
        %v1510 = vpack.c.bf16 %v1395, %v1395
        %v1511 = vpack.c.bf16 %v1397, %v1397
        %v1512 = vpack.c.bf16 %v1399, %v1399
        %v1513 = vpack.c.bf16 %v1401, %v1401
        %v1514 = vpack.c.bf16 %v1449, %v1449
        %v1515 = vpack.c.bf16 %v1451, %v1451
        %v1516 = vpack.c.bf16 %v1453, %v1453
        %v1517 = vpack.c.bf16 %v1455, %v1455
        %v1518 = vpack.c.bf16 %v1503, %v1503
        %v1519 = vpack.c.bf16 %v1505, %v1505
        %v1520 = vpack.c.bf16 %v1507, %v1507
        %v1521 = vpack.c.bf16 %v1509, %v1509
        %1522 = vrot.lane.b32.xlu0 %v763, 64
        %v1523 = vpop.permute.xlu0 %1522
        %1524 = vrot.lane.b32.xlu0 %v765, 64
        %v1525 = vpop.permute.xlu0 %1524
        %1526 = vrot.lane.b32.xlu0 %v768, 64
        %v1527 = vpop.permute.xlu0 %1526
        %1528 = vrot.lane.b32.xlu0 %v775, 64
        %v1529 = vpop.permute.xlu0 %1528
        %1530 = vrot.lane.b32.xlu0 %v777, 64
        %v1531 = vpop.permute.xlu0 %1530
        %1532 = vrot.lane.b32.xlu0 %v779, 64
        %v1533 = vpop.permute.xlu0 %1532
        %1534 = vrot.lane.b32.xlu0 %v784, 64
        %v1535 = vpop.permute.xlu0 %1534
        %1536 = vrot.lane.b32.xlu0 %v786, 64
        %v1537 = vpop.permute.xlu0 %1536
        %1538 = vrot.lane.b32.xlu0 %v788, 64
        %v1539 = vpop.permute.xlu0 %1538
        %1540 = vrot.lane.b32.xlu0 %v793, 64
        %v1541 = vpop.permute.xlu0 %1540
        %1542 = vrot.lane.b32.xlu0 %v795, 64
        %v1543 = vpop.permute.xlu0 %1542
        %1544 = vrot.lane.b32.xlu0 %v797, 64
        %v1545 = vpop.permute.xlu0 %1544
        %v1558 = vrot.slane %v1535, 4
        %v1559 = vsel %vm802, %v1558, %v1523
        %v1560 = vrot.slane %v1523, 4
        %v1561 = vsel %vm802, %v1535, %v1560
        %v1563 = vunpack.c.l.s4 1983009808
        %v1564 = vunpack.c.0.s8 %v1563
        %v1565 = vperm.slane %v1559, %v1564
        %v1567 = vunpack.c.l.s4 1983009808
        %v1568 = vunpack.c.0.s8 %v1567
        %v1569 = vperm.slane %v1561, %v1568
        %v1570 = vrot.slane %v1541, 4
        %v1571 = vsel %vm802, %v1570, %v1529
        %v1572 = vrot.slane %v1529, 4
        %v1573 = vsel %vm802, %v1541, %v1572
        %v1575 = vunpack.c.l.s4 1983009808
        %v1576 = vunpack.c.0.s8 %v1575
        %v1577 = vperm.slane %v1571, %v1576
        %v1579 = vunpack.c.l.s4 1983009808
        %v1580 = vunpack.c.0.s8 %v1579
        %v1581 = vperm.slane %v1573, %v1580
        %v1582 = vrot.slane %v1577, 4
        %v1583 = vsel %vm802, %v1582, %v1565
        %v1584 = vrot.slane %v1565, 4
        %v1585 = vsel %vm802, %v1577, %v1584
        %v1587 = vunpack.c.l.s4 1934713408
        %v1588 = vunpack.c.0.s8 %v1587
        %v1589 = vperm.slane %v1583, %v1588
        %v1591 = vunpack.c.l.s4 1934713408
        %v1592 = vunpack.c.0.s8 %v1591
        %v1593 = vperm.slane %v1585, %v1592
        %v1594 = vrot.slane %v1581, 4
        %v1595 = vsel %vm802, %v1594, %v1569
        %v1596 = vrot.slane %v1569, 4
        %v1597 = vsel %vm802, %v1581, %v1596
        %v1599 = vunpack.c.l.s4 1934713408
        %v1600 = vunpack.c.0.s8 %v1599
        %v1601 = vperm.slane %v1595, %v1600
        %v1603 = vunpack.c.l.s4 1934713408
        %v1604 = vunpack.c.0.s8 %v1603
        %v1605 = vperm.slane %v1597, %v1604
        %v1606 = vrot.slane %v1589, 4
        %v1607 = vsel %vm802, 0.0, %v1606
        %v1608 = vrot.slane %v1593, 4
        %v1609 = vsel %vm802, 0.0, %v1608
        %v1610 = vrot.slane %v1601, 4
        %v1611 = vsel %vm802, 0.0, %v1610
        %v1612 = vrot.slane %v1605, 4
        %v1613 = vsel %vm802, 0.0, %v1612
        %v1614 = vrot.slane %v1537, 4
        %v1615 = vsel %vm802, %v1614, %v1525
        %v1616 = vrot.slane %v1525, 4
        %v1617 = vsel %vm802, %v1537, %v1616
        %v1619 = vunpack.c.l.s4 1983009808
        %v1620 = vunpack.c.0.s8 %v1619
        %v1621 = vperm.slane %v1615, %v1620
        %v1623 = vunpack.c.l.s4 1983009808
        %v1624 = vunpack.c.0.s8 %v1623
        %v1625 = vperm.slane %v1617, %v1624
        %v1626 = vrot.slane %v1543, 4
        %v1627 = vsel %vm802, %v1626, %v1531
        %v1628 = vrot.slane %v1531, 4
        %v1629 = vsel %vm802, %v1543, %v1628
        %v1631 = vunpack.c.l.s4 1983009808
        %v1632 = vunpack.c.0.s8 %v1631
        %v1633 = vperm.slane %v1627, %v1632
        %v1635 = vunpack.c.l.s4 1983009808
        %v1636 = vunpack.c.0.s8 %v1635
        %v1637 = vperm.slane %v1629, %v1636
        %v1638 = vrot.slane %v1633, 4
        %v1639 = vsel %vm802, %v1638, %v1621
        %v1640 = vrot.slane %v1621, 4
        %v1641 = vsel %vm802, %v1633, %v1640
        %v1643 = vunpack.c.l.s4 1934713408
        %v1644 = vunpack.c.0.s8 %v1643
        %v1645 = vperm.slane %v1639, %v1644
        %v1647 = vunpack.c.l.s4 1934713408
        %v1648 = vunpack.c.0.s8 %v1647
        %v1649 = vperm.slane %v1641, %v1648
        %v1650 = vrot.slane %v1637, 4
        %v1651 = vsel %vm802, %v1650, %v1625
        %v1652 = vrot.slane %v1625, 4
        %v1653 = vsel %vm802, %v1637, %v1652
        %v1655 = vunpack.c.l.s4 1934713408
        %v1656 = vunpack.c.0.s8 %v1655
        %v1657 = vperm.slane %v1651, %v1656
        %v1659 = vunpack.c.l.s4 1934713408
        %v1660 = vunpack.c.0.s8 %v1659
        %v1661 = vperm.slane %v1653, %v1660
        %v1662 = vrot.slane %v1645, 4
        %v1663 = vsel %vm802, 0.0, %v1662
        %v1664 = vrot.slane %v1649, 4
        %v1665 = vsel %vm802, 0.0, %v1664
        %v1666 = vrot.slane %v1657, 4
        %v1667 = vsel %vm802, 0.0, %v1666
        %v1668 = vrot.slane %v1661, 4
        %v1669 = vsel %vm802, 0.0, %v1668
        %v1670 = vrot.slane %v1539, 4
        %v1671 = vsel %vm802, %v1670, %v1527
        %v1672 = vrot.slane %v1527, 4
        %v1673 = vsel %vm802, %v1539, %v1672
        %v1675 = vunpack.c.l.s4 1983009808
        %v1676 = vunpack.c.0.s8 %v1675
        %v1677 = vperm.slane %v1671, %v1676
        %v1679 = vunpack.c.l.s4 1983009808
        %v1680 = vunpack.c.0.s8 %v1679
        %v1681 = vperm.slane %v1673, %v1680
        %v1682 = vrot.slane %v1545, 4
        %v1683 = vsel %vm802, %v1682, %v1533
        %v1684 = vrot.slane %v1533, 4
        %v1685 = vsel %vm802, %v1545, %v1684
        %v1687 = vunpack.c.l.s4 1983009808
        %v1688 = vunpack.c.0.s8 %v1687
        %v1689 = vperm.slane %v1683, %v1688
        %v1691 = vunpack.c.l.s4 1983009808
        %v1692 = vunpack.c.0.s8 %v1691
        %v1693 = vperm.slane %v1685, %v1692
        %v1694 = vrot.slane %v1689, 4
        %v1695 = vsel %vm802, %v1694, %v1677
        %v1696 = vrot.slane %v1677, 4
        %v1697 = vsel %vm802, %v1689, %v1696
        %v1699 = vunpack.c.l.s4 1934713408
        %v1700 = vunpack.c.0.s8 %v1699
        %v1701 = vperm.slane %v1695, %v1700
        %v1703 = vunpack.c.l.s4 1934713408
        %v1704 = vunpack.c.0.s8 %v1703
        %v1705 = vperm.slane %v1697, %v1704
        %v1706 = vrot.slane %v1693, 4
        %v1707 = vsel %vm802, %v1706, %v1681
        %v1708 = vrot.slane %v1681, 4
        %v1709 = vsel %vm802, %v1693, %v1708
        %v1711 = vunpack.c.l.s4 1934713408
        %v1712 = vunpack.c.0.s8 %v1711
        %v1713 = vperm.slane %v1707, %v1712
        %v1715 = vunpack.c.l.s4 1934713408
        %v1716 = vunpack.c.0.s8 %v1715
        %v1717 = vperm.slane %v1709, %v1716
        %v1718 = vrot.slane %v1701, 4
        %v1719 = vsel %vm802, 0.0, %v1718
        %v1720 = vrot.slane %v1705, 4
        %v1721 = vsel %vm802, 0.0, %v1720
        %v1722 = vrot.slane %v1713, 4
        %v1723 = vsel %vm802, 0.0, %v1722
        %v1724 = vrot.slane %v1717, 4
        %v1725 = vsel %vm802, 0.0, %v1724
        %v1726 = vsel %vm802, %v1608, %v1589
        %v1728 = vunpack.c.l.s4 1983009808
        %v1729 = vunpack.c.0.s8 %v1728
        %v1730 = vperm.slane %v1726, %v1729
        %v1731 = vrot.slane %v1609, 4
        %v1732 = vsel %vm802, %v1731, %v1607
        %v1734 = vunpack.c.l.s4 1983009808
        %v1735 = vunpack.c.0.s8 %v1734
        %v1736 = vperm.slane %v1732, %v1735
        %v1737 = vsel %vm802, %v1612, %v1601
        %v1739 = vunpack.c.l.s4 1983009808
        %v1740 = vunpack.c.0.s8 %v1739
        %v1741 = vperm.slane %v1737, %v1740
        %v1742 = vrot.slane %v1613, 4
        %v1743 = vsel %vm802, %v1742, %v1611
        %v1745 = vunpack.c.l.s4 1983009808
        %v1746 = vunpack.c.0.s8 %v1745
        %v1747 = vperm.slane %v1743, %v1746
        %v1748 = vrot.slane %v1736, 4
        %v1749 = vsel %vm802, %v1748, %v1730
        %v1750 = vrot.slane %v1730, 4
        %v1751 = vsel %vm802, %v1736, %v1750
        %v1753 = vunpack.c.l.s4 1934713408
        %v1754 = vunpack.c.0.s8 %v1753
        %v1755 = vperm.slane %v1749, %v1754
        %v1757 = vunpack.c.l.s4 1934713408
        %v1758 = vunpack.c.0.s8 %v1757
        %v1759 = vperm.slane %v1751, %v1758
        %v1760 = vrot.slane %v1747, 4
        %v1761 = vsel %vm802, %v1760, %v1741
        %v1762 = vrot.slane %v1741, 4
        %v1763 = vsel %vm802, %v1747, %v1762
        %v1765 = vunpack.c.l.s4 1934713408
        %v1766 = vunpack.c.0.s8 %v1765
        %v1767 = vperm.slane %v1761, %v1766
        %v1769 = vunpack.c.l.s4 1934713408
        %v1770 = vunpack.c.0.s8 %v1769
        %v1771 = vperm.slane %v1763, %v1770
        %v1772 = vrot.slane %v1767, 4
        %v1773 = vsel %vm802, %v1772, %v1755
        %v1774 = vrot.slane %v1755, 4
        %v1775 = vsel %vm802, %v1767, %v1774
        %v1776 = vrot.slane %v1771, 4
        %v1777 = vsel %vm802, %v1776, %v1759
        %v1778 = vrot.slane %v1759, 4
        %v1779 = vsel %vm802, %v1771, %v1778
        %v1780 = vsel %vm802, %v1664, %v1645
        %v1782 = vunpack.c.l.s4 1983009808
        %v1783 = vunpack.c.0.s8 %v1782
        %v1784 = vperm.slane %v1780, %v1783
        %v1785 = vrot.slane %v1665, 4
        %v1786 = vsel %vm802, %v1785, %v1663
        %v1788 = vunpack.c.l.s4 1983009808
        %v1789 = vunpack.c.0.s8 %v1788
        %v1790 = vperm.slane %v1786, %v1789
        %v1791 = vsel %vm802, %v1668, %v1657
        %v1793 = vunpack.c.l.s4 1983009808
        %v1794 = vunpack.c.0.s8 %v1793
        %v1795 = vperm.slane %v1791, %v1794
        %v1796 = vrot.slane %v1669, 4
        %v1797 = vsel %vm802, %v1796, %v1667
        %v1799 = vunpack.c.l.s4 1983009808
        %v1800 = vunpack.c.0.s8 %v1799
        %v1801 = vperm.slane %v1797, %v1800
        %v1802 = vrot.slane %v1790, 4
        %v1803 = vsel %vm802, %v1802, %v1784
        %v1804 = vrot.slane %v1784, 4
        %v1805 = vsel %vm802, %v1790, %v1804
        %v1807 = vunpack.c.l.s4 1934713408
        %v1808 = vunpack.c.0.s8 %v1807
        %v1809 = vperm.slane %v1803, %v1808
        %v1811 = vunpack.c.l.s4 1934713408
        %v1812 = vunpack.c.0.s8 %v1811
        %v1813 = vperm.slane %v1805, %v1812
        %v1814 = vrot.slane %v1801, 4
        %v1815 = vsel %vm802, %v1814, %v1795
        %v1816 = vrot.slane %v1795, 4
        %v1817 = vsel %vm802, %v1801, %v1816
        %v1819 = vunpack.c.l.s4 1934713408
        %v1820 = vunpack.c.0.s8 %v1819
        %v1821 = vperm.slane %v1815, %v1820
        %v1823 = vunpack.c.l.s4 1934713408
        %v1824 = vunpack.c.0.s8 %v1823
        %v1825 = vperm.slane %v1817, %v1824
        %v1826 = vrot.slane %v1821, 4
        %v1827 = vsel %vm802, %v1826, %v1809
        %v1828 = vrot.slane %v1809, 4
        %v1829 = vsel %vm802, %v1821, %v1828
        %v1830 = vrot.slane %v1825, 4
        %v1831 = vsel %vm802, %v1830, %v1813
        %v1832 = vrot.slane %v1813, 4
        %v1833 = vsel %vm802, %v1825, %v1832
        %v1834 = vsel %vm802, %v1720, %v1701
        %v1836 = vunpack.c.l.s4 1983009808
        %v1837 = vunpack.c.0.s8 %v1836
        %v1838 = vperm.slane %v1834, %v1837
        %v1839 = vrot.slane %v1721, 4
        %v1840 = vsel %vm802, %v1839, %v1719
        %v1842 = vunpack.c.l.s4 1983009808
        %v1843 = vunpack.c.0.s8 %v1842
        %v1844 = vperm.slane %v1840, %v1843
        %v1845 = vsel %vm802, %v1724, %v1713
        %v1847 = vunpack.c.l.s4 1983009808
        %v1848 = vunpack.c.0.s8 %v1847
        %v1849 = vperm.slane %v1845, %v1848
        %v1850 = vrot.slane %v1725, 4
        %v1851 = vsel %vm802, %v1850, %v1723
        %v1853 = vunpack.c.l.s4 1983009808
        %v1854 = vunpack.c.0.s8 %v1853
        %v1855 = vperm.slane %v1851, %v1854
        %v1856 = vrot.slane %v1844, 4
        %v1857 = vsel %vm802, %v1856, %v1838
        %v1858 = vrot.slane %v1838, 4
        %v1859 = vsel %vm802, %v1844, %v1858
        %v1861 = vunpack.c.l.s4 1934713408
        %v1862 = vunpack.c.0.s8 %v1861
        %v1863 = vperm.slane %v1857, %v1862
        %v1865 = vunpack.c.l.s4 1934713408
        %v1866 = vunpack.c.0.s8 %v1865
        %v1867 = vperm.slane %v1859, %v1866
        %v1868 = vrot.slane %v1855, 4
        %v1869 = vsel %vm802, %v1868, %v1849
        %v1870 = vrot.slane %v1849, 4
        %v1871 = vsel %vm802, %v1855, %v1870
        %v1873 = vunpack.c.l.s4 1934713408
        %v1874 = vunpack.c.0.s8 %v1873
        %v1875 = vperm.slane %v1869, %v1874
        %v1877 = vunpack.c.l.s4 1934713408
        %v1878 = vunpack.c.0.s8 %v1877
        %v1879 = vperm.slane %v1871, %v1878
        %v1880 = vrot.slane %v1875, 4
        %v1881 = vsel %vm802, %v1880, %v1863
        %v1882 = vrot.slane %v1863, 4
        %v1883 = vsel %vm802, %v1875, %v1882
        %v1884 = vrot.slane %v1879, 4
        %v1885 = vsel %vm802, %v1884, %v1867
        %v1886 = vrot.slane %v1867, 4
        %v1887 = vsel %vm802, %v1879, %v1886
        %v1888 = vpack.c.bf16 %v1773, %v1773
        %v1889 = vpack.c.bf16 %v1775, %v1775
        %v1890 = vpack.c.bf16 %v1777, %v1777
        %v1891 = vpack.c.bf16 %v1779, %v1779
        %v1892 = vpack.c.bf16 %v1827, %v1827
        %v1893 = vpack.c.bf16 %v1829, %v1829
        %v1894 = vpack.c.bf16 %v1831, %v1831
        %v1895 = vpack.c.bf16 %v1833, %v1833
        %v1896 = vpack.c.bf16 %v1881, %v1881
        %v1897 = vpack.c.bf16 %v1883, %v1883
        %v1898 = vpack.c.bf16 %v1885, %v1885
        %v1899 = vpack.c.bf16 %v1887, %v1887
        %vm1900 = vcmask 64512
        %v1902 = vsel %vm1900, %v1132, 0
        %v1905 = vsel %vm1900, %v1510, 0
        %1907 = vmatpush.bf16.xpose.msra.mxu0 0
        %1908 = vmatpush.bf16.xpose.msra.mxu0 0
        %1909 = vmatpush.bf16.xpose.msra.mxu0 0
        %1910 = vmatpush.bf16.xpose.msra.mxu0 0
        %1911 = vmatpush.bf16.xpose.msra.mxu0 0
        %1912 = vmatpush.bf16.xpose.msra.mxu0 0
        %1913 = vmatpush.bf16.xpose.msra.mxu0 0
        %1914 = vmatpush.bf16.xpose.msra.mxu0 %v1905
        %1915 = vmatmul.bf16.gmra.mxu0 %v1902
        %v1916 = vpop.f32.mrf.mxu0
        %v1917 = vadd.f32 0.0, %v1916
        %v1918 = vpop.f32.mrf.mxu0
        %1919 = vdwg.mxu0
        %v1921 = vsel %vm1900, %v1133, 0
        %v1924 = vsel %vm1900, %v1511, 0
        %1926 = vmatpush.bf16.xpose.msra.mxu0 0
        %1927 = vmatpush.bf16.xpose.msra.mxu0 0
        %1928 = vmatpush.bf16.xpose.msra.mxu0 0
        %1929 = vmatpush.bf16.xpose.msra.mxu0 0
        %1930 = vmatpush.bf16.xpose.msra.mxu0 0
        %1931 = vmatpush.bf16.xpose.msra.mxu0 0
        %1932 = vmatpush.bf16.xpose.msra.mxu0 0
        %1933 = vmatpush.bf16.xpose.msra.mxu0 %v1924
        %1934 = vmatmul.bf16.gmra.mxu0 %v1921
        %v1935 = vpop.f32.mrf.mxu0
        %v1936 = vadd.f32 0.0, %v1935
        %v1937 = vpop.f32.mrf.mxu0
        %1938 = vdwg.mxu0
        %v1940 = vsel %vm1900, %v1134, 0
        %v1943 = vsel %vm1900, %v1512, 0
        %1945 = vmatpush.bf16.xpose.msra.mxu0 0
        %1946 = vmatpush.bf16.xpose.msra.mxu0 0
        %1947 = vmatpush.bf16.xpose.msra.mxu0 0
        %1948 = vmatpush.bf16.xpose.msra.mxu0 0
        %1949 = vmatpush.bf16.xpose.msra.mxu0 0
        %1950 = vmatpush.bf16.xpose.msra.mxu0 0
        %1951 = vmatpush.bf16.xpose.msra.mxu0 0
        %1952 = vmatpush.bf16.xpose.msra.mxu0 %v1943
        %1953 = vmatmul.bf16.gmra.mxu0 %v1940
        %v1954 = vpop.f32.mrf.mxu0
        %v1955 = vadd.f32 0.0, %v1954
        %v1956 = vpop.f32.mrf.mxu0
        %1957 = vdwg.mxu0
        %v1959 = vsel %vm1900, %v1135, 0
        %v1962 = vsel %vm1900, %v1513, 0
        %1964 = vmatpush.bf16.xpose.msra.mxu0 0
        %1965 = vmatpush.bf16.xpose.msra.mxu0 0
        %1966 = vmatpush.bf16.xpose.msra.mxu0 0
        %1967 = vmatpush.bf16.xpose.msra.mxu0 0
        %1968 = vmatpush.bf16.xpose.msra.mxu0 0
        %1969 = vmatpush.bf16.xpose.msra.mxu0 0
        %1970 = vmatpush.bf16.xpose.msra.mxu0 0
        %1971 = vmatpush.bf16.xpose.msra.mxu0 %v1962
        %1972 = vmatmul.bf16.gmra.mxu0 %v1959
        %v1973 = vpop.f32.mrf.mxu0
        %v1974 = vadd.f32 0.0, %v1973
        %v1975 = vpop.f32.mrf.mxu0
        %1976 = vdwg.mxu0
        %v1978 = vsel %vm1900, %v1136, 0
        %v1981 = vsel %vm1900, %v1514, 0
        %1983 = vmatpush.bf16.xpose.msra.mxu0 0
        %1984 = vmatpush.bf16.xpose.msra.mxu0 0
        %1985 = vmatpush.bf16.xpose.msra.mxu0 0
        %1986 = vmatpush.bf16.xpose.msra.mxu0 0
        %1987 = vmatpush.bf16.xpose.msra.mxu0 0
        %1988 = vmatpush.bf16.xpose.msra.mxu0 0
        %1989 = vmatpush.bf16.xpose.msra.mxu0 0
        %1990 = vmatpush.bf16.xpose.msra.mxu0 %v1981
        %1991 = vmatmul.bf16.gmra.mxu0 %v1978
        %v1992 = vpop.f32.mrf.mxu0
        %v1993 = vadd.f32 0.0, %v1992
        %v1994 = vpop.f32.mrf.mxu0
        %1995 = vdwg.mxu0
        %v1997 = vsel %vm1900, %v1137, 0
        %v2000 = vsel %vm1900, %v1515, 0
        %2002 = vmatpush.bf16.xpose.msra.mxu0 0
        %2003 = vmatpush.bf16.xpose.msra.mxu0 0
        %2004 = vmatpush.bf16.xpose.msra.mxu0 0
        %2005 = vmatpush.bf16.xpose.msra.mxu0 0
        %2006 = vmatpush.bf16.xpose.msra.mxu0 0
        %2007 = vmatpush.bf16.xpose.msra.mxu0 0
        %2008 = vmatpush.bf16.xpose.msra.mxu0 0
        %2009 = vmatpush.bf16.xpose.msra.mxu0 %v2000
        %2010 = vmatmul.bf16.gmra.mxu0 %v1997
        %v2011 = vpop.f32.mrf.mxu0
        %v2012 = vadd.f32 0.0, %v2011
        %v2013 = vpop.f32.mrf.mxu0
        %2014 = vdwg.mxu0
        %v2016 = vsel %vm1900, %v1138, 0
        %v2019 = vsel %vm1900, %v1516, 0
        %2021 = vmatpush.bf16.xpose.msra.mxu0 0
        %2022 = vmatpush.bf16.xpose.msra.mxu0 0
        %2023 = vmatpush.bf16.xpose.msra.mxu0 0
        %2024 = vmatpush.bf16.xpose.msra.mxu0 0
        %2025 = vmatpush.bf16.xpose.msra.mxu0 0
        %2026 = vmatpush.bf16.xpose.msra.mxu0 0
        %2027 = vmatpush.bf16.xpose.msra.mxu0 0
        %2028 = vmatpush.bf16.xpose.msra.mxu0 %v2019
        %2029 = vmatmul.bf16.gmra.mxu0 %v2016
        %v2030 = vpop.f32.mrf.mxu0
        %v2031 = vadd.f32 0.0, %v2030
        %v2032 = vpop.f32.mrf.mxu0
        %2033 = vdwg.mxu0
        %v2035 = vsel %vm1900, %v1139, 0
        %v2038 = vsel %vm1900, %v1517, 0
        %2040 = vmatpush.bf16.xpose.msra.mxu0 0
        %2041 = vmatpush.bf16.xpose.msra.mxu0 0
        %2042 = vmatpush.bf16.xpose.msra.mxu0 0
        %2043 = vmatpush.bf16.xpose.msra.mxu0 0
        %2044 = vmatpush.bf16.xpose.msra.mxu0 0
        %2045 = vmatpush.bf16.xpose.msra.mxu0 0
        %2046 = vmatpush.bf16.xpose.msra.mxu0 0
        %2047 = vmatpush.bf16.xpose.msra.mxu0 %v2038
        %2048 = vmatmul.bf16.gmra.mxu0 %v2035
        %v2049 = vpop.f32.mrf.mxu0
        %v2050 = vadd.f32 0.0, %v2049
        %v2051 = vpop.f32.mrf.mxu0
        %2052 = vdwg.mxu0
        %v2054 = vsel %vm1900, %v1140, 0
        %v2057 = vsel %vm1900, %v1518, 0
        %2059 = vmatpush.bf16.xpose.msra.mxu0 0
        %2060 = vmatpush.bf16.xpose.msra.mxu0 0
        %2061 = vmatpush.bf16.xpose.msra.mxu0 0
        %2062 = vmatpush.bf16.xpose.msra.mxu0 0
        %2063 = vmatpush.bf16.xpose.msra.mxu0 0
        %2064 = vmatpush.bf16.xpose.msra.mxu0 0
        %2065 = vmatpush.bf16.xpose.msra.mxu0 0
        %2066 = vmatpush.bf16.xpose.msra.mxu0 %v2057
        %2067 = vmatmul.bf16.gmra.mxu0 %v2054
        %v2068 = vpop.f32.mrf.mxu0
        %v2069 = vadd.f32 0.0, %v2068
        %v2070 = vpop.f32.mrf.mxu0
        %2071 = vdwg.mxu0
        %v2073 = vsel %vm1900, %v1141, 0
        %v2076 = vsel %vm1900, %v1519, 0
        %2078 = vmatpush.bf16.xpose.msra.mxu0 0
        %2079 = vmatpush.bf16.xpose.msra.mxu0 0
        %2080 = vmatpush.bf16.xpose.msra.mxu0 0
        %2081 = vmatpush.bf16.xpose.msra.mxu0 0
        %2082 = vmatpush.bf16.xpose.msra.mxu0 0
        %2083 = vmatpush.bf16.xpose.msra.mxu0 0
        %2084 = vmatpush.bf16.xpose.msra.mxu0 0
        %2085 = vmatpush.bf16.xpose.msra.mxu0 %v2076
        %2086 = vmatmul.bf16.gmra.mxu0 %v2073
        %v2087 = vpop.f32.mrf.mxu0
        %v2088 = vadd.f32 0.0, %v2087
        %v2089 = vpop.f32.mrf.mxu0
        %2090 = vdwg.mxu0
        %v2092 = vsel %vm1900, %v1142, 0
        %v2095 = vsel %vm1900, %v1520, 0
        %2097 = vmatpush.bf16.xpose.msra.mxu0 0
        %2098 = vmatpush.bf16.xpose.msra.mxu0 0
        %2099 = vmatpush.bf16.xpose.msra.mxu0 0
        %2100 = vmatpush.bf16.xpose.msra.mxu0 0
        %2101 = vmatpush.bf16.xpose.msra.mxu0 0
        %2102 = vmatpush.bf16.xpose.msra.mxu0 0
        %2103 = vmatpush.bf16.xpose.msra.mxu0 0
        %2104 = vmatpush.bf16.xpose.msra.mxu0 %v2095
        %2105 = vmatmul.bf16.gmra.mxu0 %v2092
        %v2106 = vpop.f32.mrf.mxu0
        %v2107 = vadd.f32 0.0, %v2106
        %v2108 = vpop.f32.mrf.mxu0
        %2109 = vdwg.mxu0
        %v2111 = vsel %vm1900, %v1143, 0
        %v2114 = vsel %vm1900, %v1521, 0
        %2116 = vmatpush.bf16.xpose.msra.mxu0 0
        %2117 = vmatpush.bf16.xpose.msra.mxu0 0
        %2118 = vmatpush.bf16.xpose.msra.mxu0 0
        %2119 = vmatpush.bf16.xpose.msra.mxu0 0
        %2120 = vmatpush.bf16.xpose.msra.mxu0 0
        %2121 = vmatpush.bf16.xpose.msra.mxu0 0
        %2122 = vmatpush.bf16.xpose.msra.mxu0 0
        %2123 = vmatpush.bf16.xpose.msra.mxu0 %v2114
        %2124 = vmatmul.bf16.gmra.mxu0 %v2111
        %v2125 = vpop.f32.mrf.mxu0
        %v2126 = vadd.f32 0.0, %v2125
        %v2127 = vpop.f32.mrf.mxu0
        %2128 = vdwg.mxu0
        %v2129 = vmul.f32 %v1917, 0.35355338
        %v2130 = vmul.f32 %v1936, 0.35355338
        %v2131 = vmul.f32 %v1955, 0.35355338
        %v2132 = vmul.f32 %v1974, 0.35355338
        %v2133 = vmul.f32 %v1993, 0.35355338
        %v2134 = vmul.f32 %v2012, 0.35355338
        %v2135 = vmul.f32 %v2031, 0.35355338
        %v2136 = vmul.f32 %v2050, 0.35355338
        %v2137 = vmul.f32 %v2069, 0.35355338
        %v2138 = vmul.f32 %v2088, 0.35355338
        %v2139 = vmul.f32 %v2107, 0.35355338
        %v2140 = vmul.f32 %v2126, 0.35355338
        %v2141 = vsel %vm1900, %v2129, -inf
        %2142 = vmax.xlane.f32.xlu0 %v2141
        %v2143 = vpop.xlane.xlu0 %2142
        %v2144 = vsel %vm1900, %v2130, -inf
        %2145 = vmax.xlane.f32.xlu0 %v2144
        %v2146 = vpop.xlane.xlu0 %2145
        %v2147 = vsel %vm1900, %v2131, -inf
        %2148 = vmax.xlane.f32.xlu0 %v2147
        %v2149 = vpop.xlane.xlu0 %2148
        %v2150 = vsel %vm1900, %v2132, -inf
        %2151 = vmax.xlane.f32.xlu0 %v2150
        %v2152 = vpop.xlane.xlu0 %2151
        %v2153 = vsel %vm1900, %v2133, -inf
        %2154 = vmax.xlane.f32.xlu0 %v2153
        %v2155 = vpop.xlane.xlu0 %2154
        %v2156 = vsel %vm1900, %v2134, -inf
        %2157 = vmax.xlane.f32.xlu0 %v2156
        %v2158 = vpop.xlane.xlu0 %2157
        %v2159 = vsel %vm1900, %v2135, -inf
        %2160 = vmax.xlane.f32.xlu0 %v2159
        %v2161 = vpop.xlane.xlu0 %2160
        %v2162 = vsel %vm1900, %v2136, -inf
        %2163 = vmax.xlane.f32.xlu0 %v2162
        %v2164 = vpop.xlane.xlu0 %2163
        %v2165 = vsel %vm1900, %v2137, -inf
        %2166 = vmax.xlane.f32.xlu0 %v2165
        %v2167 = vpop.xlane.xlu0 %2166
        %v2168 = vsel %vm1900, %v2138, -inf
        %2169 = vmax.xlane.f32.xlu0 %v2168
        %v2170 = vpop.xlane.xlu0 %2169
        %v2171 = vsel %vm1900, %v2139, -inf
        %2172 = vmax.xlane.f32.xlu0 %v2171
        %v2173 = vpop.xlane.xlu0 %2172
        %v2174 = vsel %vm1900, %v2140, -inf
        %2175 = vmax.xlane.f32.xlu0 %v2174
        %v2176 = vpop.xlane.xlu0 %2175
        %v2177 = vsub.f32 %v2129, %v2143
        %v2178 = vsub.f32 %v2130, %v2146
        %v2179 = vsub.f32 %v2131, %v2149
        %v2180 = vsub.f32 %v2132, %v2152
        %v2181 = vsub.f32 %v2133, %v2155
        %v2182 = vsub.f32 %v2134, %v2158
        %v2183 = vsub.f32 %v2135, %v2161
        %v2184 = vsub.f32 %v2136, %v2164
        %v2185 = vsub.f32 %v2137, %v2167
        %v2186 = vsub.f32 %v2138, %v2170
        %v2187 = vsub.f32 %v2139, %v2173
        %v2188 = vsub.f32 %v2140, %v2176
        %v2189 = vmul.f32 %v2177, 1.442695
        %v2190 = vpow.pop %v2189
        %v2191 = vmul.f32 %v2178, 1.442695
        %v2192 = vpow.pop %v2191
        %v2193 = vmul.f32 %v2179, 1.442695
        %v2194 = vpow.pop %v2193
        %v2195 = vmul.f32 %v2180, 1.442695
        %v2196 = vpow.pop %v2195
        %v2197 = vmul.f32 %v2181, 1.442695
        %v2198 = vpow.pop %v2197
        %v2199 = vmul.f32 %v2182, 1.442695
        %v2200 = vpow.pop %v2199
        %v2201 = vmul.f32 %v2183, 1.442695
        %v2202 = vpow.pop %v2201
        %v2203 = vmul.f32 %v2184, 1.442695
        %v2204 = vpow.pop %v2203
        %v2205 = vmul.f32 %v2185, 1.442695
        %v2206 = vpow.pop %v2205
        %v2207 = vmul.f32 %v2186, 1.442695
        %v2208 = vpow.pop %v2207
        %v2209 = vmul.f32 %v2187, 1.442695
        %v2210 = vpow.pop %v2209
        %v2211 = vmul.f32 %v2188, 1.442695
        %v2212 = vpow.pop %v2211
        %v2213 = vsel %vm1900, %v2190, 0.0
        %2214 = vadd.xlane.f32.xlu0 %v2213
        %v2215 = vpop.xlane.xlu0 %2214
        %v2216 = vsel %vm1900, %v2192, 0.0
        %2217 = vadd.xlane.f32.xlu0 %v2216
        %v2218 = vpop.xlane.xlu0 %2217
        %v2219 = vsel %vm1900, %v2194, 0.0
        %2220 = vadd.xlane.f32.xlu0 %v2219
        %v2221 = vpop.xlane.xlu0 %2220
        %v2222 = vsel %vm1900, %v2196, 0.0
        %2223 = vadd.xlane.f32.xlu0 %v2222
        %v2224 = vpop.xlane.xlu0 %2223
        %v2225 = vsel %vm1900, %v2198, 0.0
        %2226 = vadd.xlane.f32.xlu0 %v2225
        %v2227 = vpop.xlane.xlu0 %2226
        %v2228 = vsel %vm1900, %v2200, 0.0
        %2229 = vadd.xlane.f32.xlu0 %v2228
        %v2230 = vpop.xlane.xlu0 %2229
        %v2231 = vsel %vm1900, %v2202, 0.0
        %2232 = vadd.xlane.f32.xlu0 %v2231
        %v2233 = vpop.xlane.xlu0 %2232
        %v2234 = vsel %vm1900, %v2204, 0.0
        %2235 = vadd.xlane.f32.xlu0 %v2234
        %v2236 = vpop.xlane.xlu0 %2235
        %v2237 = vsel %vm1900, %v2206, 0.0
        %2238 = vadd.xlane.f32.xlu0 %v2237
        %v2239 = vpop.xlane.xlu0 %2238
        %v2240 = vsel %vm1900, %v2208, 0.0
        %2241 = vadd.xlane.f32.xlu0 %v2240
        %v2242 = vpop.xlane.xlu0 %2241
        %v2243 = vsel %vm1900, %v2210, 0.0
        %2244 = vadd.xlane.f32.xlu0 %v2243
        %v2245 = vpop.xlane.xlu0 %2244
        %v2246 = vsel %vm1900, %v2212, 0.0
        %2247 = vadd.xlane.f32.xlu0 %v2246
        %v2248 = vpop.xlane.xlu0 %2247
        %v2249 = vrcp.pop %v2215
        %v2250 = vrcp.pop %v2218
        %v2251 = vrcp.pop %v2221
        %v2252 = vrcp.pop %v2224
        %v2253 = vrcp.pop %v2227
        %v2254 = vrcp.pop %v2230
        %v2255 = vrcp.pop %v2233
        %v2256 = vrcp.pop %v2236
        %v2257 = vrcp.pop %v2239
        %v2258 = vrcp.pop %v2242
        %v2259 = vrcp.pop %v2245
        %v2260 = vrcp.pop %v2248
        %v2261 = vmul.f32 %v2190, %v2249
        %v2262 = vmul.f32 %v2192, %v2250
        %v2263 = vmul.f32 %v2194, %v2251
        %v2264 = vmul.f32 %v2196, %v2252
        %v2265 = vmul.f32 %v2198, %v2253
        %v2266 = vmul.f32 %v2200, %v2254
        %v2267 = vmul.f32 %v2202, %v2255
        %v2268 = vmul.f32 %v2204, %v2256
        %v2269 = vmul.f32 %v2206, %v2257
        %v2270 = vmul.f32 %v2208, %v2258
        %v2271 = vmul.f32 %v2210, %v2259
        %v2272 = vmul.f32 %v2212, %v2260
        %v2273 = vpack.c.bf16 %v2261, %v2261
        %v2274 = vpack.c.bf16 %v2262, %v2262
        %v2275 = vpack.c.bf16 %v2263, %v2263
        %v2276 = vpack.c.bf16 %v2264, %v2264
        %v2277 = vpack.c.bf16 %v2265, %v2265
        %v2278 = vpack.c.bf16 %v2266, %v2266
        %v2279 = vpack.c.bf16 %v2267, %v2267
        %v2280 = vpack.c.bf16 %v2268, %v2268
        %v2281 = vpack.c.bf16 %v2269, %v2269
        %v2282 = vpack.c.bf16 %v2270, %v2270
        %v2283 = vpack.c.bf16 %v2271, %v2271
        %v2284 = vpack.c.bf16 %v2272, %v2272
        %v2286 = vsel %vm1900, %v2273, 0
        %vm2288 = vcmask 1043456
        %v2290 = vsel %vm2288, %v1888, 0
        %2292 = vmatpush.bf16.msra.mxu0 0
        %2293 = vmatpush.bf16.msra.mxu0 0
        %2294 = vmatpush.bf16.msra.mxu0 0
        %2295 = vmatpush.bf16.msra.mxu0 0
        %2296 = vmatpush.bf16.msra.mxu0 0
        %2297 = vmatpush.bf16.msra.mxu0 0
        %2298 = vmatpush.bf16.msra.mxu0 0
        %2299 = vmatpush.bf16.msra.mxu0 %v2290
        %2300 = vmatmul.bf16.gmra.mxu0 %v2286
        %v2301 = vpop.f32.mrf.mxu0
        %v2302 = vadd.f32 0.0, %v2301
        %v2303 = vpop.f32.mrf.mxu0
        %2304 = vdwg.mxu0
        %v2306 = vsel %vm1900, %v2274, 0
        %v2309 = vsel %vm2288, %v1889, 0
        %2311 = vmatpush.bf16.msra.mxu0 0
        %2312 = vmatpush.bf16.msra.mxu0 0
        %2313 = vmatpush.bf16.msra.mxu0 0
        %2314 = vmatpush.bf16.msra.mxu0 0
        %2315 = vmatpush.bf16.msra.mxu0 0
        %2316 = vmatpush.bf16.msra.mxu0 0
        %2317 = vmatpush.bf16.msra.mxu0 0
        %2318 = vmatpush.bf16.msra.mxu0 %v2309
        %2319 = vmatmul.bf16.gmra.mxu0 %v2306
        %v2320 = vpop.f32.mrf.mxu0
        %v2321 = vadd.f32 0.0, %v2320
        %v2322 = vpop.f32.mrf.mxu0
        %2323 = vdwg.mxu0
        %v2325 = vsel %vm1900, %v2275, 0
        %v2328 = vsel %vm2288, %v1890, 0
        %2330 = vmatpush.bf16.msra.mxu0 0
        %2331 = vmatpush.bf16.msra.mxu0 0
        %2332 = vmatpush.bf16.msra.mxu0 0
        %2333 = vmatpush.bf16.msra.mxu0 0
        %2334 = vmatpush.bf16.msra.mxu0 0
        %2335 = vmatpush.bf16.msra.mxu0 0
        %2336 = vmatpush.bf16.msra.mxu0 0
        %2337 = vmatpush.bf16.msra.mxu0 %v2328
        %2338 = vmatmul.bf16.gmra.mxu0 %v2325
        %v2339 = vpop.f32.mrf.mxu0
        %v2340 = vadd.f32 0.0, %v2339
        %v2341 = vpop.f32.mrf.mxu0
        %2342 = vdwg.mxu0
        %v2344 = vsel %vm1900, %v2276, 0
        %v2347 = vsel %vm2288, %v1891, 0
        %2349 = vmatpush.bf16.msra.mxu0 0
        %2350 = vmatpush.bf16.msra.mxu0 0
        %2351 = vmatpush.bf16.msra.mxu0 0
        %2352 = vmatpush.bf16.msra.mxu0 0
        %2353 = vmatpush.bf16.msra.mxu0 0
        %2354 = vmatpush.bf16.msra.mxu0 0
        %2355 = vmatpush.bf16.msra.mxu0 0
        %2356 = vmatpush.bf16.msra.mxu0 %v2347
        %2357 = vmatmul.bf16.gmra.mxu0 %v2344
        %v2358 = vpop.f32.mrf.mxu0
        %v2359 = vadd.f32 0.0, %v2358
        %v2360 = vpop.f32.mrf.mxu0
        %2361 = vdwg.mxu0
        %v2363 = vsel %vm1900, %v2277, 0
        %v2366 = vsel %vm2288, %v1892, 0
        %2368 = vmatpush.bf16.msra.mxu0 0
        %2369 = vmatpush.bf16.msra.mxu0 0
        %2370 = vmatpush.bf16.msra.mxu0 0
        %2371 = vmatpush.bf16.msra.mxu0 0
        %2372 = vmatpush.bf16.msra.mxu0 0
        %2373 = vmatpush.bf16.msra.mxu0 0
        %2374 = vmatpush.bf16.msra.mxu0 0
        %2375 = vmatpush.bf16.msra.mxu0 %v2366
        %2376 = vmatmul.bf16.gmra.mxu0 %v2363
        %v2377 = vpop.f32.mrf.mxu0
        %v2378 = vadd.f32 0.0, %v2377
        %v2379 = vpop.f32.mrf.mxu0
        %2380 = vdwg.mxu0
        %v2382 = vsel %vm1900, %v2278, 0
        %v2385 = vsel %vm2288, %v1893, 0
        %2387 = vmatpush.bf16.msra.mxu0 0
        %2388 = vmatpush.bf16.msra.mxu0 0
        %2389 = vmatpush.bf16.msra.mxu0 0
        %2390 = vmatpush.bf16.msra.mxu0 0
        %2391 = vmatpush.bf16.msra.mxu0 0
        %2392 = vmatpush.bf16.msra.mxu0 0
        %2393 = vmatpush.bf16.msra.mxu0 0
        %2394 = vmatpush.bf16.msra.mxu0 %v2385
        %2395 = vmatmul.bf16.gmra.mxu0 %v2382
        %v2396 = vpop.f32.mrf.mxu0
        %v2397 = vadd.f32 0.0, %v2396
        %v2398 = vpop.f32.mrf.mxu0
        %2399 = vdwg.mxu0
        %v2401 = vsel %vm1900, %v2279, 0
        %v2404 = vsel %vm2288, %v1894, 0
        %2406 = vmatpush.bf16.msra.mxu0 0
        %2407 = vmatpush.bf16.msra.mxu0 0
        %2408 = vmatpush.bf16.msra.mxu0 0
        %2409 = vmatpush.bf16.msra.mxu0 0
        %2410 = vmatpush.bf16.msra.mxu0 0
        %2411 = vmatpush.bf16.msra.mxu0 0
        %2412 = vmatpush.bf16.msra.mxu0 0
        %2413 = vmatpush.bf16.msra.mxu0 %v2404
        %2414 = vmatmul.bf16.gmra.mxu0 %v2401
        %v2415 = vpop.f32.mrf.mxu0
        %v2416 = vadd.f32 0.0, %v2415
        %v2417 = vpop.f32.mrf.mxu0
        %2418 = vdwg.mxu0
        %v2420 = vsel %vm1900, %v2280, 0
        %v2423 = vsel %vm2288, %v1895, 0
        %2425 = vmatpush.bf16.msra.mxu0 0
        %2426 = vmatpush.bf16.msra.mxu0 0
        %2427 = vmatpush.bf16.msra.mxu0 0
        %2428 = vmatpush.bf16.msra.mxu0 0
        %2429 = vmatpush.bf16.msra.mxu0 0
        %2430 = vmatpush.bf16.msra.mxu0 0
        %2431 = vmatpush.bf16.msra.mxu0 0
        %2432 = vmatpush.bf16.msra.mxu0 %v2423
        %2433 = vmatmul.bf16.gmra.mxu0 %v2420
        %v2434 = vpop.f32.mrf.mxu0
        %v2435 = vadd.f32 0.0, %v2434
        %v2436 = vpop.f32.mrf.mxu0
        %2437 = vdwg.mxu0
        %v2439 = vsel %vm1900, %v2281, 0
        %v2442 = vsel %vm2288, %v1896, 0
        %2444 = vmatpush.bf16.msra.mxu0 0
        %2445 = vmatpush.bf16.msra.mxu0 0
        %2446 = vmatpush.bf16.msra.mxu0 0
        %2447 = vmatpush.bf16.msra.mxu0 0
        %2448 = vmatpush.bf16.msra.mxu0 0
        %2449 = vmatpush.bf16.msra.mxu0 0
        %2450 = vmatpush.bf16.msra.mxu0 0
        %2451 = vmatpush.bf16.msra.mxu0 %v2442
        %2452 = vmatmul.bf16.gmra.mxu0 %v2439
        %v2453 = vpop.f32.mrf.mxu0
        %v2454 = vadd.f32 0.0, %v2453
        %v2455 = vpop.f32.mrf.mxu0
        %2456 = vdwg.mxu0
        %v2458 = vsel %vm1900, %v2282, 0
        %v2461 = vsel %vm2288, %v1897, 0
        %2463 = vmatpush.bf16.msra.mxu0 0
        %2464 = vmatpush.bf16.msra.mxu0 0
        %2465 = vmatpush.bf16.msra.mxu0 0
        %2466 = vmatpush.bf16.msra.mxu0 0
        %2467 = vmatpush.bf16.msra.mxu0 0
        %2468 = vmatpush.bf16.msra.mxu0 0
        %2469 = vmatpush.bf16.msra.mxu0 0
        %2470 = vmatpush.bf16.msra.mxu0 %v2461
        %2471 = vmatmul.bf16.gmra.mxu0 %v2458
        %v2472 = vpop.f32.mrf.mxu0
        %v2473 = vadd.f32 0.0, %v2472
        %v2474 = vpop.f32.mrf.mxu0
        %2475 = vdwg.mxu0
        %v2477 = vsel %vm1900, %v2283, 0
        %v2480 = vsel %vm2288, %v1898, 0
        %2482 = vmatpush.bf16.msra.mxu0 0
        %2483 = vmatpush.bf16.msra.mxu0 0
        %2484 = vmatpush.bf16.msra.mxu0 0
        %2485 = vmatpush.bf16.msra.mxu0 0
        %2486 = vmatpush.bf16.msra.mxu0 0
        %2487 = vmatpush.bf16.msra.mxu0 0
        %2488 = vmatpush.bf16.msra.mxu0 0
        %2489 = vmatpush.bf16.msra.mxu0 %v2480
        %2490 = vmatmul.bf16.gmra.mxu0 %v2477
        %v2491 = vpop.f32.mrf.mxu0
        %v2492 = vadd.f32 0.0, %v2491
        %v2493 = vpop.f32.mrf.mxu0
        %2494 = vdwg.mxu0
        %v2496 = vsel %vm1900, %v2284, 0
        %v2499 = vsel %vm2288, %v1899, 0
        %2501 = vmatpush.bf16.msra.mxu0 0
        %2502 = vmatpush.bf16.msra.mxu0 0
        %2503 = vmatpush.bf16.msra.mxu0 0
        %2504 = vmatpush.bf16.msra.mxu0 0
        %2505 = vmatpush.bf16.msra.mxu0 0
        %2506 = vmatpush.bf16.msra.mxu0 0
        %2507 = vmatpush.bf16.msra.mxu0 0
        %2508 = vmatpush.bf16.msra.mxu0 %v2499
        %2509 = vmatmul.bf16.gmra.mxu0 %v2496
        %v2510 = vpop.f32.mrf.mxu0
        %v2511 = vadd.f32 0.0, %v2510
        %v2512 = vpop.f32.mrf.mxu0
        %2513 = vdwg.mxu0
        %v2514 = vrot.slane %v2340, 4
        %v2515 = vsel %vm802, %v2514, %v2302
        %v2516 = vrot.slane %v2302, 4
        %v2517 = vsel %vm802, %v2340, %v2516
        %v2519 = vunpack.c.l.s4 1983009808
        %v2520 = vunpack.c.0.s8 %v2519
        %v2521 = vperm.slane %v2515, %v2520
        %v2523 = vunpack.c.l.s4 1983009808
        %v2524 = vunpack.c.0.s8 %v2523
        %v2525 = vperm.slane %v2517, %v2524
        %v2526 = vrot.slane %v2359, 4
        %v2527 = vsel %vm802, %v2526, %v2321
        %v2528 = vrot.slane %v2321, 4
        %v2529 = vsel %vm802, %v2359, %v2528
        %v2531 = vunpack.c.l.s4 1983009808
        %v2532 = vunpack.c.0.s8 %v2531
        %v2533 = vperm.slane %v2527, %v2532
        %v2535 = vunpack.c.l.s4 1983009808
        %v2536 = vunpack.c.0.s8 %v2535
        %v2537 = vperm.slane %v2529, %v2536
        %v2538 = vrot.slane %v2533, 4
        %v2539 = vsel %vm802, %v2538, %v2521
        %v2540 = vrot.slane %v2521, 4
        %v2541 = vsel %vm802, %v2533, %v2540
        %v2543 = vunpack.c.l.s4 1934713408
        %v2544 = vunpack.c.0.s8 %v2543
        %v2545 = vperm.slane %v2539, %v2544
        %v2547 = vunpack.c.l.s4 1934713408
        %v2548 = vunpack.c.0.s8 %v2547
        %v2549 = vperm.slane %v2541, %v2548
        %v2550 = vrot.slane %v2537, 4
        %v2551 = vsel %vm802, %v2550, %v2525
        %v2552 = vrot.slane %v2525, 4
        %v2553 = vsel %vm802, %v2537, %v2552
        %v2555 = vunpack.c.l.s4 1934713408
        %v2556 = vunpack.c.0.s8 %v2555
        %v2557 = vperm.slane %v2551, %v2556
        %v2559 = vunpack.c.l.s4 1934713408
        %v2560 = vunpack.c.0.s8 %v2559
        %v2561 = vperm.slane %v2553, %v2560
        %v2562 = vrot.slane %v2545, 4
        %v2563 = vsel %vm802, 0.0, %v2562
        %v2564 = vrot.slane %v2549, 4
        %v2565 = vsel %vm802, 0.0, %v2564
        %v2566 = vrot.slane %v2557, 4
        %v2567 = vsel %vm802, 0.0, %v2566
        %v2568 = vrot.slane %v2561, 4
        %v2569 = vsel %vm802, 0.0, %v2568
        %v2570 = vrot.slane %v2416, 4
        %v2571 = vsel %vm802, %v2570, %v2378
        %v2572 = vrot.slane %v2378, 4
        %v2573 = vsel %vm802, %v2416, %v2572
        %v2575 = vunpack.c.l.s4 1983009808
        %v2576 = vunpack.c.0.s8 %v2575
        %v2577 = vperm.slane %v2571, %v2576
        %v2579 = vunpack.c.l.s4 1983009808
        %v2580 = vunpack.c.0.s8 %v2579
        %v2581 = vperm.slane %v2573, %v2580
        %v2582 = vrot.slane %v2435, 4
        %v2583 = vsel %vm802, %v2582, %v2397
        %v2584 = vrot.slane %v2397, 4
        %v2585 = vsel %vm802, %v2435, %v2584
        %v2587 = vunpack.c.l.s4 1983009808
        %v2588 = vunpack.c.0.s8 %v2587
        %v2589 = vperm.slane %v2583, %v2588
        %v2591 = vunpack.c.l.s4 1983009808
        %v2592 = vunpack.c.0.s8 %v2591
        %v2593 = vperm.slane %v2585, %v2592
        %v2594 = vrot.slane %v2589, 4
        %v2595 = vsel %vm802, %v2594, %v2577
        %v2596 = vrot.slane %v2577, 4
        %v2597 = vsel %vm802, %v2589, %v2596
        %v2599 = vunpack.c.l.s4 1934713408
        %v2600 = vunpack.c.0.s8 %v2599
        %v2601 = vperm.slane %v2595, %v2600
        %v2603 = vunpack.c.l.s4 1934713408
        %v2604 = vunpack.c.0.s8 %v2603
        %v2605 = vperm.slane %v2597, %v2604
        %v2606 = vrot.slane %v2593, 4
        %v2607 = vsel %vm802, %v2606, %v2581
        %v2608 = vrot.slane %v2581, 4
        %v2609 = vsel %vm802, %v2593, %v2608
        %v2611 = vunpack.c.l.s4 1934713408
        %v2612 = vunpack.c.0.s8 %v2611
        %v2613 = vperm.slane %v2607, %v2612
        %v2615 = vunpack.c.l.s4 1934713408
        %v2616 = vunpack.c.0.s8 %v2615
        %v2617 = vperm.slane %v2609, %v2616
        %v2618 = vrot.slane %v2601, 4
        %v2619 = vsel %vm802, 0.0, %v2618
        %v2620 = vrot.slane %v2605, 4
        %v2621 = vsel %vm802, 0.0, %v2620
        %v2622 = vrot.slane %v2613, 4
        %v2623 = vsel %vm802, 0.0, %v2622
        %v2624 = vrot.slane %v2617, 4
        %v2625 = vsel %vm802, 0.0, %v2624
        %v2626 = vrot.slane %v2492, 4
        %v2627 = vsel %vm802, %v2626, %v2454
        %v2628 = vrot.slane %v2454, 4
        %v2629 = vsel %vm802, %v2492, %v2628
        %v2631 = vunpack.c.l.s4 1983009808
        %v2632 = vunpack.c.0.s8 %v2631
        %v2633 = vperm.slane %v2627, %v2632
        %v2635 = vunpack.c.l.s4 1983009808
        %v2636 = vunpack.c.0.s8 %v2635
        %v2637 = vperm.slane %v2629, %v2636
        %v2638 = vrot.slane %v2511, 4
        %v2639 = vsel %vm802, %v2638, %v2473
        %v2640 = vrot.slane %v2473, 4
        %v2641 = vsel %vm802, %v2511, %v2640
        %v2643 = vunpack.c.l.s4 1983009808
        %v2644 = vunpack.c.0.s8 %v2643
        %v2645 = vperm.slane %v2639, %v2644
        %v2647 = vunpack.c.l.s4 1983009808
        %v2648 = vunpack.c.0.s8 %v2647
        %v2649 = vperm.slane %v2641, %v2648
        %v2650 = vrot.slane %v2645, 4
        %v2651 = vsel %vm802, %v2650, %v2633
        %v2652 = vrot.slane %v2633, 4
        %v2653 = vsel %vm802, %v2645, %v2652
        %v2655 = vunpack.c.l.s4 1934713408
        %v2656 = vunpack.c.0.s8 %v2655
        %v2657 = vperm.slane %v2651, %v2656
        %v2659 = vunpack.c.l.s4 1934713408
        %v2660 = vunpack.c.0.s8 %v2659
        %v2661 = vperm.slane %v2653, %v2660
        %v2662 = vrot.slane %v2649, 4
        %v2663 = vsel %vm802, %v2662, %v2637
        %v2664 = vrot.slane %v2637, 4
        %v2665 = vsel %vm802, %v2649, %v2664
        %v2667 = vunpack.c.l.s4 1934713408
        %v2668 = vunpack.c.0.s8 %v2667
        %v2669 = vperm.slane %v2663, %v2668
        %v2671 = vunpack.c.l.s4 1934713408
        %v2672 = vunpack.c.0.s8 %v2671
        %v2673 = vperm.slane %v2665, %v2672
        %v2674 = vrot.slane %v2657, 4
        %v2675 = vsel %vm802, 0.0, %v2674
        %v2676 = vrot.slane %v2661, 4
        %v2677 = vsel %vm802, 0.0, %v2676
        %v2678 = vrot.slane %v2669, 4
        %v2679 = vsel %vm802, 0.0, %v2678
        %v2680 = vrot.slane %v2673, 4
        %v2681 = vsel %vm802, 0.0, %v2680
        %v2682 = vsel %vm802, %v2564, %v2545
        %v2684 = vunpack.c.l.s4 1983009808
        %v2685 = vunpack.c.0.s8 %v2684
        %v2686 = vperm.slane %v2682, %v2685
        %v2687 = vrot.slane %v2565, 4
        %v2688 = vsel %vm802, %v2687, %v2563
        %v2690 = vunpack.c.l.s4 1983009808
        %v2691 = vunpack.c.0.s8 %v2690
        %v2692 = vperm.slane %v2688, %v2691
        %v2693 = vsel %vm802, %v2568, %v2557
        %v2695 = vunpack.c.l.s4 1983009808
        %v2696 = vunpack.c.0.s8 %v2695
        %v2697 = vperm.slane %v2693, %v2696
        %v2698 = vrot.slane %v2569, 4
        %v2699 = vsel %vm802, %v2698, %v2567
        %v2701 = vunpack.c.l.s4 1983009808
        %v2702 = vunpack.c.0.s8 %v2701
        %v2703 = vperm.slane %v2699, %v2702
        %v2704 = vrot.slane %v2692, 4
        %v2705 = vsel %vm802, %v2704, %v2686
        %v2706 = vrot.slane %v2686, 4
        %v2707 = vsel %vm802, %v2692, %v2706
        %v2709 = vunpack.c.l.s4 1934713408
        %v2710 = vunpack.c.0.s8 %v2709
        %v2711 = vperm.slane %v2705, %v2710
        %v2713 = vunpack.c.l.s4 1934713408
        %v2714 = vunpack.c.0.s8 %v2713
        %v2715 = vperm.slane %v2707, %v2714
        %v2716 = vrot.slane %v2703, 4
        %v2717 = vsel %vm802, %v2716, %v2697
        %v2718 = vrot.slane %v2697, 4
        %v2719 = vsel %vm802, %v2703, %v2718
        %v2721 = vunpack.c.l.s4 1934713408
        %v2722 = vunpack.c.0.s8 %v2721
        %v2723 = vperm.slane %v2717, %v2722
        %v2725 = vunpack.c.l.s4 1934713408
        %v2726 = vunpack.c.0.s8 %v2725
        %v2727 = vperm.slane %v2719, %v2726
        %v2728 = vrot.slane %v2723, 4
        %v2729 = vsel %vm802, %v2728, %v2711
        %v2730 = vrot.slane %v2711, 4
        %v2731 = vsel %vm802, %v2723, %v2730
        %v2732 = vrot.slane %v2727, 4
        %v2733 = vsel %vm802, %v2732, %v2715
        %v2734 = vrot.slane %v2715, 4
        %v2735 = vsel %vm802, %v2727, %v2734
        %v2736 = vsel %vm802, %v2620, %v2601
        %v2738 = vunpack.c.l.s4 1983009808
        %v2739 = vunpack.c.0.s8 %v2738
        %v2740 = vperm.slane %v2736, %v2739
        %v2741 = vrot.slane %v2621, 4
        %v2742 = vsel %vm802, %v2741, %v2619
        %v2744 = vunpack.c.l.s4 1983009808
        %v2745 = vunpack.c.0.s8 %v2744
        %v2746 = vperm.slane %v2742, %v2745
        %v2747 = vsel %vm802, %v2624, %v2613
        %v2749 = vunpack.c.l.s4 1983009808
        %v2750 = vunpack.c.0.s8 %v2749
        %v2751 = vperm.slane %v2747, %v2750
        %v2752 = vrot.slane %v2625, 4
        %v2753 = vsel %vm802, %v2752, %v2623
        %v2755 = vunpack.c.l.s4 1983009808
        %v2756 = vunpack.c.0.s8 %v2755
        %v2757 = vperm.slane %v2753, %v2756
        %v2758 = vrot.slane %v2746, 4
        %v2759 = vsel %vm802, %v2758, %v2740
        %v2760 = vrot.slane %v2740, 4
        %v2761 = vsel %vm802, %v2746, %v2760
        %v2763 = vunpack.c.l.s4 1934713408
        %v2764 = vunpack.c.0.s8 %v2763
        %v2765 = vperm.slane %v2759, %v2764
        %v2767 = vunpack.c.l.s4 1934713408
        %v2768 = vunpack.c.0.s8 %v2767
        %v2769 = vperm.slane %v2761, %v2768
        %v2770 = vrot.slane %v2757, 4
        %v2771 = vsel %vm802, %v2770, %v2751
        %v2772 = vrot.slane %v2751, 4
        %v2773 = vsel %vm802, %v2757, %v2772
        %v2775 = vunpack.c.l.s4 1934713408
        %v2776 = vunpack.c.0.s8 %v2775
        %v2777 = vperm.slane %v2771, %v2776
        %v2779 = vunpack.c.l.s4 1934713408
        %v2780 = vunpack.c.0.s8 %v2779
        %v2781 = vperm.slane %v2773, %v2780
        %v2782 = vrot.slane %v2777, 4
        %v2783 = vsel %vm802, %v2782, %v2765
        %v2784 = vrot.slane %v2765, 4
        %v2785 = vsel %vm802, %v2777, %v2784
        %v2786 = vrot.slane %v2781, 4
        %v2787 = vsel %vm802, %v2786, %v2769
        %v2788 = vrot.slane %v2769, 4
        %v2789 = vsel %vm802, %v2781, %v2788
        %v2790 = vsel %vm802, %v2676, %v2657
        %v2792 = vunpack.c.l.s4 1983009808
        %v2793 = vunpack.c.0.s8 %v2792
        %v2794 = vperm.slane %v2790, %v2793
        %v2795 = vrot.slane %v2677, 4
        %v2796 = vsel %vm802, %v2795, %v2675
        %v2798 = vunpack.c.l.s4 1983009808
        %v2799 = vunpack.c.0.s8 %v2798
        %v2800 = vperm.slane %v2796, %v2799
        %v2801 = vsel %vm802, %v2680, %v2669
        %v2803 = vunpack.c.l.s4 1983009808
        %v2804 = vunpack.c.0.s8 %v2803
        %v2805 = vperm.slane %v2801, %v2804
        %v2806 = vrot.slane %v2681, 4
        %v2807 = vsel %vm802, %v2806, %v2679
        %v2809 = vunpack.c.l.s4 1983009808
        %v2810 = vunpack.c.0.s8 %v2809
        %v2811 = vperm.slane %v2807, %v2810
        %v2812 = vrot.slane %v2800, 4
        %v2813 = vsel %vm802, %v2812, %v2794
        %v2814 = vrot.slane %v2794, 4
        %v2815 = vsel %vm802, %v2800, %v2814
        %v2817 = vunpack.c.l.s4 1934713408
        %v2818 = vunpack.c.0.s8 %v2817
        %v2819 = vperm.slane %v2813, %v2818
        %v2821 = vunpack.c.l.s4 1934713408
        %v2822 = vunpack.c.0.s8 %v2821
        %v2823 = vperm.slane %v2815, %v2822
        %v2824 = vrot.slane %v2811, 4
        %v2825 = vsel %vm802, %v2824, %v2805
        %v2826 = vrot.slane %v2805, 4
        %v2827 = vsel %vm802, %v2811, %v2826
        %v2829 = vunpack.c.l.s4 1934713408
        %v2830 = vunpack.c.0.s8 %v2829
        %v2831 = vperm.slane %v2825, %v2830
        %v2833 = vunpack.c.l.s4 1934713408
        %v2834 = vunpack.c.0.s8 %v2833
        %v2835 = vperm.slane %v2827, %v2834
        %v2836 = vrot.slane %v2831, 4
        %v2837 = vsel %vm802, %v2836, %v2819
        %v2838 = vrot.slane %v2819, 4
        %v2839 = vsel %vm802, %v2831, %v2838
        %v2840 = vrot.slane %v2835, 4
        %v2841 = vsel %vm802, %v2840, %v2823
        %v2842 = vrot.slane %v2823, 4
        %v2843 = vsel %vm802, %v2835, %v2842
        %2847 = vrot.lane.b32.xlu0 %v2731, 8
        %v2848 = vpop.permute.xlu0 %2847
        %2849 = vrot.lane.b32.xlu0 %v2785, 8
        %v2850 = vpop.permute.xlu0 %2849
        %2851 = vrot.lane.b32.xlu0 %v2839, 8
        %v2852 = vpop.permute.xlu0 %2851
        %2859 = vrot.lane.b32.xlu0 %v2733, 16
        %v2860 = vpop.permute.xlu0 %2859
        %2861 = vrot.lane.b32.xlu0 %v2787, 16
        %v2862 = vpop.permute.xlu0 %2861
        %2863 = vrot.lane.b32.xlu0 %v2841, 16
        %v2864 = vpop.permute.xlu0 %2863
        %2871 = vrot.lane.b32.xlu0 %v2735, 24
        %v2872 = vpop.permute.xlu0 %2871
        %2873 = vrot.lane.b32.xlu0 %v2789, 24
        %v2874 = vpop.permute.xlu0 %2873
        %2875 = vrot.lane.b32.xlu0 %v2843, 24
        %v2876 = vpop.permute.xlu0 %2875
        %v2880 = vsel %vm1900, %v2729, %v2848
        %v2881 = vsel %vm1900, %v2783, %v2850
        %v2882 = vsel %vm1900, %v2837, %v2852
        %vm2883 = vcmask 130048
        %v2884 = vsel %vm2883, %v2880, %v2860
        %v2885 = vsel %vm2883, %v2881, %v2862
        %v2886 = vsel %vm2883, %v2882, %v2864
        %vm2887 = vcmask 195584
        %v2888 = vsel %vm2887, %v2884, %v2872
        %v2889 = vsel %vm2887, %v2885, %v2874
        %v2890 = vsel %vm2887, %v2886, %v2876
        %v2891 = vpack.c.bf16 %v2889, %v2888
        %v2892 = vpack.c.bf16 %v2890, %v2890
        %v2893 = vld [vmem:[#allocation10] sm:$0xf]
        %v2894 = vld [vmem:[#allocation10 + $0x4] sm:$0xf]
        %v2895 = vld [vmem:[#allocation10 + $0x8] sm:$0xf]
        %v2896 = vld [vmem:[#allocation10 + $0xc] sm:$0xf]
        %v2897 = vld [vmem:[%s8] sm:$0x1]
        %v2899 = vperm.slane %v2897, 0
        %v2905 = vunpack.c.l.b16 %v2893
        %v2906 = vunpack.c.l.b16 %v2894
        %v2907 = vunpack.c.l.b16 %v2895
        %v2908 = vunpack.c.l.b16 %v2896
        %v2909 = vpack.c.b16 %v2906, %v2905
        %v2910 = vpack.c.b16 %v2908, %v2907
        %v2914 = vsel %vm639, %v2891, 0
        %v2917 = vsel %vm639, %v2892, 0
        %2919 = vmatpush.bf16.msra.mxu0 0
        %2920 = vmatpush.bf16.msra.mxu0 0
        %2921 = vmatpush.bf16.msra.mxu0 0
        %2922 = vmatpush.bf16.msra.mxu0 0
        %2923 = vmatpush.bf16.msra.mxu0 0
        %2924 = vmatpush.bf16.msra.mxu0 0
        %2925 = vmatpush.bf16.msra.mxu0 %v2910
        %2926 = vmatpush.bf16.msra.mxu0 %v2909
        %2927 = vmatmul.bf16.gmra.mxu0 %v2914
        %v2928 = vpop.f32.mrf.mxu0
        %v2929 = vadd.f32 %v2899, %v2928
        %v2930 = vpop.f32.mrf.mxu0
        %v2931 = vadd.f32 %v2899, %v2930
        %2932 = vmatmul.bf16.gmra.mxu0 %v2917
        %v2933 = vpop.f32.mrf.mxu0
        %v2934 = vadd.f32 %v2899, %v2933
        %v2935 = vpop.f32.mrf.mxu0
        %2936 = vdwg.mxu0
        %v2937 = vadd.f32 %v634, %v2929
        %v2938 = vadd.f32 %v635, %v2931
        %v2939 = vadd.f32 %v636, %v2934
        %v2940 = vld [vmem:[%s9] sm:$0x1]
        %v2941 = vld [vmem:[%s10] sm:$0x1]
        %vm2942 = vcmask 261126
        %v2943 = vsel %vm2942, %v2937, 0.0
        %2944 = vadd.xlane.f32.xlu0 %v2943
        %v2945 = vpop.xlane.xlu0 %2944
        %v2946 = vsel %vm639, %v2938, 0.0
        %2947 = vadd.xlane.f32.xlu0 %v2946
        %v2948 = vpop.xlane.xlu0 %2947
        %vm2949 = vcmask 254976
        %v2950 = vsel %vm2949, %v2939, 0.0
        %2951 = vadd.xlane.f32.xlu0 %v2950
        %v2952 = vpop.xlane.xlu0 %2951
        %v2953 = vmul.f32 %v2945, %v655
        %v2954 = vmul.f32 %v2948, %v655
        %v2955 = vmul.f32 %v2952, %v655
        %v2956 = vsub.f32 %v2937, %v2953
        %v2957 = vsub.f32 %v2938, %v2954
        %v2958 = vsub.f32 %v2939, %v2955
        %v2959 = vmul.f32 %v2956, %v2956
        %v2960 = vmul.f32 %v2957, %v2957
        %v2961 = vmul.f32 %v2958, %v2958
        %v2962 = vsel %vm2942, %v2959, 0.0
        %2963 = vadd.xlane.f32.xlu0 %v2962
        %v2964 = vpop.xlane.xlu0 %2963
        %v2965 = vsel %vm639, %v2960, 0.0
        %2966 = vadd.xlane.f32.xlu0 %v2965
        %v2967 = vpop.xlane.xlu0 %2966
        %v2968 = vsel %vm2949, %v2961, 0.0
        %2969 = vadd.xlane.f32.xlu0 %v2968
        %v2970 = vpop.xlane.xlu0 %2969
        %v2971 = vmul.f32 %v2964, %v655
        %v2972 = vmul.f32 %v2967, %v655
        %v2973 = vmul.f32 %v2970, %v655
        %v2974 = vadd.f32 %v2971, 1e-05
        %v2975 = vadd.f32 %v2972, 1e-05
        %v2976 = vadd.f32 %v2973, 1e-05
        %v2977 = vrsqrt.pop %v2974
        %v2978 = vmul.f32 %v2977, %v2974
        %v2979 = vmul.f32 %v2978, %v2977
        %v2980 = vmul.f32 0.5, %v2979
        %v2981 = vsub.f32 1.5, %v2980
        %v2982 = vmul.f32 %v2977, %v2981
        %vm2983 = vweird.f32 %v2974
        %vm2984 = vweird.f32 %v2977
        %vm2985 = vmor %vm2983, %vm2984
        %v2986 = vsel %vm2985, %v2977, %v2982
        %v2987 = vrsqrt.pop %v2975
        %v2988 = vmul.f32 %v2987, %v2975
        %v2989 = vmul.f32 %v2988, %v2987
        %v2990 = vmul.f32 0.5, %v2989
        %v2991 = vsub.f32 1.5, %v2990
        %v2992 = vmul.f32 %v2987, %v2991
        %vm2993 = vweird.f32 %v2975
        %vm2994 = vweird.f32 %v2987
        %vm2995 = vmor %vm2993, %vm2994
        %v2996 = vsel %vm2995, %v2987, %v2992
        %v2997 = vrsqrt.pop %v2976
        %v2998 = vmul.f32 %v2997, %v2976
        %v2999 = vmul.f32 %v2998, %v2997
        %v3000 = vmul.f32 0.5, %v2999
        %v3001 = vsub.f32 1.5, %v3000
        %v3002 = vmul.f32 %v2997, %v3001
        %vm3003 = vweird.f32 %v2976
        %vm3004 = vweird.f32 %v2997
        %vm3005 = vmor %vm3003, %vm3004
        %v3006 = vsel %vm3005, %v2997, %v3002
        %v3007 = vmul.f32 %v2956, %v2986
        %v3008 = vmul.f32 %v2957, %v2996
        %v3009 = vmul.f32 %v2958, %v3006
        %v3011 = vperm.slane %v2940, 0
        %v3013 = vmul.f32 %v3007, %v3011
        %v3014 = vmul.f32 %v3008, %v3011
        %v3015 = vmul.f32 %v3009, %v3011
        %v3017 = vperm.slane %v2941, 0
        %v3019 = vadd.f32 %v3013, %v3017
        %v3020 = vadd.f32 %v3014, %v3017
        %v3021 = vadd.f32 %v3015, %v3017
        %v3022 = vpack.c.bf16 %v3020, %v3019
        %v3023 = vpack.c.bf16 %v3021, %v3021
        %v3024 = vld [vmem:[#allocation11] sm:$0xf]
        %v3025 = vld [vmem:[#allocation11 + $0x4] sm:$0xf]
        %v3026 = vld [vmem:[#allocation11 + $0x8] sm:$0xf]
        %v3027 = vld [vmem:[#allocation11 + $0xc] sm:$0xf]
        %vm3030 = vcmask 1044480
        %v3031 = vrot.slane %v3022, 3
        %v3032 = vrot.slane %v3023, 3
        %v3033 = vsel %vm3030, %v3031, %v3032
        %v3038 = vunpack.c.l.b16 %v3024
        %v3039 = vunpack.c.l.b16 %v3025
        %v3040 = vunpack.c.l.b16 %v3026
        %v3041 = vunpack.c.l.b16 %v3027
        %v3042 = vpack.c.b16 %v3039, %v3038
        %v3043 = vpack.c.b16 %v3041, %v3040
        %v3047 = vsel %vm639, %v3033, 0
        %3049 = vmatpush.bf16.msra.mxu0 0
        %3050 = vmatpush.bf16.msra.mxu0 0
        %3051 = vmatpush.bf16.msra.mxu0 0
        %3052 = vmatpush.bf16.msra.mxu0 0
        %3053 = vmatpush.bf16.msra.mxu0 0
        %3054 = vmatpush.bf16.msra.mxu0 0
        %3055 = vmatpush.bf16.msra.mxu0 %v3043
        %3056 = vmatpush.bf16.msra.mxu0 %v3042
        %3057 = vmatmul.bf16.gmra.mxu0 %v3047
        %v3058 = vpop.f32.mrf.mxu0
        %v3059 = vadd.f32 0.0, %v3058
        %v3060 = vpop.f32.mrf.mxu0
        %v3061 = vadd.f32 0.0, %v3060
        %3062 = vdwg.mxu0
        %v3063 = vlaneseq
        %v3064 = vshrl.u32 %v3063, 7
        %s3065 = smul.u32 %s40, 8
        %v3066 = vstv %s3065
        %v3067 = vadd.s32 %v3064, %v3066
        %vm3068 = vcmp.ge.s32.totalorder %v3067, 2
        %v3069 = vsel %vm3068, 1, 0
        %vm3070 = vcmp.eq.s32.totalorder %v3069, 1
        %v3071 = vsel %vm3070, %v3059, 0.0
        %vm3072 = vcmp.le.s32.totalorder %v3067, 13
        %v3073 = vsel %vm3072, 1, 0
        %vm3074 = vcmp.eq.s32.totalorder %v3073, 1
        %v3077 = vrot.slane %v3059, 4
        %v3078 = vrot.slane %v3061, 4
        %v3079 = vsel %vm2288, %v3077, %v3078
        %3080 = vrot.lane.b32.xlu0 %v3079, 64
        %v3081 = vpop.permute.xlu0 %3080
        %v3083 = vsel %vm3074, %v3081, 0.0
        %vm3084 = vcmask 1045504
        %v3085 = vrot.slane %v3059, 2
        %v3086 = vrot.slane %v3061, 2
        %v3087 = vsel %vm3084, %v3085, %v3086
        %3088 = vrot.lane.b32.xlu0 %v3087, 96
        %v3089 = vpop.permute.xlu0 %3088
        %v3091 = vadd.f32 %v2938, %v3089
        %v3092 = vadd.f32 %v3091, %v3071
        %v3093 = vadd.f32 %v3092, %v3083
        %v3094 = vld [vmem:[%s12] sm:$0x1]
        %v3096 = vperm.slane %v3094, 0
        %v3098 = vadd.f32 %v3093, %v3096
        %3099 = vst.msk [vmem:[%s626] sm:$0xff] %vm639, %v3098
        %s3100 = sand.u32 %s363, 1
        %s3101 = scalar_lea.sflag [#allocation4], %s3100
        %s3102 = sand.u32 %s363, 1
        %s3103 = smul.addr %s3102, 8
        %s3104 = scalar_lea.vmem [#allocation13], %s3103
        // Predicated region
        $region97: #{tpu_custom_call.1} parent=71 // pred_check
          %p3105 = pneg %p373
        $region98: #{tpu_custom_call.1} parent=71 // pred_check_branch
          %3107 = sbr.rel (%p3105) target = $region100
        $region99: #{tpu_custom_call.1} parent=71 // pred_region
          %3109 = vsyncadd %s3101, 0
          %s3110 = smul.addr %s39, 2
          %s3111 = sadd.s32 %s40, %s3110
          %s3112 = smul.addr %s3111, 8
          %s3113 = scalar_lea.hbm %s13, %s3112
          %s3115 = sshll.u32 %s3104, 4
          %s3116 = int_to_ptr.vmem [resolvable:$true] %s3115
          %s3117 = sshll.u32 %s3113, 4
          %s3118 = int_to_ptr.hbm [resolvable:$true] %s3117
          %3120 = dma.vmem_to_hbm [thread:$0]  %s3116, 128, %s3118, %s3101
        $region100: #{tpu_custom_call.1} parent=71 // pred_fallthru
          _
      $region72: #{tpu_custom_call.1} parent=5 // pred_fallthru
        _
      %p3121 = scmp.le.s32.totalorder 2, %s30
      // Predicated region
      $region101: #{tpu_custom_call.1} parent=5 // pred_check
        %p3122 = pneg %p3121
      $region102: #{tpu_custom_call.1} parent=5 // pred_check_branch
        %3124 = sbr.rel (%p3122) target = $region104
      $region103: #{tpu_custom_call.1} parent=5 // pred_region
        %s3125 = ssub.s32 %s30, 2
        // Predicated region
        $region105: #{tpu_custom_call.1} parent=103 // pred_check
          %p3126 = pneg %p379
        $region106: #{tpu_custom_call.1} parent=103 // pred_check_branch
          %3128 = sbr.rel (%p3126) target = $region108
        $region107: #{tpu_custom_call.1} parent=103 // pred_region
          %s3129 = sand.u32 %s364, 1
          %s3130 = scalar_lea.sflag [#allocation4], %s3129
          %s3131 = sand.u32 %s364, 1
          %s3132 = smul.addr %s3131, 8
          %s3133 = scalar_lea.vmem [#allocation13], %s3132
          %3135 = dma.done %s3130, 128
        $region108: #{tpu_custom_call.1} parent=103 // pred_fallthru
          _
      $region104: #{tpu_custom_call.1} parent=5 // pred_fallthru
        _
    $region6: #{tpu_custom_call.1} parent=1 // loop_footer
      %s34 = sadd.s32 1, %s30
    $region7: #{tpu_custom_call.1} parent=1 // loop_footer_branch
      %29 = sbr.rel target = $region3
    $region8: #{tpu_custom_call.1} parent=1 // loop_exit
      _
    %3136 = vsyncpa [#allocation3], 1
    %s3137 = scalar_lea.sflag [#allocation3], 1
    %3138 = vsyncpa %s3137, 1
    %3139 = vsyncpa [#allocation6], 1
    %s3140 = scalar_lea.sflag [#allocation6], 1
    %3141 = vsyncpa %s3140, 1
    %3142 = vsyncpa [#allocation9], 1
    %3143 = vsyncpa [#allocation12], 1
    %3144 = vsyncpa [#allocation4], 1
    %s3145 = scalar_lea.sflag [#allocation4], 1
    %3146 = vsyncpa %s3145, 1

</llo_original>
